<compile_context>
chip_gen: v7x
topology: tpu7x:2x2x1
jax: 0.10.0
libtpu: 0.0.40
codegen_flags: <defaults>
</compile_context>

<pallas_src>
import functools

import numpy as np
import jax
import jax.numpy as jnp
from jax.experimental import pallas as pl
from jax.experimental.pallas import tpu as pltpu


# ------------------------------ small helpers --------------------------------

def _tree_sum(xs):
    """Pairwise (tree) reduction: log-depth add chain -> exposes ILP and lets
    MXU results be combined without a serial pop->add->push chain."""
    xs = list(xs)
    while len(xs) > 1:
        nxt = [xs[i] + xs[i + 1] for i in range(0, len(xs) - 1, 2)]
        if len(xs) % 2:
            nxt.append(xs[-1])
        xs = nxt
    return xs[0]


def _tensorcores_per_chip():
    """v7x has 2 TensorCores per chip; v5e/v6e have 1.  Conservative fallback."""
    try:
        kind = jax.devices()[0].device_kind.lower()
    except Exception:  # pragma: no cover - defensive
        return 1
    return 2 if "7" in kind else 1


# ------------------------------ Pallas kernel --------------------------------

def _convnet_kernel(bb, x_ref, b1m_ref, c1b_ref, prow_ref, pcol_ref,
                    b2m_ref, c2b_ref, w1r_hbm, fb1_ref, fc2w_ref, fb2_ref,
                    fc3w_ref, fb3_ref, out_ref, w1r_vmem, w1_sem):
    """Fused ConvNet forward for `bb` batch elements (one grid step)."""
    f32 = jnp.float32
    dot = functools.partial(jnp.dot, preferred_element_type=f32)

    # Kick off the 860 KB fc1-weight DMA immediately; it overlaps with the
    # whole conv1/pool/conv2 phase and is waited on only right before fc1.
    w1_copy = pltpu.make_async_copy(w1r_hbm, w1r_vmem, w1_sem)
    w1_copy.start()

    # ----------------------- conv phase (MXU) --------------------------------
    acts = []
    for b in range(bb):
        # conv1: 5 banded matmuls  x[di:di+24, :](24,40) @ B1[di](40,72)
        y = _tree_sum(dot(x_ref[b, di:di + 24, :], b1m_ref[di])
                      for di in range(5))
        y = jnp.maximum(y + c1b_ref[...], 0.0)                      # (24, 72)

        # 2x2 max-pool: exact 0/1 row-selection, VPU max, then col-selection.
        rm = jnp.maximum(dot(prow_ref[0], y), dot(prow_ref[1], y))  # (12, 72)
        pz = jnp.maximum(dot(rm, pcol_ref[0]), dot(rm, pcol_ref[1]))  # (12, 36)

        # conv2: 5 banded matmuls  pz[di:di+8, :](8,36) @ B2[di](36,224)
        a = _tree_sum(dot(pz[di:di + 8, :], b2m_ref[di])
                      for di in range(5))
        a = jnp.maximum(a + c2b_ref[...], 0.0)                      # (8, 224)
        acts.append(a)

    # ----------------------- fully-connected phase ---------------------------
    w1_copy.wait()                      # fc1 weight now resident in VMEM
    outs = []
    for b in range(bb):
        a = acts[b]
        # fc1: torch-flat index c2*112 + oh*14 + ow  ==  a[oh, c2*14+ow];
        # weight was re-laid out to (8, 224, 120), so fc1 = sum_oh a[oh] @ W[oh].
        h1 = _tree_sum(dot(a[oh:oh + 1, :], w1r_vmem[oh]) for oh in range(8))
        h1 = jnp.maximum(h1 + fb1_ref[...], 0.0)                    # (1, 120)
        h2 = jnp.maximum(dot(h1, fc2w_ref[...]) + fb2_ref[...], 0.0)  # (1, 84)
        outs.append(dot(h2, fc3w_ref[...]) + fb3_ref[...])          # (1, 4)
    out_ref[...] = jnp.concatenate(outs, axis=0) if bb > 1 else outs[0]


# --------------------------------- wrapper ------------------------------------

def prepare_params(params):
    """One-time host-side re-layout of the PyTorch-style parameters.

    conv weights are expanded into banded matrices so the convolutions run as
    MXU matmuls whose outputs land directly in the lane-dense layouts the next
    stage consumes; pooling selectors are exact 0/1 matrices.
    """
    w1 = np.asarray(params["conv1_w"], np.float32)       # (2, 1, 5, 5)
    b1 = np.asarray(params["conv1_b"], np.float32)       # (2,)
    w2 = np.asarray(params["conv2_w"], np.float32)       # (16, 2, 5, 5)
    b2 = np.asarray(params["conv2_b"], np.float32)       # (16,)

    # conv1 banded weights: (x[di:di+24, :] @ B1[di])[oh, c*36+ow]
    #   = sum_dj x[oh+di, ow+dj] * w1[c, 0, di, dj]
    B1 = np.zeros((5, 40, 72), np.float32)
    for di in range(5):
        for c in range(2):
            for ow in range(36):
                for dj in range(5):
                    B1[di, ow + dj, c * 36 + ow] = w1[c, 0, di, dj]

    # conv2 banded weights (both input channels folded into the contraction):
    # (pz[di:di+8, :] @ B2[di])[oh, c2*14+ow]
    #   = sum_{ci,dj} pooled[ci, oh+di, ow+dj] * w2[c2, ci, di, dj]
    B2 = np.zeros((5, 36, 224), np.float32)
    for di in range(5):
        for ci in range(2):
            for c2 in range(16):
                for ow in range(14):
                    for dj in range(5):
                        B2[di, ci * 18 + ow + dj, c2 * 14 + ow] = w2[c2, ci, di, dj]

    # 2x2 max-pool selectors (exact 0/1, rows then per-channel columns).
    prow = np.zeros((2, 12, 24), np.float32)
    for r in range(12):
        prow[0, r, 2 * r] = 1.0
        prow[1, r, 2 * r + 1] = 1.0
    pcol = np.zeros((2, 72, 36), np.float32)
    for c in range(2):
        for k in range(18):
            pcol[0, c * 36 + 2 * k, c * 18 + k] = 1.0
            pcol[1, c * 36 + 2 * k + 1, c * 18 + k] = 1.0

    # fc1 (1792, 120) -> (8, 224, 120): slice [oh] matches row oh of the
    # (8, 224) conv2 activation (column = c2*14 + ow, torch flatten order).
    fc1_w = np.asarray(params["fc1_w"], np.float32)       # (1792, 120)
    w1r = fc1_w.reshape(16, 8, 14, 120).transpose(1, 0, 2, 3).reshape(8, 224, 120)

    return {
        "b1m": jnp.asarray(B1),
        "c1b": jnp.asarray(np.repeat(b1, 36)[None, :]),   # (1, 72)
        "prow": jnp.asarray(prow),
        "pcol": jnp.asarray(pcol),
        "b2m": jnp.asarray(B2),
        "c2b": jnp.asarray(np.repeat(b2, 14)[None, :]),   # (1, 224)
        "fc1_wr": jnp.asarray(w1r),
        "fc1_b": params["fc1_b"].reshape(1, 120),
        "fc2_w": params["fc2_w"],
        "fc2_b": params["fc2_b"].reshape(1, 84),
        "fc3_w": params["fc3_w"],
        "fc3_b": params["fc3_b"].reshape(1, 4),
    }


def convnet_forward(kp, x):
    """x: (B, 1, 28, 40) float32 NCHW -> (B, 4)."""
    B = x.shape[0]
    x3 = x.reshape(B, 28, 40)                 # C_in == 1: drop the channel dim

    # Batch placement: fold the whole batch into one grid step on single-TC
    # chips (v5e/v6e); keep one batch element per step on 2-TC chips (v7x).
    cores = _tensorcores_per_chip()
    gsteps = cores if (cores > 1 and B % cores == 0) else 1
    bb = B // gsteps

    # advisory cost hint (per-element ~1.0M MACs; weights ~1.15 MB)
    cost = pl.CostEstimate(flops=2 * 1_000_000 * B,
                           transcendentals=0,
                           bytes_accessed=1_150_000 + B * 4_496)

    kernel = functools.partial(_convnet_kernel, bb)

    return pl.pallas_call(
        kernel,
        out_shape=jax.ShapeDtypeStruct((B, 4), jnp.float32),
        grid=(gsteps,),
        in_specs=[
            pl.BlockSpec((bb, 28, 40), lambda g: (g, 0, 0)),   # image
            pl.BlockSpec((5, 40, 72), lambda g: (0, 0, 0)),    # conv1 banded w
            pl.BlockSpec((1, 72), lambda g: (0, 0)),           # conv1 bias row
            pl.BlockSpec((2, 12, 24), lambda g: (0, 0, 0)),    # pool row selectors
            pl.BlockSpec((2, 72, 36), lambda g: (0, 0, 0)),    # pool col selectors
            pl.BlockSpec((5, 36, 224), lambda g: (0, 0, 0)),   # conv2 banded w
            pl.BlockSpec((1, 224), lambda g: (0, 0)),          # conv2 bias row
            pl.BlockSpec(memory_space=pl.ANY),                 # fc1 w (manual DMA)
            pl.BlockSpec((1, 120), lambda g: (0, 0)),          # fc1 b
            pl.BlockSpec((120, 84), lambda g: (0, 0)),         # fc2 w
            pl.BlockSpec((1, 84), lambda g: (0, 0)),           # fc2 b
            pl.BlockSpec((84, 4), lambda g: (0, 0)),           # fc3 w
            pl.BlockSpec((1, 4), lambda g: (0, 0)),            # fc3 b
        ],
        out_specs=pl.BlockSpec((bb, 4), lambda g: (g, 0)),
        scratch_shapes=[
            pltpu.VMEM((8, 224, 120), jnp.float32),            # fc1 w landing buffer
            pltpu.SemaphoreType.DMA(()),                       # its DMA semaphore
        ],
        compiler_params=pltpu.CompilerParams(
            dimension_semantics=("parallel",)),                # batch across cores
        cost_estimate=cost,
    )(x3, kp["b1m"], kp["c1b"], kp["prow"], kp["pcol"], kp["b2m"], kp["c2b"],
      kp["fc1_wr"], kp["fc1_b"], kp["fc2_w"], kp["fc2_b"],
      kp["fc3_w"], kp["fc3_b"])


# ---------------------------- deterministic params ----------------------------

def _uinit(key, shape, fan_in):
    bound = 1.0 / np.sqrt(fan_in)
    return jax.random.uniform(key, shape, jnp.float32, -bound, bound)


def init_params(key):
    ks = jax.random.split(key, 10)
    return {
        "conv1_w": _uinit(ks[0], (2, 1, 5, 5), 1 * 5 * 5),
        "conv1_b": _uinit(ks[1], (2,), 1 * 5 * 5),
        "conv2_w": _uinit(ks[2], (16, 2, 5, 5), 2 * 5 * 5),
        "conv2_b": _uinit(ks[3], (16,), 2 * 5 * 5),
        # stored already transposed: (in, out)
        "fc1_w": _uinit(ks[4], (16 * 8 * 14, 120), 16 * 8 * 14),
        "fc1_b": _uinit(ks[5], (120,), 16 * 8 * 14),
        "fc2_w": _uinit(ks[6], (120, 84), 120),
        "fc2_b": _uinit(ks[7], (84,), 120),
        "fc3_w": _uinit(ks[8], (84, 4), 84),
        "fc3_b": _uinit(ks[9], (4,), 84),
    }


# -------------------------- pure-JAX reference (check) -------------------------

def _im2col(x, k):
    """x: (B, C, H, W) -> patches (B*OH*OW, C*k*k), C-major then (di, dj)."""
    B, C, H, W = x.shape
    OH, OW = H - k + 1, W - k + 1
    slabs = []
    for di in range(k):
        for dj in range(k):
            slabs.append(x[:, :, di:di + OH, dj:dj + OW])    # (B, C, OH, OW)
    p = jnp.stack(slabs, axis=2)                              # (B, C, k*k, OH, OW)
    p = p.transpose(0, 3, 4, 1, 2)                            # (B, OH, OW, C, k*k)
    return p.reshape(B * OH * OW, C * k * k), OH, OW


def _ref_forward(params, x):
    def conv_ref(x, w, b, relu):
        C_out, C_in, k, _ = w.shape
        patches, OH, OW = _im2col(x, k)
        y = patches @ w.reshape(C_out, C_in * k * k).T + b[None, :]
        if relu:
            y = jnp.maximum(y, 0.0)
        return y.reshape(x.shape[0], OH, OW, C_out).transpose(0, 3, 1, 2)

    def pool_ref(x):
        B, C, H, W = x.shape
        return jnp.max(x.reshape(B, C, H // 2, 2, W // 2, 2), axis=(3, 5))

    x = pool_ref(conv_ref(x, params["conv1_w"], params["conv1_b"], True))
    x = conv_ref(x, params["conv2_w"], params["conv2_b"], True)
    x = x.reshape(x.shape[0], 16 * 8 * 14)
    x = jnp.maximum(x @ params["fc1_w"] + params["fc1_b"], 0.0)
    x = jnp.maximum(x @ params["fc2_w"] + params["fc2_b"], 0.0)
    return x @ params["fc3_w"] + params["fc3_b"]


# ----------------------------------- main --------------------------------------

if __name__ == "__main__":
    key = jax.random.PRNGKey(0)
    kx, kparam = jax.random.split(key)
    params = init_params(kparam)
    kparams = prepare_params(params)        # one-time weight re-layout (off hot path)

    # batch=2; spatial (28, 40) is what the module's fc1 (16*8*14) implies.
    x = jax.random.normal(kx, (2, 1, 28, 40), dtype=jnp.float32)

    fwd = jax.jit(convnet_forward)
    out = jax.block_until_ready(fwd(kparams, x))
    assert out.shape == (2, 4), out.shape

    ref = _ref_forward(params, x)
    # tolerance relaxed slightly (2e-4) on purpose: summation order differs
    # from the reference (banded-matmul convs, tree-summed fc1 partials).
    np.testing.assert_allclose(np.asarray(out), np.asarray(ref),
                               rtol=2e-4, atol=2e-4)

    print("KERNEL_OK")
</pallas_src>

<mosaic_0001>
module attributes {stable_mosaic.version = 11 : i64} {
  func.func @_convnet_kernel(%arg0: i32, %arg1: memref<2x28x40xf32, #tpu.memory_space<vmem>>, %arg2: memref<5x40x72xf32, #tpu.memory_space<vmem>>, %arg3: memref<1x72xf32, #tpu.memory_space<vmem>>, %arg4: memref<2x12x24xf32, #tpu.memory_space<vmem>>, %arg5: memref<2x72x36xf32, #tpu.memory_space<vmem>>, %arg6: memref<5x36x224xf32, #tpu.memory_space<vmem>>, %arg7: memref<1x224xf32, #tpu.memory_space<vmem>>, %arg8: memref<8x224x120xf32, #tpu.memory_space<any>>, %arg9: memref<1x120xf32, #tpu.memory_space<vmem>>, %arg10: memref<120x84xf32, #tpu.memory_space<vmem>>, %arg11: memref<1x84xf32, #tpu.memory_space<vmem>>, %arg12: memref<84x4xf32, #tpu.memory_space<vmem>>, %arg13: memref<1x4xf32, #tpu.memory_space<vmem>>, %arg14: memref<2x4xf32, #tpu.memory_space<vmem>>, %arg15: memref<8x224x120xf32, #tpu.memory_space<vmem>>, %arg16: memref<!tpu.dma_semaphore, #tpu.memory_space<semaphore_mem>>) attributes {dimension_semantics = [#tpu.dimension_semantics<parallel>], iteration_bounds = array<i64: 1>, scalar_prefetch = 0 : i64, scratch_operands = 2 : i64, tpu.core_type = #tpu.core_type<tc>, window_params = [{transform_indices = @transform_0, window_bounds = array<i64: 2, 28, 40>}, {pipeline_mode = #tpu.pipeline_mode<synchronous>, transform_indices = @transform_1, window_bounds = array<i64: 5, 40, 72>}, {pipeline_mode = #tpu.pipeline_mode<synchronous>, transform_indices = @transform_2, window_bounds = array<i64: 1, 72>}, {pipeline_mode = #tpu.pipeline_mode<synchronous>, transform_indices = @transform_3, window_bounds = array<i64: 2, 12, 24>}, {pipeline_mode = #tpu.pipeline_mode<synchronous>, transform_indices = @transform_4, window_bounds = array<i64: 2, 72, 36>}, {pipeline_mode = #tpu.pipeline_mode<synchronous>, transform_indices = @transform_5, window_bounds = array<i64: 5, 36, 224>}, {pipeline_mode = #tpu.pipeline_mode<synchronous>, transform_indices = @transform_6, window_bounds = array<i64: 1, 224>}, {}, {pipeline_mode = #tpu.pipeline_mode<synchronous>, transform_indices = @transform_8, window_bounds = array<i64: 1, 120>}, {pipeline_mode = #tpu.pipeline_mode<synchronous>, transform_indices = @transform_9, window_bounds = array<i64: 120, 84>}, {pipeline_mode = #tpu.pipeline_mode<synchronous>, transform_indices = @transform_10, window_bounds = array<i64: 1, 84>}, {pipeline_mode = #tpu.pipeline_mode<synchronous>, transform_indices = @transform_11, window_bounds = array<i64: 84, 4>}, {pipeline_mode = #tpu.pipeline_mode<synchronous>, transform_indices = @transform_12, window_bounds = array<i64: 1, 4>}, {transform_indices = @transform_13, window_bounds = array<i64: 2, 4>}]} {
    tpu.enqueue_dma source(%arg8 : memref<8x224x120xf32, #tpu.memory_space<any>>) target(%arg15 : memref<8x224x120xf32, #tpu.memory_space<vmem>>) target_semaphore(%arg16 : memref<!tpu.dma_semaphore, #tpu.memory_space<semaphore_mem>>)
    %c0 = arith.constant 0 : index
    %c0_0 = arith.constant 0 : index
    %c0_1 = arith.constant 0 : index
    %0 = vector.load %arg1[%c0, %c0_0, %c0_1] : memref<2x28x40xf32, #tpu.memory_space<vmem>>, vector<1x24x40xf32>
    %1 = vector.shape_cast %0 : vector<1x24x40xf32> to vector<24x40xf32>
    %c0_2 = arith.constant 0 : index
    %c0_3 = arith.constant 0 : index
    %c0_4 = arith.constant 0 : index
    %2 = vector.load %arg2[%c0_2, %c0_3, %c0_4] : memref<5x40x72xf32, #tpu.memory_space<vmem>>, vector<1x40x72xf32>
    %3 = vector.shape_cast %2 : vector<1x40x72xf32> to vector<40x72xf32>
    %cst = arith.constant dense<0.000000e+00> : vector<24x72xf32>
    %4 = tpu.matmul %1, %3, %cst {dimension_numbers = #tpu.dot_dimension_numbers<[1], [0], [0], [1], [0, 0, 1, 1], [], []>} : vector<24x40xf32>, vector<40x72xf32>, vector<24x72xf32> -> vector<24x72xf32>
    %c0_5 = arith.constant 0 : index
    %c1 = arith.constant 1 : index
    %c0_6 = arith.constant 0 : index
    %5 = vector.load %arg1[%c0_5, %c1, %c0_6] : memref<2x28x40xf32, #tpu.memory_space<vmem>>, vector<1x24x40xf32>
    %6 = vector.shape_cast %5 : vector<1x24x40xf32> to vector<24x40xf32>
    %c1_7 = arith.constant 1 : index
    %c0_8 = arith.constant 0 : index
    %c0_9 = arith.constant 0 : index
    %7 = vector.load %arg2[%c1_7, %c0_8, %c0_9] : memref<5x40x72xf32, #tpu.memory_space<vmem>>, vector<1x40x72xf32>
    %8 = vector.shape_cast %7 : vector<1x40x72xf32> to vector<40x72xf32>
    %cst_10 = arith.constant dense<0.000000e+00> : vector<24x72xf32>
    %9 = tpu.matmul %6, %8, %cst_10 {dimension_numbers = #tpu.dot_dimension_numbers<[1], [0], [0], [1], [0, 0, 1, 1], [], []>} : vector<24x40xf32>, vector<40x72xf32>, vector<24x72xf32> -> vector<24x72xf32>
    %c0_11 = arith.constant 0 : index
    %c2 = arith.constant 2 : index
    %c0_12 = arith.constant 0 : index
    %10 = vector.load %arg1[%c0_11, %c2, %c0_12] : memref<2x28x40xf32, #tpu.memory_space<vmem>>, vector<1x24x40xf32>
    %11 = vector.shape_cast %10 : vector<1x24x40xf32> to vector<24x40xf32>
    %c2_13 = arith.constant 2 : index
    %c0_14 = arith.constant 0 : index
    %c0_15 = arith.constant 0 : index
    %12 = vector.load %arg2[%c2_13, %c0_14, %c0_15] : memref<5x40x72xf32, #tpu.memory_space<vmem>>, vector<1x40x72xf32>
    %13 = vector.shape_cast %12 : vector<1x40x72xf32> to vector<40x72xf32>
    %cst_16 = arith.constant dense<0.000000e+00> : vector<24x72xf32>
    %14 = tpu.matmul %11, %13, %cst_16 {dimension_numbers = #tpu.dot_dimension_numbers<[1], [0], [0], [1], [0, 0, 1, 1], [], []>} : vector<24x40xf32>, vector<40x72xf32>, vector<24x72xf32> -> vector<24x72xf32>
    %c0_17 = arith.constant 0 : index
    %c3 = arith.constant 3 : index
    %c0_18 = arith.constant 0 : index
    %15 = vector.load %arg1[%c0_17, %c3, %c0_18] : memref<2x28x40xf32, #tpu.memory_space<vmem>>, vector<1x24x40xf32>
    %16 = vector.shape_cast %15 : vector<1x24x40xf32> to vector<24x40xf32>
    %c3_19 = arith.constant 3 : index
    %c0_20 = arith.constant 0 : index
    %c0_21 = arith.constant 0 : index
    %17 = vector.load %arg2[%c3_19, %c0_20, %c0_21] : memref<5x40x72xf32, #tpu.memory_space<vmem>>, vector<1x40x72xf32>
    %18 = vector.shape_cast %17 : vector<1x40x72xf32> to vector<40x72xf32>
    %cst_22 = arith.constant dense<0.000000e+00> : vector<24x72xf32>
    %19 = tpu.matmul %16, %18, %cst_22 {dimension_numbers = #tpu.dot_dimension_numbers<[1], [0], [0], [1], [0, 0, 1, 1], [], []>} : vector<24x40xf32>, vector<40x72xf32>, vector<24x72xf32> -> vector<24x72xf32>
    %c0_23 = arith.constant 0 : index
    %c4 = arith.constant 4 : index
    %c0_24 = arith.constant 0 : index
    %20 = vector.load %arg1[%c0_23, %c4, %c0_24] : memref<2x28x40xf32, #tpu.memory_space<vmem>>, vector<1x24x40xf32>
    %21 = vector.shape_cast %20 : vector<1x24x40xf32> to vector<24x40xf32>
    %c4_25 = arith.constant 4 : index
    %c0_26 = arith.constant 0 : index
    %c0_27 = arith.constant 0 : index
    %22 = vector.load %arg2[%c4_25, %c0_26, %c0_27] : memref<5x40x72xf32, #tpu.memory_space<vmem>>, vector<1x40x72xf32>
    %23 = vector.shape_cast %22 : vector<1x40x72xf32> to vector<40x72xf32>
    %cst_28 = arith.constant dense<0.000000e+00> : vector<24x72xf32>
    %24 = tpu.matmul %21, %23, %cst_28 {dimension_numbers = #tpu.dot_dimension_numbers<[1], [0], [0], [1], [0, 0, 1, 1], [], []>} : vector<24x40xf32>, vector<40x72xf32>, vector<24x72xf32> -> vector<24x72xf32>
    %25 = arith.addf %4, %9 : vector<24x72xf32>
    %26 = arith.addf %14, %19 : vector<24x72xf32>
    %27 = arith.addf %25, %26 : vector<24x72xf32>
    %28 = arith.addf %27, %24 : vector<24x72xf32>
    %c0_29 = arith.constant 0 : index
    %c0_30 = arith.constant 0 : index
    %29 = vector.load %arg3[%c0_29, %c0_30] : memref<1x72xf32, #tpu.memory_space<vmem>>, vector<1x72xf32>
    %30 = vector.broadcast %29 : vector<1x72xf32> to vector<24x72xf32>
    %31 = arith.addf %28, %30 : vector<24x72xf32>
    %cst_31 = arith.constant 0.000000e+00 : f32
    %32 = vector.broadcast %cst_31 : f32 to vector<24x72xf32>
    %33 = arith.maximumf %31, %32 : vector<24x72xf32>
    %c0_32 = arith.constant 0 : index
    %c0_33 = arith.constant 0 : index
    %c0_34 = arith.constant 0 : index
    %34 = vector.load %arg4[%c0_32, %c0_33, %c0_34] : memref<2x12x24xf32, #tpu.memory_space<vmem>>, vector<1x12x24xf32>
    %35 = vector.shape_cast %34 : vector<1x12x24xf32> to vector<12x24xf32>
    %cst_35 = arith.constant dense<0.000000e+00> : vector<12x72xf32>
    %36 = tpu.matmul %35, %33, %cst_35 {dimension_numbers = #tpu.dot_dimension_numbers<[1], [0], [0], [1], [0, 0, 1, 1], [], []>} : vector<12x24xf32>, vector<24x72xf32>, vector<12x72xf32> -> vector<12x72xf32>
    %c1_36 = arith.constant 1 : index
    %c0_37 = arith.constant 0 : index
    %c0_38 = arith.constant 0 : index
    %37 = vector.load %arg4[%c1_36, %c0_37, %c0_38] : memref<2x12x24xf32, #tpu.memory_space<vmem>>, vector<1x12x24xf32>
    %38 = vector.shape_cast %37 : vector<1x12x24xf32> to vector<12x24xf32>
    %cst_39 = arith.constant dense<0.000000e+00> : vector<12x72xf32>
    %39 = tpu.matmul %38, %33, %cst_39 {dimension_numbers = #tpu.dot_dimension_numbers<[1], [0], [0], [1], [0, 0, 1, 1], [], []>} : vector<12x24xf32>, vector<24x72xf32>, vector<12x72xf32> -> vector<12x72xf32>
    %40 = arith.maximumf %36, %39 : vector<12x72xf32>
    %c0_40 = arith.constant 0 : index
    %c0_41 = arith.constant 0 : index
    %c0_42 = arith.constant 0 : index
    %41 = vector.load %arg5[%c0_40, %c0_41, %c0_42] : memref<2x72x36xf32, #tpu.memory_space<vmem>>, vector<1x72x36xf32>
    %42 = vector.shape_cast %41 : vector<1x72x36xf32> to vector<72x36xf32>
    %cst_43 = arith.constant dense<0.000000e+00> : vector<12x36xf32>
    %43 = tpu.matmul %40, %42, %cst_43 {dimension_numbers = #tpu.dot_dimension_numbers<[1], [0], [0], [1], [0, 0, 1, 1], [], []>} : vector<12x72xf32>, vector<72x36xf32>, vector<12x36xf32> -> vector<12x36xf32>
    %c1_44 = arith.constant 1 : index
    %c0_45 = arith.constant 0 : index
    %c0_46 = arith.constant 0 : index
    %44 = vector.load %arg5[%c1_44, %c0_45, %c0_46] : memref<2x72x36xf32, #tpu.memory_space<vmem>>, vector<1x72x36xf32>
    %45 = vector.shape_cast %44 : vector<1x72x36xf32> to vector<72x36xf32>
    %cst_47 = arith.constant dense<0.000000e+00> : vector<12x36xf32>
    %46 = tpu.matmul %40, %45, %cst_47 {dimension_numbers = #tpu.dot_dimension_numbers<[1], [0], [0], [1], [0, 0, 1, 1], [], []>} : vector<12x72xf32>, vector<72x36xf32>, vector<12x36xf32> -> vector<12x36xf32>
    %47 = arith.maximumf %43, %46 : vector<12x36xf32>
    %48 = vector.extract_strided_slice %47 {offsets = [0, 0], sizes = [8, 36], strides = [1, 1]} : vector<12x36xf32> to vector<8x36xf32>
    %c0_48 = arith.constant 0 : index
    %c0_49 = arith.constant 0 : index
    %c0_50 = arith.constant 0 : index
    %49 = vector.load %arg6[%c0_48, %c0_49, %c0_50] : memref<5x36x224xf32, #tpu.memory_space<vmem>>, vector<1x36x224xf32>
    %50 = vector.shape_cast %49 : vector<1x36x224xf32> to vector<36x224xf32>
    %cst_51 = arith.constant dense<0.000000e+00> : vector<8x224xf32>
    %51 = tpu.matmul %48, %50, %cst_51 {dimension_numbers = #tpu.dot_dimension_numbers<[1], [0], [0], [1], [0, 0, 1, 1], [], []>} : vector<8x36xf32>, vector<36x224xf32>, vector<8x224xf32> -> vector<8x224xf32>
    %52 = vector.extract_strided_slice %47 {offsets = [1, 0], sizes = [8, 36], strides = [1, 1]} : vector<12x36xf32> to vector<8x36xf32>
    %c1_52 = arith.constant 1 : index
    %c0_53 = arith.constant 0 : index
    %c0_54 = arith.constant 0 : index
    %53 = vector.load %arg6[%c1_52, %c0_53, %c0_54] : memref<5x36x224xf32, #tpu.memory_space<vmem>>, vector<1x36x224xf32>
    %54 = vector.shape_cast %53 : vector<1x36x224xf32> to vector<36x224xf32>
    %cst_55 = arith.constant dense<0.000000e+00> : vector<8x224xf32>
    %55 = tpu.matmul %52, %54, %cst_55 {dimension_numbers = #tpu.dot_dimension_numbers<[1], [0], [0], [1], [0, 0, 1, 1], [], []>} : vector<8x36xf32>, vector<36x224xf32>, vector<8x224xf32> -> vector<8x224xf32>
    %56 = vector.extract_strided_slice %47 {offsets = [2, 0], sizes = [8, 36], strides = [1, 1]} : vector<12x36xf32> to vector<8x36xf32>
    %c2_56 = arith.constant 2 : index
    %c0_57 = arith.constant 0 : index
    %c0_58 = arith.constant 0 : index
    %57 = vector.load %arg6[%c2_56, %c0_57, %c0_58] : memref<5x36x224xf32, #tpu.memory_space<vmem>>, vector<1x36x224xf32>
    %58 = vector.shape_cast %57 : vector<1x36x224xf32> to vector<36x224xf32>
    %cst_59 = arith.constant dense<0.000000e+00> : vector<8x224xf32>
    %59 = tpu.matmul %56, %58, %cst_59 {dimension_numbers = #tpu.dot_dimension_numbers<[1], [0], [0], [1], [0, 0, 1, 1], [], []>} : vector<8x36xf32>, vector<36x224xf32>, vector<8x224xf32> -> vector<8x224xf32>
    %60 = vector.extract_strided_slice %47 {offsets = [3, 0], sizes = [8, 36], strides = [1, 1]} : vector<12x36xf32> to vector<8x36xf32>
    %c3_60 = arith.constant 3 : index
    %c0_61 = arith.constant 0 : index
    %c0_62 = arith.constant 0 : index
    %61 = vector.load %arg6[%c3_60, %c0_61, %c0_62] : memref<5x36x224xf32, #tpu.memory_space<vmem>>, vector<1x36x224xf32>
    %62 = vector.shape_cast %61 : vector<1x36x224xf32> to vector<36x224xf32>
    %cst_63 = arith.constant dense<0.000000e+00> : vector<8x224xf32>
    %63 = tpu.matmul %60, %62, %cst_63 {dimension_numbers = #tpu.dot_dimension_numbers<[1], [0], [0], [1], [0, 0, 1, 1], [], []>} : vector<8x36xf32>, vector<36x224xf32>, vector<8x224xf32> -> vector<8x224xf32>
    %64 = vector.extract_strided_slice %47 {offsets = [4, 0], sizes = [8, 36], strides = [1, 1]} : vector<12x36xf32> to vector<8x36xf32>
    %c4_64 = arith.constant 4 : index
    %c0_65 = arith.constant 0 : index
    %c0_66 = arith.constant 0 : index
    %65 = vector.load %arg6[%c4_64, %c0_65, %c0_66] : memref<5x36x224xf32, #tpu.memory_space<vmem>>, vector<1x36x224xf32>
    %66 = vector.shape_cast %65 : vector<1x36x224xf32> to vector<36x224xf32>
    %cst_67 = arith.constant dense<0.000000e+00> : vector<8x224xf32>
    %67 = tpu.matmul %64, %66, %cst_67 {dimension_numbers = #tpu.dot_dimension_numbers<[1], [0], [0], [1], [0, 0, 1, 1], [], []>} : vector<8x36xf32>, vector<36x224xf32>, vector<8x224xf32> -> vector<8x224xf32>
    %68 = arith.addf %51, %55 : vector<8x224xf32>
    %69 = arith.addf %59, %63 : vector<8x224xf32>
    %70 = arith.addf %68, %69 : vector<8x224xf32>
    %71 = arith.addf %70, %67 : vector<8x224xf32>
    %c0_68 = arith.constant 0 : index
    %c0_69 = arith.constant 0 : index
    %72 = vector.load %arg7[%c0_68, %c0_69] : memref<1x224xf32, #tpu.memory_space<vmem>>, vector<1x224xf32>
    %73 = vector.broadcast %72 : vector<1x224xf32> to vector<8x224xf32>
    %74 = arith.addf %71, %73 : vector<8x224xf32>
    %cst_70 = arith.constant 0.000000e+00 : f32
    %75 = vector.broadcast %cst_70 : f32 to vector<8x224xf32>
    %76 = arith.maximumf %74, %75 : vector<8x224xf32>
    %c1_71 = arith.constant 1 : index
    %c0_72 = arith.constant 0 : index
    %c0_73 = arith.constant 0 : index
    %77 = vector.load %arg1[%c1_71, %c0_72, %c0_73] : memref<2x28x40xf32, #tpu.memory_space<vmem>>, vector<1x24x40xf32>
    %78 = vector.shape_cast %77 : vector<1x24x40xf32> to vector<24x40xf32>
    %c0_74 = arith.constant 0 : index
    %c0_75 = arith.constant 0 : index
    %c0_76 = arith.constant 0 : index
    %79 = vector.load %arg2[%c0_74, %c0_75, %c0_76] : memref<5x40x72xf32, #tpu.memory_space<vmem>>, vector<1x40x72xf32>
    %80 = vector.shape_cast %79 : vector<1x40x72xf32> to vector<40x72xf32>
    %cst_77 = arith.constant dense<0.000000e+00> : vector<24x72xf32>
    %81 = tpu.matmul %78, %80, %cst_77 {dimension_numbers = #tpu.dot_dimension_numbers<[1], [0], [0], [1], [0, 0, 1, 1], [], []>} : vector<24x40xf32>, vector<40x72xf32>, vector<24x72xf32> -> vector<24x72xf32>
    %c1_78 = arith.constant 1 : index
    %c1_79 = arith.constant 1 : index
    %c0_80 = arith.constant 0 : index
    %82 = vector.load %arg1[%c1_78, %c1_79, %c0_80] : memref<2x28x40xf32, #tpu.memory_space<vmem>>, vector<1x24x40xf32>
    %83 = vector.shape_cast %82 : vector<1x24x40xf32> to vector<24x40xf32>
    %c1_81 = arith.constant 1 : index
    %c0_82 = arith.constant 0 : index
    %c0_83 = arith.constant 0 : index
    %84 = vector.load %arg2[%c1_81, %c0_82, %c0_83] : memref<5x40x72xf32, #tpu.memory_space<vmem>>, vector<1x40x72xf32>
    %85 = vector.shape_cast %84 : vector<1x40x72xf32> to vector<40x72xf32>
    %cst_84 = arith.constant dense<0.000000e+00> : vector<24x72xf32>
    %86 = tpu.matmul %83, %85, %cst_84 {dimension_numbers = #tpu.dot_dimension_numbers<[1], [0], [0], [1], [0, 0, 1, 1], [], []>} : vector<24x40xf32>, vector<40x72xf32>, vector<24x72xf32> -> vector<24x72xf32>
    %c1_85 = arith.constant 1 : index
    %c2_86 = arith.constant 2 : index
    %c0_87 = arith.constant 0 : index
    %87 = vector.load %arg1[%c1_85, %c2_86, %c0_87] : memref<2x28x40xf32, #tpu.memory_space<vmem>>, vector<1x24x40xf32>
    %88 = vector.shape_cast %87 : vector<1x24x40xf32> to vector<24x40xf32>
    %c2_88 = arith.constant 2 : index
    %c0_89 = arith.constant 0 : index
    %c0_90 = arith.constant 0 : index
    %89 = vector.load %arg2[%c2_88, %c0_89, %c0_90] : memref<5x40x72xf32, #tpu.memory_space<vmem>>, vector<1x40x72xf32>
    %90 = vector.shape_cast %89 : vector<1x40x72xf32> to vector<40x72xf32>
    %cst_91 = arith.constant dense<0.000000e+00> : vector<24x72xf32>
    %91 = tpu.matmul %88, %90, %cst_91 {dimension_numbers = #tpu.dot_dimension_numbers<[1], [0], [0], [1], [0, 0, 1, 1], [], []>} : vector<24x40xf32>, vector<40x72xf32>, vector<24x72xf32> -> vector<24x72xf32>
    %c1_92 = arith.constant 1 : index
    %c3_93 = arith.constant 3 : index
    %c0_94 = arith.constant 0 : index
    %92 = vector.load %arg1[%c1_92, %c3_93, %c0_94] : memref<2x28x40xf32, #tpu.memory_space<vmem>>, vector<1x24x40xf32>
    %93 = vector.shape_cast %92 : vector<1x24x40xf32> to vector<24x40xf32>
    %c3_95 = arith.constant 3 : index
    %c0_96 = arith.constant 0 : index
    %c0_97 = arith.constant 0 : index
    %94 = vector.load %arg2[%c3_95, %c0_96, %c0_97] : memref<5x40x72xf32, #tpu.memory_space<vmem>>, vector<1x40x72xf32>
    %95 = vector.shape_cast %94 : vector<1x40x72xf32> to vector<40x72xf32>
    %cst_98 = arith.constant dense<0.000000e+00> : vector<24x72xf32>
    %96 = tpu.matmul %93, %95, %cst_98 {dimension_numbers = #tpu.dot_dimension_numbers<[1], [0], [0], [1], [0, 0, 1, 1], [], []>} : vector<24x40xf32>, vector<40x72xf32>, vector<24x72xf32> -> vector<24x72xf32>
    %c1_99 = arith.constant 1 : index
    %c4_100 = arith.constant 4 : index
    %c0_101 = arith.constant 0 : index
    %97 = vector.load %arg1[%c1_99, %c4_100, %c0_101] : memref<2x28x40xf32, #tpu.memory_space<vmem>>, vector<1x24x40xf32>
    %98 = vector.shape_cast %97 : vector<1x24x40xf32> to vector<24x40xf32>
    %c4_102 = arith.constant 4 : index
    %c0_103 = arith.constant 0 : index
    %c0_104 = arith.constant 0 : index
    %99 = vector.load %arg2[%c4_102, %c0_103, %c0_104] : memref<5x40x72xf32, #tpu.memory_space<vmem>>, vector<1x40x72xf32>
    %100 = vector.shape_cast %99 : vector<1x40x72xf32> to vector<40x72xf32>
    %cst_105 = arith.constant dense<0.000000e+00> : vector<24x72xf32>
    %101 = tpu.matmul %98, %100, %cst_105 {dimension_numbers = #tpu.dot_dimension_numbers<[1], [0], [0], [1], [0, 0, 1, 1], [], []>} : vector<24x40xf32>, vector<40x72xf32>, vector<24x72xf32> -> vector<24x72xf32>
    %102 = arith.addf %81, %86 : vector<24x72xf32>
    %103 = arith.addf %91, %96 : vector<24x72xf32>
    %104 = arith.addf %102, %103 : vector<24x72xf32>
    %105 = arith.addf %104, %101 : vector<24x72xf32>
    %c0_106 = arith.constant 0 : index
    %c0_107 = arith.constant 0 : index
    %106 = vector.load %arg3[%c0_106, %c0_107] : memref<1x72xf32, #tpu.memory_space<vmem>>, vector<1x72xf32>
    %107 = vector.broadcast %106 : vector<1x72xf32> to vector<24x72xf32>
    %108 = arith.addf %105, %107 : vector<24x72xf32>
    %cst_108 = arith.constant 0.000000e+00 : f32
    %109 = vector.broadcast %cst_108 : f32 to vector<24x72xf32>
    %110 = arith.maximumf %108, %109 : vector<24x72xf32>
    %c0_109 = arith.constant 0 : index
    %c0_110 = arith.constant 0 : index
    %c0_111 = arith.constant 0 : index
    %111 = vector.load %arg4[%c0_109, %c0_110, %c0_111] : memref<2x12x24xf32, #tpu.memory_space<vmem>>, vector<1x12x24xf32>
    %112 = vector.shape_cast %111 : vector<1x12x24xf32> to vector<12x24xf32>
    %cst_112 = arith.constant dense<0.000000e+00> : vector<12x72xf32>
    %113 = tpu.matmul %112, %110, %cst_112 {dimension_numbers = #tpu.dot_dimension_numbers<[1], [0], [0], [1], [0, 0, 1, 1], [], []>} : vector<12x24xf32>, vector<24x72xf32>, vector<12x72xf32> -> vector<12x72xf32>
    %c1_113 = arith.constant 1 : index
    %c0_114 = arith.constant 0 : index
    %c0_115 = arith.constant 0 : index
    %114 = vector.load %arg4[%c1_113, %c0_114, %c0_115] : memref<2x12x24xf32, #tpu.memory_space<vmem>>, vector<1x12x24xf32>
    %115 = vector.shape_cast %114 : vector<1x12x24xf32> to vector<12x24xf32>
    %cst_116 = arith.constant dense<0.000000e+00> : vector<12x72xf32>
    %116 = tpu.matmul %115, %110, %cst_116 {dimension_numbers = #tpu.dot_dimension_numbers<[1], [0], [0], [1], [0, 0, 1, 1], [], []>} : vector<12x24xf32>, vector<24x72xf32>, vector<12x72xf32> -> vector<12x72xf32>
    %117 = arith.maximumf %113, %116 : vector<12x72xf32>
    %c0_117 = arith.constant 0 : index
    %c0_118 = arith.constant 0 : index
    %c0_119 = arith.constant 0 : index
    %118 = vector.load %arg5[%c0_117, %c0_118, %c0_119] : memref<2x72x36xf32, #tpu.memory_space<vmem>>, vector<1x72x36xf32>
    %119 = vector.shape_cast %118 : vector<1x72x36xf32> to vector<72x36xf32>
    %cst_120 = arith.constant dense<0.000000e+00> : vector<12x36xf32>
    %120 = tpu.matmul %117, %119, %cst_120 {dimension_numbers = #tpu.dot_dimension_numbers<[1], [0], [0], [1], [0, 0, 1, 1], [], []>} : vector<12x72xf32>, vector<72x36xf32>, vector<12x36xf32> -> vector<12x36xf32>
    %c1_121 = arith.constant 1 : index
    %c0_122 = arith.constant 0 : index
    %c0_123 = arith.constant 0 : index
    %121 = vector.load %arg5[%c1_121, %c0_122, %c0_123] : memref<2x72x36xf32, #tpu.memory_space<vmem>>, vector<1x72x36xf32>
    %122 = vector.shape_cast %121 : vector<1x72x36xf32> to vector<72x36xf32>
    %cst_124 = arith.constant dense<0.000000e+00> : vector<12x36xf32>
    %123 = tpu.matmul %117, %122, %cst_124 {dimension_numbers = #tpu.dot_dimension_numbers<[1], [0], [0], [1], [0, 0, 1, 1], [], []>} : vector<12x72xf32>, vector<72x36xf32>, vector<12x36xf32> -> vector<12x36xf32>
    %124 = arith.maximumf %120, %123 : vector<12x36xf32>
    %125 = vector.extract_strided_slice %124 {offsets = [0, 0], sizes = [8, 36], strides = [1, 1]} : vector<12x36xf32> to vector<8x36xf32>
    %c0_125 = arith.constant 0 : index
    %c0_126 = arith.constant 0 : index
    %c0_127 = arith.constant 0 : index
    %126 = vector.load %arg6[%c0_125, %c0_126, %c0_127] : memref<5x36x224xf32, #tpu.memory_space<vmem>>, vector<1x36x224xf32>
    %127 = vector.shape_cast %126 : vector<1x36x224xf32> to vector<36x224xf32>
    %cst_128 = arith.constant dense<0.000000e+00> : vector<8x224xf32>
    %128 = tpu.matmul %125, %127, %cst_128 {dimension_numbers = #tpu.dot_dimension_numbers<[1], [0], [0], [1], [0, 0, 1, 1], [], []>} : vector<8x36xf32>, vector<36x224xf32>, vector<8x224xf32> -> vector<8x224xf32>
    %129 = vector.extract_strided_slice %124 {offsets = [1, 0], sizes = [8, 36], strides = [1, 1]} : vector<12x36xf32> to vector<8x36xf32>
    %c1_129 = arith.constant 1 : index
    %c0_130 = arith.constant 0 : index
    %c0_131 = arith.constant 0 : index
    %130 = vector.load %arg6[%c1_129, %c0_130, %c0_131] : memref<5x36x224xf32, #tpu.memory_space<vmem>>, vector<1x36x224xf32>
    %131 = vector.shape_cast %130 : vector<1x36x224xf32> to vector<36x224xf32>
    %cst_132 = arith.constant dense<0.000000e+00> : vector<8x224xf32>
    %132 = tpu.matmul %129, %131, %cst_132 {dimension_numbers = #tpu.dot_dimension_numbers<[1], [0], [0], [1], [0, 0, 1, 1], [], []>} : vector<8x36xf32>, vector<36x224xf32>, vector<8x224xf32> -> vector<8x224xf32>
    %133 = vector.extract_strided_slice %124 {offsets = [2, 0], sizes = [8, 36], strides = [1, 1]} : vector<12x36xf32> to vector<8x36xf32>
    %c2_133 = arith.constant 2 : index
    %c0_134 = arith.constant 0 : index
    %c0_135 = arith.constant 0 : index
    %134 = vector.load %arg6[%c2_133, %c0_134, %c0_135] : memref<5x36x224xf32, #tpu.memory_space<vmem>>, vector<1x36x224xf32>
    %135 = vector.shape_cast %134 : vector<1x36x224xf32> to vector<36x224xf32>
    %cst_136 = arith.constant dense<0.000000e+00> : vector<8x224xf32>
    %136 = tpu.matmul %133, %135, %cst_136 {dimension_numbers = #tpu.dot_dimension_numbers<[1], [0], [0], [1], [0, 0, 1, 1], [], []>} : vector<8x36xf32>, vector<36x224xf32>, vector<8x224xf32> -> vector<8x224xf32>
    %137 = vector.extract_strided_slice %124 {offsets = [3, 0], sizes = [8, 36], strides = [1, 1]} : vector<12x36xf32> to vector<8x36xf32>
    %c3_137 = arith.constant 3 : index
    %c0_138 = arith.constant 0 : index
    %c0_139 = arith.constant 0 : index
    %138 = vector.load %arg6[%c3_137, %c0_138, %c0_139] : memref<5x36x224xf32, #tpu.memory_space<vmem>>, vector<1x36x224xf32>
    %139 = vector.shape_cast %138 : vector<1x36x224xf32> to vector<36x224xf32>
    %cst_140 = arith.constant dense<0.000000e+00> : vector<8x224xf32>
    %140 = tpu.matmul %137, %139, %cst_140 {dimension_numbers = #tpu.dot_dimension_numbers<[1], [0], [0], [1], [0, 0, 1, 1], [], []>} : vector<8x36xf32>, vector<36x224xf32>, vector<8x224xf32> -> vector<8x224xf32>
    %141 = vector.extract_strided_slice %124 {offsets = [4, 0], sizes = [8, 36], strides = [1, 1]} : vector<12x36xf32> to vector<8x36xf32>
    %c4_141 = arith.constant 4 : index
    %c0_142 = arith.constant 0 : index
    %c0_143 = arith.constant 0 : index
    %142 = vector.load %arg6[%c4_141, %c0_142, %c0_143] : memref<5x36x224xf32, #tpu.memory_space<vmem>>, vector<1x36x224xf32>
    %143 = vector.shape_cast %142 : vector<1x36x224xf32> to vector<36x224xf32>
    %cst_144 = arith.constant dense<0.000000e+00> : vector<8x224xf32>
    %144 = tpu.matmul %141, %143, %cst_144 {dimension_numbers = #tpu.dot_dimension_numbers<[1], [0], [0], [1], [0, 0, 1, 1], [], []>} : vector<8x36xf32>, vector<36x224xf32>, vector<8x224xf32> -> vector<8x224xf32>
    %145 = arith.addf %128, %132 : vector<8x224xf32>
    %146 = arith.addf %136, %140 : vector<8x224xf32>
    %147 = arith.addf %145, %146 : vector<8x224xf32>
    %148 = arith.addf %147, %144 : vector<8x224xf32>
    %c0_145 = arith.constant 0 : index
    %c0_146 = arith.constant 0 : index
    %149 = vector.load %arg7[%c0_145, %c0_146] : memref<1x224xf32, #tpu.memory_space<vmem>>, vector<1x224xf32>
    %150 = vector.broadcast %149 : vector<1x224xf32> to vector<8x224xf32>
    %151 = arith.addf %148, %150 : vector<8x224xf32>
    %cst_147 = arith.constant 0.000000e+00 : f32
    %152 = vector.broadcast %cst_147 : f32 to vector<8x224xf32>
    %153 = arith.maximumf %151, %152 : vector<8x224xf32>
    tpu.wait_dma2 semaphore(%arg16 : memref<!tpu.dma_semaphore, #tpu.memory_space<semaphore_mem>>) src(%arg8 : memref<8x224x120xf32, #tpu.memory_space<any>>) dst(%arg15 : memref<8x224x120xf32, #tpu.memory_space<vmem>>)
    %154 = vector.extract_strided_slice %76 {offsets = [0, 0], sizes = [1, 224], strides = [1, 1]} : vector<8x224xf32> to vector<1x224xf32>
    %c0_148 = arith.constant 0 : index
    %c0_149 = arith.constant 0 : index
    %c0_150 = arith.constant 0 : index
    %155 = vector.load %arg15[%c0_148, %c0_149, %c0_150] : memref<8x224x120xf32, #tpu.memory_space<vmem>>, vector<1x224x120xf32>
    %156 = vector.shape_cast %155 : vector<1x224x120xf32> to vector<224x120xf32>
    %cst_151 = arith.constant dense<0.000000e+00> : vector<1x120xf32>
    %157 = tpu.matmul %154, %156, %cst_151 {dimension_numbers = #tpu.dot_dimension_numbers<[1], [0], [0], [1], [0, 0, 1, 1], [], []>} : vector<1x224xf32>, vector<224x120xf32>, vector<1x120xf32> -> vector<1x120xf32>
    %158 = vector.extract_strided_slice %76 {offsets = [1, 0], sizes = [1, 224], strides = [1, 1]} : vector<8x224xf32> to vector<1x224xf32>
    %c1_152 = arith.constant 1 : index
    %c0_153 = arith.constant 0 : index
    %c0_154 = arith.constant 0 : index
    %159 = vector.load %arg15[%c1_152, %c0_153, %c0_154] : memref<8x224x120xf32, #tpu.memory_space<vmem>>, vector<1x224x120xf32>
    %160 = vector.shape_cast %159 : vector<1x224x120xf32> to vector<224x120xf32>
    %cst_155 = arith.constant dense<0.000000e+00> : vector<1x120xf32>
    %161 = tpu.matmul %158, %160, %cst_155 {dimension_numbers = #tpu.dot_dimension_numbers<[1], [0], [0], [1], [0, 0, 1, 1], [], []>} : vector<1x224xf32>, vector<224x120xf32>, vector<1x120xf32> -> vector<1x120xf32>
    %162 = vector.extract_strided_slice %76 {offsets = [2, 0], sizes = [1, 224], strides = [1, 1]} : vector<8x224xf32> to vector<1x224xf32>
    %c2_156 = arith.constant 2 : index
    %c0_157 = arith.constant 0 : index
    %c0_158 = arith.constant 0 : index
    %163 = vector.load %arg15[%c2_156, %c0_157, %c0_158] : memref<8x224x120xf32, #tpu.memory_space<vmem>>, vector<1x224x120xf32>
    %164 = vector.shape_cast %163 : vector<1x224x120xf32> to vector<224x120xf32>
    %cst_159 = arith.constant dense<0.000000e+00> : vector<1x120xf32>
    %165 = tpu.matmul %162, %164, %cst_159 {dimension_numbers = #tpu.dot_dimension_numbers<[1], [0], [0], [1], [0, 0, 1, 1], [], []>} : vector<1x224xf32>, vector<224x120xf32>, vector<1x120xf32> -> vector<1x120xf32>
    %166 = vector.extract_strided_slice %76 {offsets = [3, 0], sizes = [1, 224], strides = [1, 1]} : vector<8x224xf32> to vector<1x224xf32>
    %c3_160 = arith.constant 3 : index
    %c0_161 = arith.constant 0 : index
    %c0_162 = arith.constant 0 : index
    %167 = vector.load %arg15[%c3_160, %c0_161, %c0_162] : memref<8x224x120xf32, #tpu.memory_space<vmem>>, vector<1x224x120xf32>
    %168 = vector.shape_cast %167 : vector<1x224x120xf32> to vector<224x120xf32>
    %cst_163 = arith.constant dense<0.000000e+00> : vector<1x120xf32>
    %169 = tpu.matmul %166, %168, %cst_163 {dimension_numbers = #tpu.dot_dimension_numbers<[1], [0], [0], [1], [0, 0, 1, 1], [], []>} : vector<1x224xf32>, vector<224x120xf32>, vector<1x120xf32> -> vector<1x120xf32>
    %170 = vector.extract_strided_slice %76 {offsets = [4, 0], sizes = [1, 224], strides = [1, 1]} : vector<8x224xf32> to vector<1x224xf32>
    %c4_164 = arith.constant 4 : index
    %c0_165 = arith.constant 0 : index
    %c0_166 = arith.constant 0 : index
    %171 = vector.load %arg15[%c4_164, %c0_165, %c0_166] : memref<8x224x120xf32, #tpu.memory_space<vmem>>, vector<1x224x120xf32>
    %172 = vector.shape_cast %171 : vector<1x224x120xf32> to vector<224x120xf32>
    %cst_167 = arith.constant dense<0.000000e+00> : vector<1x120xf32>
    %173 = tpu.matmul %170, %172, %cst_167 {dimension_numbers = #tpu.dot_dimension_numbers<[1], [0], [0], [1], [0, 0, 1, 1], [], []>} : vector<1x224xf32>, vector<224x120xf32>, vector<1x120xf32> -> vector<1x120xf32>
    %174 = vector.extract_strided_slice %76 {offsets = [5, 0], sizes = [1, 224], strides = [1, 1]} : vector<8x224xf32> to vector<1x224xf32>
    %c5 = arith.constant 5 : index
    %c0_168 = arith.constant 0 : index
    %c0_169 = arith.constant 0 : index
    %175 = vector.load %arg15[%c5, %c0_168, %c0_169] : memref<8x224x120xf32, #tpu.memory_space<vmem>>, vector<1x224x120xf32>
    %176 = vector.shape_cast %175 : vector<1x224x120xf32> to vector<224x120xf32>
    %cst_170 = arith.constant dense<0.000000e+00> : vector<1x120xf32>
    %177 = tpu.matmul %174, %176, %cst_170 {dimension_numbers = #tpu.dot_dimension_numbers<[1], [0], [0], [1], [0, 0, 1, 1], [], []>} : vector<1x224xf32>, vector<224x120xf32>, vector<1x120xf32> -> vector<1x120xf32>
    %178 = vector.extract_strided_slice %76 {offsets = [6, 0], sizes = [1, 224], strides = [1, 1]} : vector<8x224xf32> to vector<1x224xf32>
    %c6 = arith.constant 6 : index
    %c0_171 = arith.constant 0 : index
    %c0_172 = arith.constant 0 : index
    %179 = vector.load %arg15[%c6, %c0_171, %c0_172] : memref<8x224x120xf32, #tpu.memory_space<vmem>>, vector<1x224x120xf32>
    %180 = vector.shape_cast %179 : vector<1x224x120xf32> to vector<224x120xf32>
    %cst_173 = arith.constant dense<0.000000e+00> : vector<1x120xf32>
    %181 = tpu.matmul %178, %180, %cst_173 {dimension_numbers = #tpu.dot_dimension_numbers<[1], [0], [0], [1], [0, 0, 1, 1], [], []>} : vector<1x224xf32>, vector<224x120xf32>, vector<1x120xf32> -> vector<1x120xf32>
    %182 = vector.extract_strided_slice %76 {offsets = [7, 0], sizes = [1, 224], strides = [1, 1]} : vector<8x224xf32> to vector<1x224xf32>
    %c7 = arith.constant 7 : index
    %c0_174 = arith.constant 0 : index
    %c0_175 = arith.constant 0 : index
    %183 = vector.load %arg15[%c7, %c0_174, %c0_175] : memref<8x224x120xf32, #tpu.memory_space<vmem>>, vector<1x224x120xf32>
    %184 = vector.shape_cast %183 : vector<1x224x120xf32> to vector<224x120xf32>
    %cst_176 = arith.constant dense<0.000000e+00> : vector<1x120xf32>
    %185 = tpu.matmul %182, %184, %cst_176 {dimension_numbers = #tpu.dot_dimension_numbers<[1], [0], [0], [1], [0, 0, 1, 1], [], []>} : vector<1x224xf32>, vector<224x120xf32>, vector<1x120xf32> -> vector<1x120xf32>
    %186 = arith.addf %157, %161 : vector<1x120xf32>
    %187 = arith.addf %165, %169 : vector<1x120xf32>
    %188 = arith.addf %173, %177 : vector<1x120xf32>
    %189 = arith.addf %181, %185 : vector<1x120xf32>
    %190 = arith.addf %186, %187 : vector<1x120xf32>
    %191 = arith.addf %188, %189 : vector<1x120xf32>
    %192 = arith.addf %190, %191 : vector<1x120xf32>
    %c0_177 = arith.constant 0 : index
    %c0_178 = arith.constant 0 : index
    %193 = vector.load %arg9[%c0_177, %c0_178] : memref<1x120xf32, #tpu.memory_space<vmem>>, vector<1x120xf32>
    %194 = arith.addf %192, %193 : vector<1x120xf32>
    %cst_179 = arith.constant 0.000000e+00 : f32
    %195 = vector.broadcast %cst_179 : f32 to vector<1x120xf32>
    %196 = arith.maximumf %194, %195 : vector<1x120xf32>
    %c0_180 = arith.constant 0 : index
    %c0_181 = arith.constant 0 : index
    %197 = vector.load %arg10[%c0_180, %c0_181] : memref<120x84xf32, #tpu.memory_space<vmem>>, vector<120x84xf32>
    %cst_182 = arith.constant dense<0.000000e+00> : vector<1x84xf32>
    %198 = tpu.matmul %196, %197, %cst_182 {dimension_numbers = #tpu.dot_dimension_numbers<[1], [0], [0], [1], [0, 0, 1, 1], [], []>} : vector<1x120xf32>, vector<120x84xf32>, vector<1x84xf32> -> vector<1x84xf32>
    %c0_183 = arith.constant 0 : index
    %c0_184 = arith.constant 0 : index
    %199 = vector.load %arg11[%c0_183, %c0_184] : memref<1x84xf32, #tpu.memory_space<vmem>>, vector<1x84xf32>
    %200 = arith.addf %198, %199 : vector<1x84xf32>
    %cst_185 = arith.constant 0.000000e+00 : f32
    %201 = vector.broadcast %cst_185 : f32 to vector<1x84xf32>
    %202 = arith.maximumf %200, %201 : vector<1x84xf32>
    %c0_186 = arith.constant 0 : index
    %c0_187 = arith.constant 0 : index
    %203 = vector.load %arg12[%c0_186, %c0_187] : memref<84x4xf32, #tpu.memory_space<vmem>>, vector<84x4xf32>
    %cst_188 = arith.constant dense<0.000000e+00> : vector<1x4xf32>
    %204 = tpu.matmul %202, %203, %cst_188 {dimension_numbers = #tpu.dot_dimension_numbers<[1], [0], [0], [1], [0, 0, 1, 1], [], []>} : vector<1x84xf32>, vector<84x4xf32>, vector<1x4xf32> -> vector<1x4xf32>
    %c0_189 = arith.constant 0 : index
    %c0_190 = arith.constant 0 : index
    %205 = vector.load %arg13[%c0_189, %c0_190] : memref<1x4xf32, #tpu.memory_space<vmem>>, vector<1x4xf32>
    %206 = arith.addf %204, %205 : vector<1x4xf32>
    %207 = vector.extract_strided_slice %153 {offsets = [0, 0], sizes = [1, 224], strides = [1, 1]} : vector<8x224xf32> to vector<1x224xf32>
    %c0_191 = arith.constant 0 : index
    %c0_192 = arith.constant 0 : index
    %c0_193 = arith.constant 0 : index
    %208 = vector.load %arg15[%c0_191, %c0_192, %c0_193] : memref<8x224x120xf32, #tpu.memory_space<vmem>>, vector<1x224x120xf32>
    %209 = vector.shape_cast %208 : vector<1x224x120xf32> to vector<224x120xf32>
    %cst_194 = arith.constant dense<0.000000e+00> : vector<1x120xf32>
    %210 = tpu.matmul %207, %209, %cst_194 {dimension_numbers = #tpu.dot_dimension_numbers<[1], [0], [0], [1], [0, 0, 1, 1], [], []>} : vector<1x224xf32>, vector<224x120xf32>, vector<1x120xf32> -> vector<1x120xf32>
    %211 = vector.extract_strided_slice %153 {offsets = [1, 0], sizes = [1, 224], strides = [1, 1]} : vector<8x224xf32> to vector<1x224xf32>
    %c1_195 = arith.constant 1 : index
    %c0_196 = arith.constant 0 : index
    %c0_197 = arith.constant 0 : index
    %212 = vector.load %arg15[%c1_195, %c0_196, %c0_197] : memref<8x224x120xf32, #tpu.memory_space<vmem>>, vector<1x224x120xf32>
    %213 = vector.shape_cast %212 : vector<1x224x120xf32> to vector<224x120xf32>
    %cst_198 = arith.constant dense<0.000000e+00> : vector<1x120xf32>
    %214 = tpu.matmul %211, %213, %cst_198 {dimension_numbers = #tpu.dot_dimension_numbers<[1], [0], [0], [1], [0, 0, 1, 1], [], []>} : vector<1x224xf32>, vector<224x120xf32>, vector<1x120xf32> -> vector<1x120xf32>
    %215 = vector.extract_strided_slice %153 {offsets = [2, 0], sizes = [1, 224], strides = [1, 1]} : vector<8x224xf32> to vector<1x224xf32>
    %c2_199 = arith.constant 2 : index
    %c0_200 = arith.constant 0 : index
    %c0_201 = arith.constant 0 : index
    %216 = vector.load %arg15[%c2_199, %c0_200, %c0_201] : memref<8x224x120xf32, #tpu.memory_space<vmem>>, vector<1x224x120xf32>
    %217 = vector.shape_cast %216 : vector<1x224x120xf32> to vector<224x120xf32>
    %cst_202 = arith.constant dense<0.000000e+00> : vector<1x120xf32>
    %218 = tpu.matmul %215, %217, %cst_202 {dimension_numbers = #tpu.dot_dimension_numbers<[1], [0], [0], [1], [0, 0, 1, 1], [], []>} : vector<1x224xf32>, vector<224x120xf32>, vector<1x120xf32> -> vector<1x120xf32>
    %219 = vector.extract_strided_slice %153 {offsets = [3, 0], sizes = [1, 224], strides = [1, 1]} : vector<8x224xf32> to vector<1x224xf32>
    %c3_203 = arith.constant 3 : index
    %c0_204 = arith.constant 0 : index
    %c0_205 = arith.constant 0 : index
    %220 = vector.load %arg15[%c3_203, %c0_204, %c0_205] : memref<8x224x120xf32, #tpu.memory_space<vmem>>, vector<1x224x120xf32>
    %221 = vector.shape_cast %220 : vector<1x224x120xf32> to vector<224x120xf32>
    %cst_206 = arith.constant dense<0.000000e+00> : vector<1x120xf32>
    %222 = tpu.matmul %219, %221, %cst_206 {dimension_numbers = #tpu.dot_dimension_numbers<[1], [0], [0], [1], [0, 0, 1, 1], [], []>} : vector<1x224xf32>, vector<224x120xf32>, vector<1x120xf32> -> vector<1x120xf32>
    %223 = vector.extract_strided_slice %153 {offsets = [4, 0], sizes = [1, 224], strides = [1, 1]} : vector<8x224xf32> to vector<1x224xf32>
    %c4_207 = arith.constant 4 : index
    %c0_208 = arith.constant 0 : index
    %c0_209 = arith.constant 0 : index
    %224 = vector.load %arg15[%c4_207, %c0_208, %c0_209] : memref<8x224x120xf32, #tpu.memory_space<vmem>>, vector<1x224x120xf32>
    %225 = vector.shape_cast %224 : vector<1x224x120xf32> to vector<224x120xf32>
    %cst_210 = arith.constant dense<0.000000e+00> : vector<1x120xf32>
    %226 = tpu.matmul %223, %225, %cst_210 {dimension_numbers = #tpu.dot_dimension_numbers<[1], [0], [0], [1], [0, 0, 1, 1], [], []>} : vector<1x224xf32>, vector<224x120xf32>, vector<1x120xf32> -> vector<1x120xf32>
    %227 = vector.extract_strided_slice %153 {offsets = [5, 0], sizes = [1, 224], strides = [1, 1]} : vector<8x224xf32> to vector<1x224xf32>
    %c5_211 = arith.constant 5 : index
    %c0_212 = arith.constant 0 : index
    %c0_213 = arith.constant 0 : index
    %228 = vector.load %arg15[%c5_211, %c0_212, %c0_213] : memref<8x224x120xf32, #tpu.memory_space<vmem>>, vector<1x224x120xf32>
    %229 = vector.shape_cast %228 : vector<1x224x120xf32> to vector<224x120xf32>
    %cst_214 = arith.constant dense<0.000000e+00> : vector<1x120xf32>
    %230 = tpu.matmul %227, %229, %cst_214 {dimension_numbers = #tpu.dot_dimension_numbers<[1], [0], [0], [1], [0, 0, 1, 1], [], []>} : vector<1x224xf32>, vector<224x120xf32>, vector<1x120xf32> -> vector<1x120xf32>
    %231 = vector.extract_strided_slice %153 {offsets = [6, 0], sizes = [1, 224], strides = [1, 1]} : vector<8x224xf32> to vector<1x224xf32>
    %c6_215 = arith.constant 6 : index
    %c0_216 = arith.constant 0 : index
    %c0_217 = arith.constant 0 : index
    %232 = vector.load %arg15[%c6_215, %c0_216, %c0_217] : memref<8x224x120xf32, #tpu.memory_space<vmem>>, vector<1x224x120xf32>
    %233 = vector.shape_cast %232 : vector<1x224x120xf32> to vector<224x120xf32>
    %cst_218 = arith.constant dense<0.000000e+00> : vector<1x120xf32>
    %234 = tpu.matmul %231, %233, %cst_218 {dimension_numbers = #tpu.dot_dimension_numbers<[1], [0], [0], [1], [0, 0, 1, 1], [], []>} : vector<1x224xf32>, vector<224x120xf32>, vector<1x120xf32> -> vector<1x120xf32>
    %235 = vector.extract_strided_slice %153 {offsets = [7, 0], sizes = [1, 224], strides = [1, 1]} : vector<8x224xf32> to vector<1x224xf32>
    %c7_219 = arith.constant 7 : index
    %c0_220 = arith.constant 0 : index
    %c0_221 = arith.constant 0 : index
    %236 = vector.load %arg15[%c7_219, %c0_220, %c0_221] : memref<8x224x120xf32, #tpu.memory_space<vmem>>, vector<1x224x120xf32>
    %237 = vector.shape_cast %236 : vector<1x224x120xf32> to vector<224x120xf32>
    %cst_222 = arith.constant dense<0.000000e+00> : vector<1x120xf32>
    %238 = tpu.matmul %235, %237, %cst_222 {dimension_numbers = #tpu.dot_dimension_numbers<[1], [0], [0], [1], [0, 0, 1, 1], [], []>} : vector<1x224xf32>, vector<224x120xf32>, vector<1x120xf32> -> vector<1x120xf32>
    %239 = arith.addf %210, %214 : vector<1x120xf32>
    %240 = arith.addf %218, %222 : vector<1x120xf32>
    %241 = arith.addf %226, %230 : vector<1x120xf32>
    %242 = arith.addf %234, %238 : vector<1x120xf32>
    %243 = arith.addf %239, %240 : vector<1x120xf32>
    %244 = arith.addf %241, %242 : vector<1x120xf32>
    %245 = arith.addf %243, %244 : vector<1x120xf32>
    %c0_223 = arith.constant 0 : index
    %c0_224 = arith.constant 0 : index
    %246 = vector.load %arg9[%c0_223, %c0_224] : memref<1x120xf32, #tpu.memory_space<vmem>>, vector<1x120xf32>
    %247 = arith.addf %245, %246 : vector<1x120xf32>
    %cst_225 = arith.constant 0.000000e+00 : f32
    %248 = vector.broadcast %cst_225 : f32 to vector<1x120xf32>
    %249 = arith.maximumf %247, %248 : vector<1x120xf32>
    %c0_226 = arith.constant 0 : index
    %c0_227 = arith.constant 0 : index
    %250 = vector.load %arg10[%c0_226, %c0_227] : memref<120x84xf32, #tpu.memory_space<vmem>>, vector<120x84xf32>
    %cst_228 = arith.constant dense<0.000000e+00> : vector<1x84xf32>
    %251 = tpu.matmul %249, %250, %cst_228 {dimension_numbers = #tpu.dot_dimension_numbers<[1], [0], [0], [1], [0, 0, 1, 1], [], []>} : vector<1x120xf32>, vector<120x84xf32>, vector<1x84xf32> -> vector<1x84xf32>
    %c0_229 = arith.constant 0 : index
    %c0_230 = arith.constant 0 : index
    %252 = vector.load %arg11[%c0_229, %c0_230] : memref<1x84xf32, #tpu.memory_space<vmem>>, vector<1x84xf32>
    %253 = arith.addf %251, %252 : vector<1x84xf32>
    %cst_231 = arith.constant 0.000000e+00 : f32
    %254 = vector.broadcast %cst_231 : f32 to vector<1x84xf32>
    %255 = arith.maximumf %253, %254 : vector<1x84xf32>
    %c0_232 = arith.constant 0 : index
    %c0_233 = arith.constant 0 : index
    %256 = vector.load %arg12[%c0_232, %c0_233] : memref<84x4xf32, #tpu.memory_space<vmem>>, vector<84x4xf32>
    %cst_234 = arith.constant dense<0.000000e+00> : vector<1x4xf32>
    %257 = tpu.matmul %255, %256, %cst_234 {dimension_numbers = #tpu.dot_dimension_numbers<[1], [0], [0], [1], [0, 0, 1, 1], [], []>} : vector<1x84xf32>, vector<84x4xf32>, vector<1x4xf32> -> vector<1x4xf32>
    %c0_235 = arith.constant 0 : index
    %c0_236 = arith.constant 0 : index
    %258 = vector.load %arg13[%c0_235, %c0_236] : memref<1x4xf32, #tpu.memory_space<vmem>>, vector<1x4xf32>
    %259 = arith.addf %257, %258 : vector<1x4xf32>
    %260 = tpu.concatenate %206, %259 in 0 : vector<1x4xf32>, vector<1x4xf32> -> vector<2x4xf32>
    %c0_237 = arith.constant 0 : index
    %c0_238 = arith.constant 0 : index
    %261 = vector.load %arg14[%c0_237, %c0_238] : memref<2x4xf32, #tpu.memory_space<vmem>>, vector<2x4xf32>
    tpu.vector_store %arg14[%c0_237, %c0_238], %260 {strides = array<i32>} : memref<2x4xf32, #tpu.memory_space<vmem>>, vector<2x4xf32>,
    return
  }
  func.func @transform_0(%arg0: i32) -> (i32, i32, i32) {
    %c0_i32 = arith.constant 0 : i32
    %c0_i32_0 = arith.constant 0 : i32
    %c0_i32_1 = arith.constant 0 : i32
    return %arg0, %c0_i32, %c0_i32_0 : i32, i32, i32
  }
  func.func @transform_1(%arg0: i32) -> (i32, i32, i32) {
    %c0_i32 = arith.constant 0 : i32
    %c0_i32_0 = arith.constant 0 : i32
    %c0_i32_1 = arith.constant 0 : i32
    %c0_i32_2 = arith.constant 0 : i32
    return %c0_i32, %c0_i32_0, %c0_i32_1 : i32, i32, i32
  }
  func.func @transform_2(%arg0: i32) -> (i32, i32) {
    %c0_i32 = arith.constant 0 : i32
    %c0_i32_0 = arith.constant 0 : i32
    %c0_i32_1 = arith.constant 0 : i32
    return %c0_i32, %c0_i32_0 : i32, i32
  }
  func.func @transform_3(%arg0: i32) -> (i32, i32, i32) {
    %c0_i32 = arith.constant 0 : i32
    %c0_i32_0 = arith.constant 0 : i32
    %c0_i32_1 = arith.constant 0 : i32
    %c0_i32_2 = arith.constant 0 : i32
    return %c0_i32, %c0_i32_0, %c0_i32_1 : i32, i32, i32
  }
  func.func @transform_4(%arg0: i32) -> (i32, i32, i32) {
    %c0_i32 = arith.constant 0 : i32
    %c0_i32_0 = arith.constant 0 : i32
    %c0_i32_1 = arith.constant 0 : i32
    %c0_i32_2 = arith.constant 0 : i32
    return %c0_i32, %c0_i32_0, %c0_i32_1 : i32, i32, i32
  }
  func.func @transform_5(%arg0: i32) -> (i32, i32, i32) {
    %c0_i32 = arith.constant 0 : i32
    %c0_i32_0 = arith.constant 0 : i32
    %c0_i32_1 = arith.constant 0 : i32
    %c0_i32_2 = arith.constant 0 : i32
    return %c0_i32, %c0_i32_0, %c0_i32_1 : i32, i32, i32
  }
  func.func @transform_6(%arg0: i32) -> (i32, i32) {
    %c0_i32 = arith.constant 0 : i32
    %c0_i32_0 = arith.constant 0 : i32
    %c0_i32_1 = arith.constant 0 : i32
    return %c0_i32, %c0_i32_0 : i32, i32
  }
  func.func @transform_8(%arg0: i32) -> (i32, i32) {
    %c0_i32 = arith.constant 0 : i32
    %c0_i32_0 = arith.constant 0 : i32
    %c0_i32_1 = arith.constant 0 : i32
    return %c0_i32, %c0_i32_0 : i32, i32
  }
  func.func @transform_9(%arg0: i32) -> (i32, i32) {
    %c0_i32 = arith.constant 0 : i32
    %c0_i32_0 = arith.constant 0 : i32
    %c0_i32_1 = arith.constant 0 : i32
    return %c0_i32, %c0_i32_0 : i32, i32
  }
  func.func @transform_10(%arg0: i32) -> (i32, i32) {
    %c0_i32 = arith.constant 0 : i32
    %c0_i32_0 = arith.constant 0 : i32
    %c0_i32_1 = arith.constant 0 : i32
    return %c0_i32, %c0_i32_0 : i32, i32
  }
  func.func @transform_11(%arg0: i32) -> (i32, i32) {
    %c0_i32 = arith.constant 0 : i32
    %c0_i32_0 = arith.constant 0 : i32
    %c0_i32_1 = arith.constant 0 : i32
    return %c0_i32, %c0_i32_0 : i32, i32
  }
  func.func @transform_12(%arg0: i32) -> (i32, i32) {
    %c0_i32 = arith.constant 0 : i32
    %c0_i32_0 = arith.constant 0 : i32
    %c0_i32_1 = arith.constant 0 : i32
    return %c0_i32, %c0_i32_0 : i32, i32
  }
  func.func @transform_13(%arg0: i32) -> (i32, i32) {
    %c0_i32 = arith.constant 0 : i32
    %c0_i32_0 = arith.constant 0 : i32
    return %arg0, %c0_i32 : i32, i32
  }
}

</mosaic_0001>

<llo_original>
// kernel: convnet_forward.1
$region0: #{convnet_forward.1}
  #allocation0 [shape = 'u32[]', space=smem, size = 0x4, offset = 0x4, fixed_abs, tag = 'smem constant byte address 0x4 - core index']
  #allocation1 [shape = 'u32[144,128]{1,0:T(1,128)}', space=vmem, size = 0x12000, scoped, tag = 'internal scratch']
  #allocation2 [shape = 'f32[8,224,120]{2,1,0:T(8,128)}', space=vmem, size = 0xe0000, scoped, tag = 'scratch operand']
  #allocation3 [shape = 's32[1]{0}', space=sflag, size = 0x4, scoped, tag = 'scratch operand']
  #allocation6 [shape = 's32[]', space=sflag, size = 0x4, offset = 0, fixed_abs, tag = 'sflag constant byte address 0x0 - dummy sync flag']
  #allocation7 [shape = 's32[]', space=sflag, size = 0x4, offset = 0, fixed_abs, tag = 'sflag constant byte address 0x0 - dummy sync flag']
  #allocation8 [shape = 'u32[]', space=smem, size = 0x4, offset = 0x44, fixed_abs, tag = 'smem constant byte address 0x44 - assertion arg 0']
  #allocation9 [shape = 'u32[]', space=smem, size = 0x4, offset = 0x48, fixed_abs, tag = 'smem constant byte address 0x48 - assertion arg 1']
  %s0 = inlined_call_operand.vmem [shape: f32[2,28,40], index: 0, kind: input, shape index: {}]
  %s1 = inlined_call_operand.vmem [shape: f32[5,40,72], index: 1, kind: input, shape index: {}]
  %s2 = inlined_call_operand.vmem [shape: f32[1,72], index: 2, kind: input, shape index: {}]
  %s3 = inlined_call_operand.vmem [shape: f32[2,12,24], index: 3, kind: input, shape index: {}]
  %s4 = inlined_call_operand.vmem [shape: f32[2,72,36], index: 4, kind: input, shape index: {}]
  %s5 = inlined_call_operand.vmem [shape: f32[5,36,224], index: 5, kind: input, shape index: {}]
  %s6 = inlined_call_operand.vmem [shape: f32[1,224], index: 6, kind: input, shape index: {}]
  %s7 = inlined_call_operand.hbm [shape: f32[8,224,120], index: 7, kind: input, shape index: {}]
  %s8 = inlined_call_operand.vmem [shape: f32[1,120], index: 8, kind: input, shape index: {}]
  %s9 = inlined_call_operand.vmem [shape: f32[120,84], index: 9, kind: input, shape index: {}]
  %s10 = inlined_call_operand.vmem [shape: f32[1,84], index: 10, kind: input, shape index: {}]
  %s11 = inlined_call_operand.vmem [shape: f32[84,4], index: 11, kind: input, shape index: {}]
  %s12 = inlined_call_operand.vmem [shape: f32[1,4], index: 12, kind: input, shape index: {}]
  %s13 = inlined_call_operand.hbm [shape: f32[2,4], index: 13, kind: output, shape index: {}]
  %s14 = sld [smem:[#allocation0]]
  $region62: #{convnet_forward.1} parent=0
    _
  %s16 = ssub.s32 1, %s14
  %s17 = scalar_select 0, %s16, %s14
  $region1: #{convnet_forward.1} parent=0
    #allocation4 [shape = 'u8[1024]{0}', space=vmem, size = 0x400, scoped, tag = 'output window, operand 0, single buffered']
    #allocation5 [shape = 's32[1]{0}', space=sflag, size = 0x4, scoped, tag = 'scoped memory for convnet_forward.1']
    %18 = vsyncpa [#allocation5], 0
    // Predicated region
    $region2: #{convnet_forward.1} parent=1 // pred_check
      _
    $region3: #{convnet_forward.1} parent=1 // pred_check_branch
      %20 = sbr.rel (0) target = $region5
    $region4: #{convnet_forward.1} parent=1 // pred_region
      _
    $region5: #{convnet_forward.1} parent=1 // pred_fallthru
      _
    // Predicated region
    $region6: #{convnet_forward.1} parent=1 // pred_check
      _
    $region7: #{convnet_forward.1} parent=1 // pred_check_branch
      %22 = sbr.rel (0) target = $region9
    $region8: #{convnet_forward.1} parent=1 // pred_region
      _
    $region9: #{convnet_forward.1} parent=1 // pred_fallthru
      _
    // Predicated region
    $region10: #{convnet_forward.1} parent=1 // pred_check
      _
    $region11: #{convnet_forward.1} parent=1 // pred_check_branch
      %24 = sbr.rel (0) target = $region13
    $region12: #{convnet_forward.1} parent=1 // pred_region
      _
    $region13: #{convnet_forward.1} parent=1 // pred_fallthru
      _
    // Predicated region
    $region14: #{convnet_forward.1} parent=1 // pred_check
      _
    $region15: #{convnet_forward.1} parent=1 // pred_check_branch
      %26 = sbr.rel (0) target = $region17
    $region16: #{convnet_forward.1} parent=1 // pred_region
      _
    $region17: #{convnet_forward.1} parent=1 // pred_fallthru
      _
    // Predicated region
    $region18: #{convnet_forward.1} parent=1 // pred_check
      _
    $region19: #{convnet_forward.1} parent=1 // pred_check_branch
      %28 = sbr.rel (0) target = $region21
    $region20: #{convnet_forward.1} parent=1 // pred_region
      _
    $region21: #{convnet_forward.1} parent=1 // pred_fallthru
      _
    // Predicated region
    $region22: #{convnet_forward.1} parent=1 // pred_check
      _
    $region23: #{convnet_forward.1} parent=1 // pred_check_branch
      %30 = sbr.rel (0) target = $region25
    $region24: #{convnet_forward.1} parent=1 // pred_region
      _
    $region25: #{convnet_forward.1} parent=1 // pred_fallthru
      _
    // Predicated region
    $region26: #{convnet_forward.1} parent=1 // pred_check
      _
    $region27: #{convnet_forward.1} parent=1 // pred_check_branch
      %32 = sbr.rel (0) target = $region29
    $region28: #{convnet_forward.1} parent=1 // pred_region
      _
    $region29: #{convnet_forward.1} parent=1 // pred_fallthru
      _
    // Predicated region
    $region30: #{convnet_forward.1} parent=1 // pred_check
      _
    $region31: #{convnet_forward.1} parent=1 // pred_check_branch
      %34 = sbr.rel (0) target = $region33
    $region32: #{convnet_forward.1} parent=1 // pred_region
      _
    $region33: #{convnet_forward.1} parent=1 // pred_fallthru
      _
    // Predicated region
    $region34: #{convnet_forward.1} parent=1 // pred_check
      _
    $region35: #{convnet_forward.1} parent=1 // pred_check_branch
      %36 = sbr.rel (0) target = $region37
    $region36: #{convnet_forward.1} parent=1 // pred_region
      _
    $region37: #{convnet_forward.1} parent=1 // pred_fallthru
      _
    // Predicated region
    $region38: #{convnet_forward.1} parent=1 // pred_check
      _
    $region39: #{convnet_forward.1} parent=1 // pred_check_branch
      %38 = sbr.rel (0) target = $region41
    $region40: #{convnet_forward.1} parent=1 // pred_region
      _
    $region41: #{convnet_forward.1} parent=1 // pred_fallthru
      _
    // Predicated region
    $region42: #{convnet_forward.1} parent=1 // pred_check
      _
    $region43: #{convnet_forward.1} parent=1 // pred_check_branch
      %40 = sbr.rel (0) target = $region45
    $region44: #{convnet_forward.1} parent=1 // pred_region
      _
    $region45: #{convnet_forward.1} parent=1 // pred_fallthru
      _
    // Predicated region
    $region46: #{convnet_forward.1} parent=1 // pred_check
      _
    $region47: #{convnet_forward.1} parent=1 // pred_check_branch
      %42 = sbr.rel (0) target = $region49
    $region48: #{convnet_forward.1} parent=1 // pred_region
      _
    $region49: #{convnet_forward.1} parent=1 // pred_fallthru
      _
    // Predicated region
    $region50: #{convnet_forward.1} parent=1 // pred_check
      _
    $region51: #{convnet_forward.1} parent=1 // pred_check_branch
      %44 = sbr.rel target = $region53
    $region52: #{convnet_forward.1} parent=1 // pred_region
      %45 = sst [smem:[#allocation8]] [#allocation7]
      %46 = sst [smem:[#allocation9]] [#allocation6]
    $region53: #{convnet_forward.1} parent=1 // pred_fallthru
      _
    %48 = shalt.err (0)
    %s50 = sshll.u32 [#allocation2], 4
    %s51 = int_to_ptr.vmem [resolvable:$true] %s50
    %53 = dma.hbm_to_vmem [thread:$0]  %s7, 28672, %s51, [#allocation3]
    %v54 = vld [vmem:[%s0] sm:$0xff]
    %v55 = vld [vmem:[%s0 + $0x8] sm:$0xff]
    %v56 = vld [vmem:[%s0 + $0x10] sm:$0xff]
    %v57 = vld [vmem:[%s1] sm:$0xff]
    %v58 = vld [vmem:[%s1 + $0x8] sm:$0xff]
    %v59 = vld [vmem:[%s1 + $0x10] sm:$0xff]
    %v60 = vld [vmem:[%s1 + $0x18] sm:$0xff]
    %v61 = vld [vmem:[%s1 + $0x20] sm:$0xff]
    %v62 = vld [vmem:[%s0 + $0x1] sm:$0xff]
    %v63 = vld [vmem:[%s0 + $0x9] sm:$0xff]
    %v64 = vld [vmem:[%s0 + $0x11] sm:$0xff]
    %s65 = scalar_lea.vmem %s1, 40
    %v66 = vld [vmem:[%s65] sm:$0xff]
    %v67 = vld [vmem:[%s65 + $0x8] sm:$0xff]
    %v68 = vld [vmem:[%s65 + $0x10] sm:$0xff]
    %v69 = vld [vmem:[%s65 + $0x18] sm:$0xff]
    %v70 = vld [vmem:[%s65 + $0x20] sm:$0xff]
    %vm71 = vcmask 326656
    %v73 = vsel %vm71, %v62, 0
    %v76 = vsel %vm71, %v63, 0
    %v79 = vsel %vm71, %v64, 0
    %81 = vmatprep.subr.mxu0 0.0
    %82 = vmatpush1.msra.mxu0 %v66
    %83 = vmatprep.subr.mxu0 0.0
    %84 = vmatpush1.msra.mxu0 %v67
    %85 = vmatprep.subr.mxu0 0.0
    %86 = vmatpush1.msra.mxu0 %v68
    %87 = vmatprep.subr.mxu0 0.0
    %88 = vmatpush1.msra.mxu0 %v69
    %89 = vmatprep.subr.mxu0 0.0
    %90 = vmatpush1.msra.mxu0 %v70
    %91 = vmatprep.subr.mxu0 0.0
    %92 = vmatpush1.msra.mxu0 0.0
    %93 = vmatprep.subr.mxu0 0.0
    %94 = vmatpush1.msra.mxu0 0.0
    %95 = vmatprep.subr.mxu0 0.0
    %96 = vmatpush1.msra.mxu0 0.0
    %97 = vmatprep.subr.mxu0 0.0
    %98 = vmatpush1.msra.mxu0 0.0
    %99 = vmatprep.subr.mxu0 0.0
    %100 = vmatpush1.msra.mxu0 0.0
    %101 = vmatprep.subr.mxu0 0.0
    %102 = vmatpush1.msra.mxu0 0.0
    %103 = vmatprep.subr.mxu0 0.0
    %104 = vmatpush1.msra.mxu0 0.0
    %105 = vmatprep.subr.mxu0 0.0
    %106 = vmatpush1.msra.mxu0 0.0
    %107 = vmatprep.subr.mxu0 0.0
    %108 = vmatpush1.msra.mxu0 0.0
    %109 = vmatprep.subr.mxu0 0.0
    %110 = vmatpush1.msra.mxu0 0.0
    %111 = vmatprep.subr.mxu0 0.0
    %112 = vmatpush1.msra.mxu0 0.0
    %113 = vmatprep.subr.mxu0 0.0
    %114 = vmatpush1.msra.mxu0 0.0
    %115 = vmatprep.subr.mxu0 0.0
    %116 = vmatpush1.msra.mxu0 0.0
    %117 = vmatprep.subr.mxu0 0.0
    %118 = vmatpush1.msra.mxu0 0.0
    %119 = vmatprep.subr.mxu0 0.0
    %120 = vmatpush1.msra.mxu0 0.0
    %121 = vmatprep.subr.mxu0 0.0
    %122 = vmatpush1.msra.mxu0 0.0
    %123 = vmatprep.subr.mxu0 0.0
    %124 = vmatpush1.msra.mxu0 0.0
    %125 = vmatprep.subr.mxu0 0.0
    %126 = vmatpush1.msra.mxu0 0.0
    %127 = vmatprep.subr.mxu0 0.0
    %128 = vmatpush1.msra.mxu0 0.0
    %129 = vmatprep.subr.mxu0 0.0
    %130 = vmatpush1.msra.mxu0 0.0
    %131 = vmatprep.subr.mxu0 0.0
    %132 = vmatpush1.msra.mxu0 0.0
    %133 = vmatprep.subr.mxu0 0.0
    %134 = vmatpush1.msra.mxu0 0.0
    %135 = vmatprep.subr.mxu0 0.0
    %136 = vmatpush1.msra.mxu0 0.0
    %137 = vmatprep.subr.mxu0 0.0
    %138 = vmatpush1.msra.mxu0 0.0
    %139 = vmatprep.subr.mxu0 0.0
    %140 = vmatpush1.msra.mxu0 0.0
    %141 = vmatprep.subr.mxu0 0.0
    %142 = vmatpush1.msra.mxu0 0.0
    %143 = vmatprep.subr.mxu0 0.0
    %144 = vmatpush1.msra.mxu0 0.0
    %145 = vmatprep.mubr.f32.mxu0 0.0
    %146 = vmatmul.mubr.f32.gmra.mrb[0].mxu0 %v73
    %v147 = vpop.f32.mrb[0].mxu0
    %v148 = vadd.f32 0.0, %v147
    %v149 = vpop.f32.mrb[0].mxu0
    %150 = vmatprep.mubr.f32.mxu0 0.0
    %151 = vmatmul.mubr.f32.gmra.mrb[0].mxu0 %v76
    %v152 = vpop.f32.mrb[0].mxu0
    %v153 = vadd.f32 0.0, %v152
    %v154 = vpop.f32.mrb[0].mxu0
    %155 = vmatprep.mubr.f32.mxu0 0.0
    %156 = vmatmul.mubr.f32.gmra.mrb[0].mxu0 %v79
    %v157 = vpop.f32.mrb[0].mxu0
    %v158 = vadd.f32 0.0, %v157
    %v159 = vpop.f32.mrb[0].mxu0
    %160 = vdwg.mxu0
    %v161 = vld [vmem:[%s0 + $0x2] sm:$0xff]
    %v162 = vld [vmem:[%s0 + $0xa] sm:$0xff]
    %v163 = vld [vmem:[%s0 + $0x12] sm:$0xff]
    %s164 = scalar_lea.vmem %s1, 80
    %v165 = vld [vmem:[%s164] sm:$0xff]
    %v166 = vld [vmem:[%s164 + $0x8] sm:$0xff]
    %v167 = vld [vmem:[%s164 + $0x10] sm:$0xff]
    %v168 = vld [vmem:[%s164 + $0x18] sm:$0xff]
    %v169 = vld [vmem:[%s164 + $0x20] sm:$0xff]
    %v170 = vld [vmem:[%s0 + $0x3] sm:$0xff]
    %v171 = vld [vmem:[%s0 + $0xb] sm:$0xff]
    %v172 = vld [vmem:[%s0 + $0x13] sm:$0xff]
    %s173 = scalar_lea.vmem %s1, 120
    %v174 = vld [vmem:[%s173] sm:$0xff]
    %v175 = vld [vmem:[%s173 + $0x8] sm:$0xff]
    %v176 = vld [vmem:[%s173 + $0x10] sm:$0xff]
    %v177 = vld [vmem:[%s173 + $0x18] sm:$0xff]
    %v178 = vld [vmem:[%s173 + $0x20] sm:$0xff]
    %v180 = vsel %vm71, %v170, 0
    %v183 = vsel %vm71, %v171, 0
    %v186 = vsel %vm71, %v172, 0
    %188 = vmatprep.subr.mxu0 0.0
    %189 = vmatpush1.msra.mxu0 %v174
    %190 = vmatprep.subr.mxu0 0.0
    %191 = vmatpush1.msra.mxu0 %v175
    %192 = vmatprep.subr.mxu0 0.0
    %193 = vmatpush1.msra.mxu0 %v176
    %194 = vmatprep.subr.mxu0 0.0
    %195 = vmatpush1.msra.mxu0 %v177
    %196 = vmatprep.subr.mxu0 0.0
    %197 = vmatpush1.msra.mxu0 %v178
    %198 = vmatprep.subr.mxu0 0.0
    %199 = vmatpush1.msra.mxu0 0.0
    %200 = vmatprep.subr.mxu0 0.0
    %201 = vmatpush1.msra.mxu0 0.0
    %202 = vmatprep.subr.mxu0 0.0
    %203 = vmatpush1.msra.mxu0 0.0
    %204 = vmatprep.subr.mxu0 0.0
    %205 = vmatpush1.msra.mxu0 0.0
    %206 = vmatprep.subr.mxu0 0.0
    %207 = vmatpush1.msra.mxu0 0.0
    %208 = vmatprep.subr.mxu0 0.0
    %209 = vmatpush1.msra.mxu0 0.0
    %210 = vmatprep.subr.mxu0 0.0
    %211 = vmatpush1.msra.mxu0 0.0
    %212 = vmatprep.subr.mxu0 0.0
    %213 = vmatpush1.msra.mxu0 0.0
    %214 = vmatprep.subr.mxu0 0.0
    %215 = vmatpush1.msra.mxu0 0.0
    %216 = vmatprep.subr.mxu0 0.0
    %217 = vmatpush1.msra.mxu0 0.0
    %218 = vmatprep.subr.mxu0 0.0
    %219 = vmatpush1.msra.mxu0 0.0
    %220 = vmatprep.subr.mxu0 0.0
    %221 = vmatpush1.msra.mxu0 0.0
    %222 = vmatprep.subr.mxu0 0.0
    %223 = vmatpush1.msra.mxu0 0.0
    %224 = vmatprep.subr.mxu0 0.0
    %225 = vmatpush1.msra.mxu0 0.0
    %226 = vmatprep.subr.mxu0 0.0
    %227 = vmatpush1.msra.mxu0 0.0
    %228 = vmatprep.subr.mxu0 0.0
    %229 = vmatpush1.msra.mxu0 0.0
    %230 = vmatprep.subr.mxu0 0.0
    %231 = vmatpush1.msra.mxu0 0.0
    %232 = vmatprep.subr.mxu0 0.0
    %233 = vmatpush1.msra.mxu0 0.0
    %234 = vmatprep.subr.mxu0 0.0
    %235 = vmatpush1.msra.mxu0 0.0
    %236 = vmatprep.subr.mxu0 0.0
    %237 = vmatpush1.msra.mxu0 0.0
    %238 = vmatprep.subr.mxu0 0.0
    %239 = vmatpush1.msra.mxu0 0.0
    %240 = vmatprep.subr.mxu0 0.0
    %241 = vmatpush1.msra.mxu0 0.0
    %242 = vmatprep.subr.mxu0 0.0
    %243 = vmatpush1.msra.mxu0 0.0
    %244 = vmatprep.subr.mxu0 0.0
    %245 = vmatpush1.msra.mxu0 0.0
    %246 = vmatprep.subr.mxu0 0.0
    %247 = vmatpush1.msra.mxu0 0.0
    %248 = vmatprep.subr.mxu0 0.0
    %249 = vmatpush1.msra.mxu0 0.0
    %250 = vmatprep.subr.mxu0 0.0
    %251 = vmatpush1.msra.mxu0 0.0
    %252 = vmatprep.mubr.f32.mxu0 0.0
    %253 = vmatmul.mubr.f32.gmra.mrb[0].mxu0 %v180
    %v254 = vpop.f32.mrb[0].mxu0
    %v255 = vadd.f32 0.0, %v254
    %v256 = vpop.f32.mrb[0].mxu0
    %257 = vmatprep.mubr.f32.mxu0 0.0
    %258 = vmatmul.mubr.f32.gmra.mrb[0].mxu0 %v183
    %v259 = vpop.f32.mrb[0].mxu0
    %v260 = vadd.f32 0.0, %v259
    %v261 = vpop.f32.mrb[0].mxu0
    %262 = vmatprep.mubr.f32.mxu0 0.0
    %263 = vmatmul.mubr.f32.gmra.mrb[0].mxu0 %v186
    %v264 = vpop.f32.mrb[0].mxu0
    %v265 = vadd.f32 0.0, %v264
    %v266 = vpop.f32.mrb[0].mxu0
    %267 = vdwg.mxu0
    %v268 = vld [vmem:[%s0 + $0x4] sm:$0xff]
    %v269 = vld [vmem:[%s0 + $0xc] sm:$0xff]
    %v270 = vld [vmem:[%s0 + $0x14] sm:$0xff]
    %s271 = scalar_lea.vmem %s1, 160
    %v272 = vld [vmem:[%s271] sm:$0xff]
    %v273 = vld [vmem:[%s271 + $0x8] sm:$0xff]
    %v274 = vld [vmem:[%s271 + $0x10] sm:$0xff]
    %v275 = vld [vmem:[%s271 + $0x18] sm:$0xff]
    %v276 = vld [vmem:[%s271 + $0x20] sm:$0xff]
    %v278 = vsel %vm71, %v268, 0
    %v281 = vsel %vm71, %v269, 0
    %v284 = vsel %vm71, %v270, 0
    %286 = vmatprep.subr.mxu0 0.0
    %287 = vmatpush1.msra.mxu0 %v272
    %288 = vmatprep.subr.mxu0 0.0
    %289 = vmatpush1.msra.mxu0 %v273
    %290 = vmatprep.subr.mxu0 0.0
    %291 = vmatpush1.msra.mxu0 %v274
    %292 = vmatprep.subr.mxu0 0.0
    %293 = vmatpush1.msra.mxu0 %v275
    %294 = vmatprep.subr.mxu0 0.0
    %295 = vmatpush1.msra.mxu0 %v276
    %296 = vmatprep.subr.mxu0 0.0
    %297 = vmatpush1.msra.mxu0 0.0
    %298 = vmatprep.subr.mxu0 0.0
    %299 = vmatpush1.msra.mxu0 0.0
    %300 = vmatprep.subr.mxu0 0.0
    %301 = vmatpush1.msra.mxu0 0.0
    %302 = vmatprep.subr.mxu0 0.0
    %303 = vmatpush1.msra.mxu0 0.0
    %304 = vmatprep.subr.mxu0 0.0
    %305 = vmatpush1.msra.mxu0 0.0
    %306 = vmatprep.subr.mxu0 0.0
    %307 = vmatpush1.msra.mxu0 0.0
    %308 = vmatprep.subr.mxu0 0.0
    %309 = vmatpush1.msra.mxu0 0.0
    %310 = vmatprep.subr.mxu0 0.0
    %311 = vmatpush1.msra.mxu0 0.0
    %312 = vmatprep.subr.mxu0 0.0
    %313 = vmatpush1.msra.mxu0 0.0
    %314 = vmatprep.subr.mxu0 0.0
    %315 = vmatpush1.msra.mxu0 0.0
    %316 = vmatprep.subr.mxu0 0.0
    %317 = vmatpush1.msra.mxu0 0.0
    %318 = vmatprep.subr.mxu0 0.0
    %319 = vmatpush1.msra.mxu0 0.0
    %320 = vmatprep.subr.mxu0 0.0
    %321 = vmatpush1.msra.mxu0 0.0
    %322 = vmatprep.subr.mxu0 0.0
    %323 = vmatpush1.msra.mxu0 0.0
    %324 = vmatprep.subr.mxu0 0.0
    %325 = vmatpush1.msra.mxu0 0.0
    %326 = vmatprep.subr.mxu0 0.0
    %327 = vmatpush1.msra.mxu0 0.0
    %328 = vmatprep.subr.mxu0 0.0
    %329 = vmatpush1.msra.mxu0 0.0
    %330 = vmatprep.subr.mxu0 0.0
    %331 = vmatpush1.msra.mxu0 0.0
    %332 = vmatprep.subr.mxu0 0.0
    %333 = vmatpush1.msra.mxu0 0.0
    %334 = vmatprep.subr.mxu0 0.0
    %335 = vmatpush1.msra.mxu0 0.0
    %336 = vmatprep.subr.mxu0 0.0
    %337 = vmatpush1.msra.mxu0 0.0
    %338 = vmatprep.subr.mxu0 0.0
    %339 = vmatpush1.msra.mxu0 0.0
    %340 = vmatprep.subr.mxu0 0.0
    %341 = vmatpush1.msra.mxu0 0.0
    %342 = vmatprep.subr.mxu0 0.0
    %343 = vmatpush1.msra.mxu0 0.0
    %344 = vmatprep.subr.mxu0 0.0
    %345 = vmatpush1.msra.mxu0 0.0
    %346 = vmatprep.subr.mxu0 0.0
    %347 = vmatpush1.msra.mxu0 0.0
    %348 = vmatprep.subr.mxu0 0.0
    %349 = vmatpush1.msra.mxu0 0.0
    %350 = vmatprep.mubr.f32.mxu0 0.0
    %351 = vmatmul.mubr.f32.gmra.mrb[0].mxu0 %v278
    %v352 = vpop.f32.mrb[0].mxu0
    %v353 = vadd.f32 0.0, %v352
    %v354 = vpop.f32.mrb[0].mxu0
    %355 = vmatprep.mubr.f32.mxu0 0.0
    %356 = vmatmul.mubr.f32.gmra.mrb[0].mxu0 %v281
    %v357 = vpop.f32.mrb[0].mxu0
    %v358 = vadd.f32 0.0, %v357
    %v359 = vpop.f32.mrb[0].mxu0
    %360 = vmatprep.mubr.f32.mxu0 0.0
    %361 = vmatmul.mubr.f32.gmra.mrb[0].mxu0 %v284
    %v362 = vpop.f32.mrb[0].mxu0
    %v363 = vadd.f32 0.0, %v362
    %v364 = vpop.f32.mrb[0].mxu0
    %365 = vdwg.mxu0
    %v367 = vsel %vm71, %v54, 0
    %v370 = vsel %vm71, %v55, 0
    %v373 = vsel %vm71, %v56, 0
    %375 = vmatprep.subr.mxu0 0.0
    %376 = vmatpush1.msra.mxu0 %v57
    %377 = vmatprep.subr.mxu0 0.0
    %378 = vmatpush1.msra.mxu0 %v58
    %379 = vmatprep.subr.mxu0 0.0
    %380 = vmatpush1.msra.mxu0 %v59
    %381 = vmatprep.subr.mxu0 0.0
    %382 = vmatpush1.msra.mxu0 %v60
    %383 = vmatprep.subr.mxu0 0.0
    %384 = vmatpush1.msra.mxu0 %v61
    %385 = vmatprep.subr.mxu0 0.0
    %386 = vmatpush1.msra.mxu0 0.0
    %387 = vmatprep.subr.mxu0 0.0
    %388 = vmatpush1.msra.mxu0 0.0
    %389 = vmatprep.subr.mxu0 0.0
    %390 = vmatpush1.msra.mxu0 0.0
    %391 = vmatprep.subr.mxu0 0.0
    %392 = vmatpush1.msra.mxu0 0.0
    %393 = vmatprep.subr.mxu0 0.0
    %394 = vmatpush1.msra.mxu0 0.0
    %395 = vmatprep.subr.mxu0 0.0
    %396 = vmatpush1.msra.mxu0 0.0
    %397 = vmatprep.subr.mxu0 0.0
    %398 = vmatpush1.msra.mxu0 0.0
    %399 = vmatprep.subr.mxu0 0.0
    %400 = vmatpush1.msra.mxu0 0.0
    %401 = vmatprep.subr.mxu0 0.0
    %402 = vmatpush1.msra.mxu0 0.0
    %403 = vmatprep.subr.mxu0 0.0
    %404 = vmatpush1.msra.mxu0 0.0
    %405 = vmatprep.subr.mxu0 0.0
    %406 = vmatpush1.msra.mxu0 0.0
    %407 = vmatprep.subr.mxu0 0.0
    %408 = vmatpush1.msra.mxu0 0.0
    %409 = vmatprep.subr.mxu0 0.0
    %410 = vmatpush1.msra.mxu0 0.0
    %411 = vmatprep.subr.mxu0 0.0
    %412 = vmatpush1.msra.mxu0 0.0
    %413 = vmatprep.subr.mxu0 0.0
    %414 = vmatpush1.msra.mxu0 0.0
    %415 = vmatprep.subr.mxu0 0.0
    %416 = vmatpush1.msra.mxu0 0.0
    %417 = vmatprep.subr.mxu0 0.0
    %418 = vmatpush1.msra.mxu0 0.0
    %419 = vmatprep.subr.mxu0 0.0
    %420 = vmatpush1.msra.mxu0 0.0
    %421 = vmatprep.subr.mxu0 0.0
    %422 = vmatpush1.msra.mxu0 0.0
    %423 = vmatprep.subr.mxu0 0.0
    %424 = vmatpush1.msra.mxu0 0.0
    %425 = vmatprep.subr.mxu0 0.0
    %426 = vmatpush1.msra.mxu0 0.0
    %427 = vmatprep.subr.mxu0 0.0
    %428 = vmatpush1.msra.mxu0 0.0
    %429 = vmatprep.subr.mxu0 0.0
    %430 = vmatpush1.msra.mxu0 0.0
    %431 = vmatprep.subr.mxu0 0.0
    %432 = vmatpush1.msra.mxu0 0.0
    %433 = vmatprep.subr.mxu0 0.0
    %434 = vmatpush1.msra.mxu0 0.0
    %435 = vmatprep.subr.mxu0 0.0
    %436 = vmatpush1.msra.mxu0 0.0
    %437 = vmatprep.subr.mxu0 0.0
    %438 = vmatpush1.msra.mxu0 0.0
    %439 = vmatprep.mubr.f32.mxu0 0.0
    %440 = vmatmul.mubr.f32.gmra.mrb[0].mxu0 %v367
    %v441 = vpop.f32.mrb[0].mxu0
    %v442 = vadd.f32 %v148, %v441
    %v443 = vpop.f32.mrb[0].mxu0
    %444 = vmatprep.mubr.f32.mxu0 0.0
    %445 = vmatmul.mubr.f32.gmra.mrb[0].mxu0 %v370
    %v446 = vpop.f32.mrb[0].mxu0
    %v447 = vadd.f32 %v153, %v446
    %v448 = vpop.f32.mrb[0].mxu0
    %449 = vmatprep.mubr.f32.mxu0 0.0
    %450 = vmatmul.mubr.f32.gmra.mrb[0].mxu0 %v373
    %v451 = vpop.f32.mrb[0].mxu0
    %v452 = vadd.f32 %v158, %v451
    %v453 = vpop.f32.mrb[0].mxu0
    %454 = vdwg.mxu0
    %v456 = vsel %vm71, %v161, 0
    %v459 = vsel %vm71, %v162, 0
    %v462 = vsel %vm71, %v163, 0
    %464 = vmatprep.subr.mxu0 0.0
    %465 = vmatpush1.msra.mxu0 %v165
    %466 = vmatprep.subr.mxu0 0.0
    %467 = vmatpush1.msra.mxu0 %v166
    %468 = vmatprep.subr.mxu0 0.0
    %469 = vmatpush1.msra.mxu0 %v167
    %470 = vmatprep.subr.mxu0 0.0
    %471 = vmatpush1.msra.mxu0 %v168
    %472 = vmatprep.subr.mxu0 0.0
    %473 = vmatpush1.msra.mxu0 %v169
    %474 = vmatprep.subr.mxu0 0.0
    %475 = vmatpush1.msra.mxu0 0.0
    %476 = vmatprep.subr.mxu0 0.0
    %477 = vmatpush1.msra.mxu0 0.0
    %478 = vmatprep.subr.mxu0 0.0
    %479 = vmatpush1.msra.mxu0 0.0
    %480 = vmatprep.subr.mxu0 0.0
    %481 = vmatpush1.msra.mxu0 0.0
    %482 = vmatprep.subr.mxu0 0.0
    %483 = vmatpush1.msra.mxu0 0.0
    %484 = vmatprep.subr.mxu0 0.0
    %485 = vmatpush1.msra.mxu0 0.0
    %486 = vmatprep.subr.mxu0 0.0
    %487 = vmatpush1.msra.mxu0 0.0
    %488 = vmatprep.subr.mxu0 0.0
    %489 = vmatpush1.msra.mxu0 0.0
    %490 = vmatprep.subr.mxu0 0.0
    %491 = vmatpush1.msra.mxu0 0.0
    %492 = vmatprep.subr.mxu0 0.0
    %493 = vmatpush1.msra.mxu0 0.0
    %494 = vmatprep.subr.mxu0 0.0
    %495 = vmatpush1.msra.mxu0 0.0
    %496 = vmatprep.subr.mxu0 0.0
    %497 = vmatpush1.msra.mxu0 0.0
    %498 = vmatprep.subr.mxu0 0.0
    %499 = vmatpush1.msra.mxu0 0.0
    %500 = vmatprep.subr.mxu0 0.0
    %501 = vmatpush1.msra.mxu0 0.0
    %502 = vmatprep.subr.mxu0 0.0
    %503 = vmatpush1.msra.mxu0 0.0
    %504 = vmatprep.subr.mxu0 0.0
    %505 = vmatpush1.msra.mxu0 0.0
    %506 = vmatprep.subr.mxu0 0.0
    %507 = vmatpush1.msra.mxu0 0.0
    %508 = vmatprep.subr.mxu0 0.0
    %509 = vmatpush1.msra.mxu0 0.0
    %510 = vmatprep.subr.mxu0 0.0
    %511 = vmatpush1.msra.mxu0 0.0
    %512 = vmatprep.subr.mxu0 0.0
    %513 = vmatpush1.msra.mxu0 0.0
    %514 = vmatprep.subr.mxu0 0.0
    %515 = vmatpush1.msra.mxu0 0.0
    %516 = vmatprep.subr.mxu0 0.0
    %517 = vmatpush1.msra.mxu0 0.0
    %518 = vmatprep.subr.mxu0 0.0
    %519 = vmatpush1.msra.mxu0 0.0
    %520 = vmatprep.subr.mxu0 0.0
    %521 = vmatpush1.msra.mxu0 0.0
    %522 = vmatprep.subr.mxu0 0.0
    %523 = vmatpush1.msra.mxu0 0.0
    %524 = vmatprep.subr.mxu0 0.0
    %525 = vmatpush1.msra.mxu0 0.0
    %526 = vmatprep.subr.mxu0 0.0
    %527 = vmatpush1.msra.mxu0 0.0
    %528 = vmatprep.mubr.f32.mxu0 0.0
    %529 = vmatmul.mubr.f32.gmra.mrb[0].mxu0 %v456
    %v530 = vpop.f32.mrb[0].mxu0
    %v531 = vadd.f32 %v255, %v530
    %v532 = vpop.f32.mrb[0].mxu0
    %533 = vmatprep.mubr.f32.mxu0 0.0
    %534 = vmatmul.mubr.f32.gmra.mrb[0].mxu0 %v459
    %v535 = vpop.f32.mrb[0].mxu0
    %v536 = vadd.f32 %v260, %v535
    %v537 = vpop.f32.mrb[0].mxu0
    %538 = vmatprep.mubr.f32.mxu0 0.0
    %539 = vmatmul.mubr.f32.gmra.mrb[0].mxu0 %v462
    %v540 = vpop.f32.mrb[0].mxu0
    %v541 = vadd.f32 %v265, %v540
    %v542 = vpop.f32.mrb[0].mxu0
    %543 = vdwg.mxu0
    %v544 = vadd.f32 %v442, %v531
    %v545 = vadd.f32 %v447, %v536
    %v546 = vadd.f32 %v452, %v541
    %v547 = vadd.f32 %v544, %v353
    %v548 = vadd.f32 %v545, %v358
    %v549 = vadd.f32 %v546, %v363
    %v550 = vld [vmem:[%s2] sm:$0x1]
    %v552 = vlaneseq
    %v553 = vshrl.u32 %v552, 7
    %v554 = vsub.s32 0, %v553
    %v555 = vrot.slane %v550, %v554
    %v557 = vadd.f32 %v547, %v555
    %v558 = vadd.f32 %v548, %v555
    %v559 = vadd.f32 %v549, %v555
    %v560 = vmax.f32 %v557, 0.0
    %v561 = vmax.f32 %v558, 0.0
    %v562 = vmax.f32 %v559, 0.0
    %v563 = vld [vmem:[%s3] sm:$0xff]
    %v564 = vld [vmem:[%s3 + $0x8] sm:$0xf]
    %vm565 = vcmask 195584
    %v567 = vsel %vm565, %v563, 0
    %v570 = vsel %vm565, %v564, 0
    %572 = vmatprep.subr.mxu0 0.0
    %573 = vmatpush1.msra.mxu0 %v560
    %574 = vmatprep.subr.mxu0 0.0
    %575 = vmatpush1.msra.mxu0 %v561
    %576 = vmatprep.subr.mxu0 0.0
    %577 = vmatpush1.msra.mxu0 %v562
    %578 = vmatprep.subr.mxu0 0.0
    %579 = vmatpush1.msra.mxu0 0.0
    %580 = vmatprep.subr.mxu0 0.0
    %581 = vmatpush1.msra.mxu0 0.0
    %582 = vmatprep.subr.mxu0 0.0
    %583 = vmatpush1.msra.mxu0 0.0
    %584 = vmatprep.subr.mxu0 0.0
    %585 = vmatpush1.msra.mxu0 0.0
    %586 = vmatprep.subr.mxu0 0.0
    %587 = vmatpush1.msra.mxu0 0.0
    %588 = vmatprep.subr.mxu0 0.0
    %589 = vmatpush1.msra.mxu0 0.0
    %590 = vmatprep.subr.mxu0 0.0
    %591 = vmatpush1.msra.mxu0 0.0
    %592 = vmatprep.subr.mxu0 0.0
    %593 = vmatpush1.msra.mxu0 0.0
    %594 = vmatprep.subr.mxu0 0.0
    %595 = vmatpush1.msra.mxu0 0.0
    %596 = vmatprep.subr.mxu0 0.0
    %597 = vmatpush1.msra.mxu0 0.0
    %598 = vmatprep.subr.mxu0 0.0
    %599 = vmatpush1.msra.mxu0 0.0
    %600 = vmatprep.subr.mxu0 0.0
    %601 = vmatpush1.msra.mxu0 0.0
    %602 = vmatprep.subr.mxu0 0.0
    %603 = vmatpush1.msra.mxu0 0.0
    %604 = vmatprep.subr.mxu0 0.0
    %605 = vmatpush1.msra.mxu0 0.0
    %606 = vmatprep.subr.mxu0 0.0
    %607 = vmatpush1.msra.mxu0 0.0
    %608 = vmatprep.subr.mxu0 0.0
    %609 = vmatpush1.msra.mxu0 0.0
    %610 = vmatprep.subr.mxu0 0.0
    %611 = vmatpush1.msra.mxu0 0.0
    %612 = vmatprep.subr.mxu0 0.0
    %613 = vmatpush1.msra.mxu0 0.0
    %614 = vmatprep.subr.mxu0 0.0
    %615 = vmatpush1.msra.mxu0 0.0
    %616 = vmatprep.subr.mxu0 0.0
    %617 = vmatpush1.msra.mxu0 0.0
    %618 = vmatprep.subr.mxu0 0.0
    %619 = vmatpush1.msra.mxu0 0.0
    %620 = vmatprep.subr.mxu0 0.0
    %621 = vmatpush1.msra.mxu0 0.0
    %622 = vmatprep.subr.mxu0 0.0
    %623 = vmatpush1.msra.mxu0 0.0
    %624 = vmatprep.subr.mxu0 0.0
    %625 = vmatpush1.msra.mxu0 0.0
    %626 = vmatprep.subr.mxu0 0.0
    %627 = vmatpush1.msra.mxu0 0.0
    %628 = vmatprep.subr.mxu0 0.0
    %629 = vmatpush1.msra.mxu0 0.0
    %630 = vmatprep.subr.mxu0 0.0
    %631 = vmatpush1.msra.mxu0 0.0
    %632 = vmatprep.subr.mxu0 0.0
    %633 = vmatpush1.msra.mxu0 0.0
    %634 = vmatprep.subr.mxu0 0.0
    %635 = vmatpush1.msra.mxu0 0.0
    %636 = vmatprep.mubr.f32.mxu0 0.0
    %637 = vmatmul.mubr.f32.gmra.mrb[0].mxu0 %v567
    %v638 = vpop.f32.mrb[0].mxu0
    %v639 = vadd.f32 0.0, %v638
    %v640 = vpop.f32.mrb[0].mxu0
    %641 = vmatprep.mubr.f32.mxu0 0.0
    %642 = vmatmul.mubr.f32.gmra.mrb[0].mxu0 %v570
    %v643 = vpop.f32.mrb[0].mxu0
    %v644 = vadd.f32 0.0, %v643
    %v645 = vpop.f32.mrb[0].mxu0
    %646 = vdwg.mxu0
    %s647 = scalar_lea.vmem %s3, 16
    %v648 = vld [vmem:[%s647] sm:$0xff]
    %v649 = vld [vmem:[%s647 + $0x8] sm:$0xf]
    %v651 = vsel %vm565, %v648, 0
    %v654 = vsel %vm565, %v649, 0
    %656 = vmatprep.subr.mxu0 0.0
    %657 = vmatpush1.msra.mxu0 %v560
    %658 = vmatprep.subr.mxu0 0.0
    %659 = vmatpush1.msra.mxu0 %v561
    %660 = vmatprep.subr.mxu0 0.0
    %661 = vmatpush1.msra.mxu0 %v562
    %662 = vmatprep.subr.mxu0 0.0
    %663 = vmatpush1.msra.mxu0 0.0
    %664 = vmatprep.subr.mxu0 0.0
    %665 = vmatpush1.msra.mxu0 0.0
    %666 = vmatprep.subr.mxu0 0.0
    %667 = vmatpush1.msra.mxu0 0.0
    %668 = vmatprep.subr.mxu0 0.0
    %669 = vmatpush1.msra.mxu0 0.0
    %670 = vmatprep.subr.mxu0 0.0
    %671 = vmatpush1.msra.mxu0 0.0
    %672 = vmatprep.subr.mxu0 0.0
    %673 = vmatpush1.msra.mxu0 0.0
    %674 = vmatprep.subr.mxu0 0.0
    %675 = vmatpush1.msra.mxu0 0.0
    %676 = vmatprep.subr.mxu0 0.0
    %677 = vmatpush1.msra.mxu0 0.0
    %678 = vmatprep.subr.mxu0 0.0
    %679 = vmatpush1.msra.mxu0 0.0
    %680 = vmatprep.subr.mxu0 0.0
    %681 = vmatpush1.msra.mxu0 0.0
    %682 = vmatprep.subr.mxu0 0.0
    %683 = vmatpush1.msra.mxu0 0.0
    %684 = vmatprep.subr.mxu0 0.0
    %685 = vmatpush1.msra.mxu0 0.0
    %686 = vmatprep.subr.mxu0 0.0
    %687 = vmatpush1.msra.mxu0 0.0
    %688 = vmatprep.subr.mxu0 0.0
    %689 = vmatpush1.msra.mxu0 0.0
    %690 = vmatprep.subr.mxu0 0.0
    %691 = vmatpush1.msra.mxu0 0.0
    %692 = vmatprep.subr.mxu0 0.0
    %693 = vmatpush1.msra.mxu0 0.0
    %694 = vmatprep.subr.mxu0 0.0
    %695 = vmatpush1.msra.mxu0 0.0
    %696 = vmatprep.subr.mxu0 0.0
    %697 = vmatpush1.msra.mxu0 0.0
    %698 = vmatprep.subr.mxu0 0.0
    %699 = vmatpush1.msra.mxu0 0.0
    %700 = vmatprep.subr.mxu0 0.0
    %701 = vmatpush1.msra.mxu0 0.0
    %702 = vmatprep.subr.mxu0 0.0
    %703 = vmatpush1.msra.mxu0 0.0
    %704 = vmatprep.subr.mxu0 0.0
    %705 = vmatpush1.msra.mxu0 0.0
    %706 = vmatprep.subr.mxu0 0.0
    %707 = vmatpush1.msra.mxu0 0.0
    %708 = vmatprep.subr.mxu0 0.0
    %709 = vmatpush1.msra.mxu0 0.0
    %710 = vmatprep.subr.mxu0 0.0
    %711 = vmatpush1.msra.mxu0 0.0
    %712 = vmatprep.subr.mxu0 0.0
    %713 = vmatpush1.msra.mxu0 0.0
    %714 = vmatprep.subr.mxu0 0.0
    %715 = vmatpush1.msra.mxu0 0.0
    %716 = vmatprep.subr.mxu0 0.0
    %717 = vmatpush1.msra.mxu0 0.0
    %718 = vmatprep.subr.mxu0 0.0
    %719 = vmatpush1.msra.mxu0 0.0
    %720 = vmatprep.mubr.f32.mxu0 0.0
    %721 = vmatmul.mubr.f32.gmra.mrb[0].mxu0 %v651
    %v722 = vpop.f32.mrb[0].mxu0
    %v723 = vadd.f32 0.0, %v722
    %v724 = vpop.f32.mrb[0].mxu0
    %725 = vmatprep.mubr.f32.mxu0 0.0
    %726 = vmatmul.mubr.f32.gmra.mrb[0].mxu0 %v654
    %v727 = vpop.f32.mrb[0].mxu0
    %v728 = vadd.f32 0.0, %v727
    %v729 = vpop.f32.mrb[0].mxu0
    %730 = vdwg.mxu0
    %v731 = vmax.f32 %v639, %v723
    %v732 = vmax.f32 %v644, %v728
    %v733 = vld [vmem:[%s4] sm:$0xff]
    %v734 = vld [vmem:[%s4 + $0x8] sm:$0xff]
    %v735 = vld [vmem:[%s4 + $0x10] sm:$0xff]
    %v736 = vld [vmem:[%s4 + $0x18] sm:$0xff]
    %v737 = vld [vmem:[%s4 + $0x20] sm:$0xff]
    %v738 = vld [vmem:[%s4 + $0x28] sm:$0xff]
    %v739 = vld [vmem:[%s4 + $0x30] sm:$0xff]
    %v740 = vld [vmem:[%s4 + $0x38] sm:$0xff]
    %v741 = vld [vmem:[%s4 + $0x40] sm:$0xff]
    %vm742 = vcmask 588800
    %v744 = vsel %vm742, %v731, 0
    %v747 = vsel %vm742, %v732, 0
    %749 = vmatprep.subr.mxu0 0.0
    %750 = vmatpush1.msra.mxu0 %v733
    %751 = vmatprep.subr.mxu0 0.0
    %752 = vmatpush1.msra.mxu0 %v734
    %753 = vmatprep.subr.mxu0 0.0
    %754 = vmatpush1.msra.mxu0 %v735
    %755 = vmatprep.subr.mxu0 0.0
    %756 = vmatpush1.msra.mxu0 %v736
    %757 = vmatprep.subr.mxu0 0.0
    %758 = vmatpush1.msra.mxu0 %v737
    %759 = vmatprep.subr.mxu0 0.0
    %760 = vmatpush1.msra.mxu0 %v738
    %761 = vmatprep.subr.mxu0 0.0
    %762 = vmatpush1.msra.mxu0 %v739
    %763 = vmatprep.subr.mxu0 0.0
    %764 = vmatpush1.msra.mxu0 %v740
    %765 = vmatprep.subr.mxu0 0.0
    %766 = vmatpush1.msra.mxu0 %v741
    %767 = vmatprep.subr.mxu0 0.0
    %768 = vmatpush1.msra.mxu0 0.0
    %769 = vmatprep.subr.mxu0 0.0
    %770 = vmatpush1.msra.mxu0 0.0
    %771 = vmatprep.subr.mxu0 0.0
    %772 = vmatpush1.msra.mxu0 0.0
    %773 = vmatprep.subr.mxu0 0.0
    %774 = vmatpush1.msra.mxu0 0.0
    %775 = vmatprep.subr.mxu0 0.0
    %776 = vmatpush1.msra.mxu0 0.0
    %777 = vmatprep.subr.mxu0 0.0
    %778 = vmatpush1.msra.mxu0 0.0
    %779 = vmatprep.subr.mxu0 0.0
    %780 = vmatpush1.msra.mxu0 0.0
    %781 = vmatprep.subr.mxu0 0.0
    %782 = vmatpush1.msra.mxu0 0.0
    %783 = vmatprep.subr.mxu0 0.0
    %784 = vmatpush1.msra.mxu0 0.0
    %785 = vmatprep.subr.mxu0 0.0
    %786 = vmatpush1.msra.mxu0 0.0
    %787 = vmatprep.subr.mxu0 0.0
    %788 = vmatpush1.msra.mxu0 0.0
    %789 = vmatprep.subr.mxu0 0.0
    %790 = vmatpush1.msra.mxu0 0.0
    %791 = vmatprep.subr.mxu0 0.0
    %792 = vmatpush1.msra.mxu0 0.0
    %793 = vmatprep.subr.mxu0 0.0
    %794 = vmatpush1.msra.mxu0 0.0
    %795 = vmatprep.subr.mxu0 0.0
    %796 = vmatpush1.msra.mxu0 0.0
    %797 = vmatprep.subr.mxu0 0.0
    %798 = vmatpush1.msra.mxu0 0.0
    %799 = vmatprep.subr.mxu0 0.0
    %800 = vmatpush1.msra.mxu0 0.0
    %801 = vmatprep.subr.mxu0 0.0
    %802 = vmatpush1.msra.mxu0 0.0
    %803 = vmatprep.subr.mxu0 0.0
    %804 = vmatpush1.msra.mxu0 0.0
    %805 = vmatprep.subr.mxu0 0.0
    %806 = vmatpush1.msra.mxu0 0.0
    %807 = vmatprep.subr.mxu0 0.0
    %808 = vmatpush1.msra.mxu0 0.0
    %809 = vmatprep.subr.mxu0 0.0
    %810 = vmatpush1.msra.mxu0 0.0
    %811 = vmatprep.subr.mxu0 0.0
    %812 = vmatpush1.msra.mxu0 0.0
    %813 = vmatprep.mubr.f32.mxu0 0.0
    %814 = vmatmul.mubr.f32.gmra.mrb[0].mxu0 %v744
    %v815 = vpop.f32.mrb[0].mxu0
    %v816 = vadd.f32 0.0, %v815
    %v817 = vpop.f32.mrb[0].mxu0
    %818 = vmatprep.mubr.f32.mxu0 0.0
    %819 = vmatmul.mubr.f32.gmra.mrb[0].mxu0 %v747
    %v820 = vpop.f32.mrb[0].mxu0
    %v821 = vadd.f32 0.0, %v820
    %v822 = vpop.f32.mrb[0].mxu0
    %823 = vdwg.mxu0
    %s824 = scalar_lea.vmem %s4, 72
    %v825 = vld [vmem:[%s824] sm:$0xff]
    %v826 = vld [vmem:[%s824 + $0x8] sm:$0xff]
    %v827 = vld [vmem:[%s824 + $0x10] sm:$0xff]
    %v828 = vld [vmem:[%s824 + $0x18] sm:$0xff]
    %v829 = vld [vmem:[%s824 + $0x20] sm:$0xff]
    %v830 = vld [vmem:[%s824 + $0x28] sm:$0xff]
    %v831 = vld [vmem:[%s824 + $0x30] sm:$0xff]
    %v832 = vld [vmem:[%s824 + $0x38] sm:$0xff]
    %v833 = vld [vmem:[%s824 + $0x40] sm:$0xff]
    %834 = vmatprep.subr.mxu0 0.0
    %835 = vmatpush1.msra.mxu0 %v825
    %836 = vmatprep.subr.mxu0 0.0
    %837 = vmatpush1.msra.mxu0 %v826
    %838 = vmatprep.subr.mxu0 0.0
    %839 = vmatpush1.msra.mxu0 %v827
    %840 = vmatprep.subr.mxu0 0.0
    %841 = vmatpush1.msra.mxu0 %v828
    %842 = vmatprep.subr.mxu0 0.0
    %843 = vmatpush1.msra.mxu0 %v829
    %844 = vmatprep.subr.mxu0 0.0
    %845 = vmatpush1.msra.mxu0 %v830
    %846 = vmatprep.subr.mxu0 0.0
    %847 = vmatpush1.msra.mxu0 %v831
    %848 = vmatprep.subr.mxu0 0.0
    %849 = vmatpush1.msra.mxu0 %v832
    %850 = vmatprep.subr.mxu0 0.0
    %851 = vmatpush1.msra.mxu0 %v833
    %852 = vmatprep.subr.mxu0 0.0
    %853 = vmatpush1.msra.mxu0 0.0
    %854 = vmatprep.subr.mxu0 0.0
    %855 = vmatpush1.msra.mxu0 0.0
    %856 = vmatprep.subr.mxu0 0.0
    %857 = vmatpush1.msra.mxu0 0.0
    %858 = vmatprep.subr.mxu0 0.0
    %859 = vmatpush1.msra.mxu0 0.0
    %860 = vmatprep.subr.mxu0 0.0
    %861 = vmatpush1.msra.mxu0 0.0
    %862 = vmatprep.subr.mxu0 0.0
    %863 = vmatpush1.msra.mxu0 0.0
    %864 = vmatprep.subr.mxu0 0.0
    %865 = vmatpush1.msra.mxu0 0.0
    %866 = vmatprep.subr.mxu0 0.0
    %867 = vmatpush1.msra.mxu0 0.0
    %868 = vmatprep.subr.mxu0 0.0
    %869 = vmatpush1.msra.mxu0 0.0
    %870 = vmatprep.subr.mxu0 0.0
    %871 = vmatpush1.msra.mxu0 0.0
    %872 = vmatprep.subr.mxu0 0.0
    %873 = vmatpush1.msra.mxu0 0.0
    %874 = vmatprep.subr.mxu0 0.0
    %875 = vmatpush1.msra.mxu0 0.0
    %876 = vmatprep.subr.mxu0 0.0
    %877 = vmatpush1.msra.mxu0 0.0
    %878 = vmatprep.subr.mxu0 0.0
    %879 = vmatpush1.msra.mxu0 0.0
    %880 = vmatprep.subr.mxu0 0.0
    %881 = vmatpush1.msra.mxu0 0.0
    %882 = vmatprep.subr.mxu0 0.0
    %883 = vmatpush1.msra.mxu0 0.0
    %884 = vmatprep.subr.mxu0 0.0
    %885 = vmatpush1.msra.mxu0 0.0
    %886 = vmatprep.subr.mxu0 0.0
    %887 = vmatpush1.msra.mxu0 0.0
    %888 = vmatprep.subr.mxu0 0.0
    %889 = vmatpush1.msra.mxu0 0.0
    %890 = vmatprep.subr.mxu0 0.0
    %891 = vmatpush1.msra.mxu0 0.0
    %892 = vmatprep.subr.mxu0 0.0
    %893 = vmatpush1.msra.mxu0 0.0
    %894 = vmatprep.subr.mxu0 0.0
    %895 = vmatpush1.msra.mxu0 0.0
    %896 = vmatprep.subr.mxu0 0.0
    %897 = vmatpush1.msra.mxu0 0.0
    %898 = vmatprep.mubr.f32.mxu0 0.0
    %899 = vmatmul.mubr.f32.gmra.mrb[0].mxu0 %v744
    %v900 = vpop.f32.mrb[0].mxu0
    %v901 = vadd.f32 0.0, %v900
    %v902 = vpop.f32.mrb[0].mxu0
    %903 = vmatprep.mubr.f32.mxu0 0.0
    %904 = vmatmul.mubr.f32.gmra.mrb[0].mxu0 %v747
    %v905 = vpop.f32.mrb[0].mxu0
    %v906 = vadd.f32 0.0, %v905
    %v907 = vpop.f32.mrb[0].mxu0
    %908 = vdwg.mxu0
    %v909 = vmax.f32 %v816, %v901
    %v910 = vmax.f32 %v821, %v906
    %v911 = vld [vmem:[%s5] sm:$0xff]
    %v912 = vld [vmem:[%s5 + $0x8] sm:$0xff]
    %v913 = vld [vmem:[%s5 + $0x10] sm:$0xff]
    %v914 = vld [vmem:[%s5 + $0x18] sm:$0xff]
    %v915 = vld [vmem:[%s5 + $0x20] sm:$0xff]
    %v916 = vld [vmem:[%s5 + $0x28] sm:$0xff]
    %v917 = vld [vmem:[%s5 + $0x30] sm:$0xff]
    %v918 = vld [vmem:[%s5 + $0x38] sm:$0xff]
    %v919 = vld [vmem:[%s5 + $0x40] sm:$0xf]
    %v920 = vld [vmem:[%s5 + $0x48] sm:$0xf]
    %s921 = scalar_lea.vmem %s5, 80
    %v922 = vld [vmem:[%s921] sm:$0xff]
    %v923 = vld [vmem:[%s921 + $0x8] sm:$0xff]
    %v924 = vld [vmem:[%s921 + $0x10] sm:$0xff]
    %v925 = vld [vmem:[%s921 + $0x18] sm:$0xff]
    %v926 = vld [vmem:[%s921 + $0x20] sm:$0xff]
    %v927 = vld [vmem:[%s921 + $0x28] sm:$0xff]
    %v928 = vld [vmem:[%s921 + $0x30] sm:$0xff]
    %v929 = vld [vmem:[%s921 + $0x38] sm:$0xff]
    %v930 = vld [vmem:[%s921 + $0x40] sm:$0xf]
    %v931 = vld [vmem:[%s921 + $0x48] sm:$0xf]
    %vm934 = vcmask 1046528
    %v935 = vrot.slane %v909, 1
    %v936 = vrot.slane %v910, 1
    %v937 = vsel %vm934, %v935, %v936
    %vm938 = vcmask 293888
    %v939 = vsel %vm938, %v937, 0
    %vm941 = vcmask 1043456
    %v943 = vsel %vm941, %v930, 0
    %v946 = vsel %vm941, %v931, 0
    %948 = vmatprep.subr.mxu0 %v923
    %949 = vmatpush1.msra.mxu0 %v922
    %950 = vmatprep.subr.mxu0 %v925
    %951 = vmatpush1.msra.mxu0 %v924
    %952 = vmatprep.subr.mxu0 %v927
    %953 = vmatpush1.msra.mxu0 %v926
    %954 = vmatprep.subr.mxu0 %v929
    %955 = vmatpush1.msra.mxu0 %v928
    %956 = vmatprep.subr.mxu0 %v946
    %957 = vmatpush1.msra.mxu0 %v943
    %958 = vmatprep.subr.mxu0 0.0
    %959 = vmatpush1.msra.mxu0 0.0
    %960 = vmatprep.subr.mxu0 0.0
    %961 = vmatpush1.msra.mxu0 0.0
    %962 = vmatprep.subr.mxu0 0.0
    %963 = vmatpush1.msra.mxu0 0.0
    %964 = vmatprep.subr.mxu0 0.0
    %965 = vmatpush1.msra.mxu0 0.0
    %966 = vmatprep.subr.mxu0 0.0
    %967 = vmatpush1.msra.mxu0 0.0
    %968 = vmatprep.subr.mxu0 0.0
    %969 = vmatpush1.msra.mxu0 0.0
    %970 = vmatprep.subr.mxu0 0.0
    %971 = vmatpush1.msra.mxu0 0.0
    %972 = vmatprep.subr.mxu0 0.0
    %973 = vmatpush1.msra.mxu0 0.0
    %974 = vmatprep.subr.mxu0 0.0
    %975 = vmatpush1.msra.mxu0 0.0
    %976 = vmatprep.subr.mxu0 0.0
    %977 = vmatpush1.msra.mxu0 0.0
    %978 = vmatprep.subr.mxu0 0.0
    %979 = vmatpush1.msra.mxu0 0.0
    %980 = vmatprep.subr.mxu0 0.0
    %981 = vmatpush1.msra.mxu0 0.0
    %982 = vmatprep.subr.mxu0 0.0
    %983 = vmatpush1.msra.mxu0 0.0
    %984 = vmatprep.subr.mxu0 0.0
    %985 = vmatpush1.msra.mxu0 0.0
    %986 = vmatprep.subr.mxu0 0.0
    %987 = vmatpush1.msra.mxu0 0.0
    %988 = vmatprep.subr.mxu0 0.0
    %989 = vmatpush1.msra.mxu0 0.0
    %990 = vmatprep.subr.mxu0 0.0
    %991 = vmatpush1.msra.mxu0 0.0
    %992 = vmatprep.subr.mxu0 0.0
    %993 = vmatpush1.msra.mxu0 0.0
    %994 = vmatprep.subr.mxu0 0.0
    %995 = vmatpush1.msra.mxu0 0.0
    %996 = vmatprep.subr.mxu0 0.0
    %997 = vmatpush1.msra.mxu0 0.0
    %998 = vmatprep.subr.mxu0 0.0
    %999 = vmatpush1.msra.mxu0 0.0
    %1000 = vmatprep.subr.mxu0 0.0
    %1001 = vmatpush1.msra.mxu0 0.0
    %1002 = vmatprep.subr.mxu0 0.0
    %1003 = vmatpush1.msra.mxu0 0.0
    %1004 = vmatprep.subr.mxu0 0.0
    %1005 = vmatpush1.msra.mxu0 0.0
    %1006 = vmatprep.subr.mxu0 0.0
    %1007 = vmatpush1.msra.mxu0 0.0
    %1008 = vmatprep.subr.mxu0 0.0
    %1009 = vmatpush1.msra.mxu0 0.0
    %1010 = vmatprep.subr.mxu0 0.0
    %1011 = vmatpush1.msra.mxu0 0.0
    %1012 = vmatprep.mubr.f32.mxu0 0.0
    %1013 = vmatmul.mubr.f32.gmra.mrb[0].mxu0 %v939
    %v1014 = vpop.f32.mrb[0].mxu0
    %v1015 = vadd.f32 0.0, %v1014
    %v1016 = vpop.f32.mrb[0].mxu0
    %v1017 = vadd.f32 0.0, %v1016
    %1018 = vdwg.mxu0
    %s1019 = scalar_lea.vmem %s5, 160
    %v1020 = vld [vmem:[%s1019] sm:$0xff]
    %v1021 = vld [vmem:[%s1019 + $0x8] sm:$0xff]
    %v1022 = vld [vmem:[%s1019 + $0x10] sm:$0xff]
    %v1023 = vld [vmem:[%s1019 + $0x18] sm:$0xff]
    %v1024 = vld [vmem:[%s1019 + $0x20] sm:$0xff]
    %v1025 = vld [vmem:[%s1019 + $0x28] sm:$0xff]
    %v1026 = vld [vmem:[%s1019 + $0x30] sm:$0xff]
    %v1027 = vld [vmem:[%s1019 + $0x38] sm:$0xff]
    %v1028 = vld [vmem:[%s1019 + $0x40] sm:$0xf]
    %v1029 = vld [vmem:[%s1019 + $0x48] sm:$0xf]
    %s1030 = scalar_lea.vmem %s5, 240
    %v1031 = vld [vmem:[%s1030] sm:$0xff]
    %v1032 = vld [vmem:[%s1030 + $0x8] sm:$0xff]
    %v1033 = vld [vmem:[%s1030 + $0x10] sm:$0xff]
    %v1034 = vld [vmem:[%s1030 + $0x18] sm:$0xff]
    %v1035 = vld [vmem:[%s1030 + $0x20] sm:$0xff]
    %v1036 = vld [vmem:[%s1030 + $0x28] sm:$0xff]
    %v1037 = vld [vmem:[%s1030 + $0x30] sm:$0xff]
    %v1038 = vld [vmem:[%s1030 + $0x38] sm:$0xff]
    %v1039 = vld [vmem:[%s1030 + $0x40] sm:$0xf]
    %v1040 = vld [vmem:[%s1030 + $0x48] sm:$0xf]
    %vm1041 = vcmask 1044480
    %v1042 = vrot.slane %v909, 3
    %v1043 = vrot.slane %v910, 3
    %v1044 = vsel %vm1041, %v1042, %v1043
    %v1045 = vsel %vm938, %v1044, 0
    %v1048 = vsel %vm941, %v1039, 0
    %v1051 = vsel %vm941, %v1040, 0
    %1053 = vmatprep.subr.mxu0 %v1032
    %1054 = vmatpush1.msra.mxu0 %v1031
    %1055 = vmatprep.subr.mxu0 %v1034
    %1056 = vmatpush1.msra.mxu0 %v1033
    %1057 = vmatprep.subr.mxu0 %v1036
    %1058 = vmatpush1.msra.mxu0 %v1035
    %1059 = vmatprep.subr.mxu0 %v1038
    %1060 = vmatpush1.msra.mxu0 %v1037
    %1061 = vmatprep.subr.mxu0 %v1051
    %1062 = vmatpush1.msra.mxu0 %v1048
    %1063 = vmatprep.subr.mxu0 0.0
    %1064 = vmatpush1.msra.mxu0 0.0
    %1065 = vmatprep.subr.mxu0 0.0
    %1066 = vmatpush1.msra.mxu0 0.0
    %1067 = vmatprep.subr.mxu0 0.0
    %1068 = vmatpush1.msra.mxu0 0.0
    %1069 = vmatprep.subr.mxu0 0.0
    %1070 = vmatpush1.msra.mxu0 0.0
    %1071 = vmatprep.subr.mxu0 0.0
    %1072 = vmatpush1.msra.mxu0 0.0
    %1073 = vmatprep.subr.mxu0 0.0
    %1074 = vmatpush1.msra.mxu0 0.0
    %1075 = vmatprep.subr.mxu0 0.0
    %1076 = vmatpush1.msra.mxu0 0.0
    %1077 = vmatprep.subr.mxu0 0.0
    %1078 = vmatpush1.msra.mxu0 0.0
    %1079 = vmatprep.subr.mxu0 0.0
    %1080 = vmatpush1.msra.mxu0 0.0
    %1081 = vmatprep.subr.mxu0 0.0
    %1082 = vmatpush1.msra.mxu0 0.0
    %1083 = vmatprep.subr.mxu0 0.0
    %1084 = vmatpush1.msra.mxu0 0.0
    %1085 = vmatprep.subr.mxu0 0.0
    %1086 = vmatpush1.msra.mxu0 0.0
    %1087 = vmatprep.subr.mxu0 0.0
    %1088 = vmatpush1.msra.mxu0 0.0
    %1089 = vmatprep.subr.mxu0 0.0
    %1090 = vmatpush1.msra.mxu0 0.0
    %1091 = vmatprep.subr.mxu0 0.0
    %1092 = vmatpush1.msra.mxu0 0.0
    %1093 = vmatprep.subr.mxu0 0.0
    %1094 = vmatpush1.msra.mxu0 0.0
    %1095 = vmatprep.subr.mxu0 0.0
    %1096 = vmatpush1.msra.mxu0 0.0
    %1097 = vmatprep.subr.mxu0 0.0
    %1098 = vmatpush1.msra.mxu0 0.0
    %1099 = vmatprep.subr.mxu0 0.0
    %1100 = vmatpush1.msra.mxu0 0.0
    %1101 = vmatprep.subr.mxu0 0.0
    %1102 = vmatpush1.msra.mxu0 0.0
    %1103 = vmatprep.subr.mxu0 0.0
    %1104 = vmatpush1.msra.mxu0 0.0
    %1105 = vmatprep.subr.mxu0 0.0
    %1106 = vmatpush1.msra.mxu0 0.0
    %1107 = vmatprep.subr.mxu0 0.0
    %1108 = vmatpush1.msra.mxu0 0.0
    %1109 = vmatprep.subr.mxu0 0.0
    %1110 = vmatpush1.msra.mxu0 0.0
    %1111 = vmatprep.subr.mxu0 0.0
    %1112 = vmatpush1.msra.mxu0 0.0
    %1113 = vmatprep.subr.mxu0 0.0
    %1114 = vmatpush1.msra.mxu0 0.0
    %1115 = vmatprep.subr.mxu0 0.0
    %1116 = vmatpush1.msra.mxu0 0.0
    %1117 = vmatprep.mubr.f32.mxu0 0.0
    %1118 = vmatmul.mubr.f32.gmra.mrb[0].mxu0 %v1045
    %v1119 = vpop.f32.mrb[0].mxu0
    %v1120 = vadd.f32 0.0, %v1119
    %v1121 = vpop.f32.mrb[0].mxu0
    %v1122 = vadd.f32 0.0, %v1121
    %1123 = vdwg.mxu0
    %s1124 = scalar_lea.vmem %s5, 320
    %v1125 = vld [vmem:[%s1124] sm:$0xff]
    %v1126 = vld [vmem:[%s1124 + $0x8] sm:$0xff]
    %v1127 = vld [vmem:[%s1124 + $0x10] sm:$0xff]
    %v1128 = vld [vmem:[%s1124 + $0x18] sm:$0xff]
    %v1129 = vld [vmem:[%s1124 + $0x20] sm:$0xff]
    %v1130 = vld [vmem:[%s1124 + $0x28] sm:$0xff]
    %v1131 = vld [vmem:[%s1124 + $0x30] sm:$0xff]
    %v1132 = vld [vmem:[%s1124 + $0x38] sm:$0xff]
    %v1133 = vld [vmem:[%s1124 + $0x40] sm:$0xf]
    %v1134 = vld [vmem:[%s1124 + $0x48] sm:$0xf]
    %v1135 = vrot.slane %v909, 4
    %v1136 = vrot.slane %v910, 4
    %v1137 = vsel %vm941, %v1135, %v1136
    %v1138 = vsel %vm938, %v1137, 0
    %v1141 = vsel %vm941, %v1133, 0
    %v1144 = vsel %vm941, %v1134, 0
    %1146 = vmatprep.subr.mxu0 %v1126
    %1147 = vmatpush1.msra.mxu0 %v1125
    %1148 = vmatprep.subr.mxu0 %v1128
    %1149 = vmatpush1.msra.mxu0 %v1127
    %1150 = vmatprep.subr.mxu0 %v1130
    %1151 = vmatpush1.msra.mxu0 %v1129
    %1152 = vmatprep.subr.mxu0 %v1132
    %1153 = vmatpush1.msra.mxu0 %v1131
    %1154 = vmatprep.subr.mxu0 %v1144
    %1155 = vmatpush1.msra.mxu0 %v1141
    %1156 = vmatprep.subr.mxu0 0.0
    %1157 = vmatpush1.msra.mxu0 0.0
    %1158 = vmatprep.subr.mxu0 0.0
    %1159 = vmatpush1.msra.mxu0 0.0
    %1160 = vmatprep.subr.mxu0 0.0
    %1161 = vmatpush1.msra.mxu0 0.0
    %1162 = vmatprep.subr.mxu0 0.0
    %1163 = vmatpush1.msra.mxu0 0.0
    %1164 = vmatprep.subr.mxu0 0.0
    %1165 = vmatpush1.msra.mxu0 0.0
    %1166 = vmatprep.subr.mxu0 0.0
    %1167 = vmatpush1.msra.mxu0 0.0
    %1168 = vmatprep.subr.mxu0 0.0
    %1169 = vmatpush1.msra.mxu0 0.0
    %1170 = vmatprep.subr.mxu0 0.0
    %1171 = vmatpush1.msra.mxu0 0.0
    %1172 = vmatprep.subr.mxu0 0.0
    %1173 = vmatpush1.msra.mxu0 0.0
    %1174 = vmatprep.subr.mxu0 0.0
    %1175 = vmatpush1.msra.mxu0 0.0
    %1176 = vmatprep.subr.mxu0 0.0
    %1177 = vmatpush1.msra.mxu0 0.0
    %1178 = vmatprep.subr.mxu0 0.0
    %1179 = vmatpush1.msra.mxu0 0.0
    %1180 = vmatprep.subr.mxu0 0.0
    %1181 = vmatpush1.msra.mxu0 0.0
    %1182 = vmatprep.subr.mxu0 0.0
    %1183 = vmatpush1.msra.mxu0 0.0
    %1184 = vmatprep.subr.mxu0 0.0
    %1185 = vmatpush1.msra.mxu0 0.0
    %1186 = vmatprep.subr.mxu0 0.0
    %1187 = vmatpush1.msra.mxu0 0.0
    %1188 = vmatprep.subr.mxu0 0.0
    %1189 = vmatpush1.msra.mxu0 0.0
    %1190 = vmatprep.subr.mxu0 0.0
    %1191 = vmatpush1.msra.mxu0 0.0
    %1192 = vmatprep.subr.mxu0 0.0
    %1193 = vmatpush1.msra.mxu0 0.0
    %1194 = vmatprep.subr.mxu0 0.0
    %1195 = vmatpush1.msra.mxu0 0.0
    %1196 = vmatprep.subr.mxu0 0.0
    %1197 = vmatpush1.msra.mxu0 0.0
    %1198 = vmatprep.subr.mxu0 0.0
    %1199 = vmatpush1.msra.mxu0 0.0
    %1200 = vmatprep.subr.mxu0 0.0
    %1201 = vmatpush1.msra.mxu0 0.0
    %1202 = vmatprep.subr.mxu0 0.0
    %1203 = vmatpush1.msra.mxu0 0.0
    %1204 = vmatprep.subr.mxu0 0.0
    %1205 = vmatpush1.msra.mxu0 0.0
    %1206 = vmatprep.subr.mxu0 0.0
    %1207 = vmatpush1.msra.mxu0 0.0
    %1208 = vmatprep.subr.mxu0 0.0
    %1209 = vmatpush1.msra.mxu0 0.0
    %1210 = vmatprep.mubr.f32.mxu0 0.0
    %1211 = vmatmul.mubr.f32.gmra.mrb[0].mxu0 %v1138
    %v1212 = vpop.f32.mrb[0].mxu0
    %v1213 = vadd.f32 0.0, %v1212
    %v1214 = vpop.f32.mrb[0].mxu0
    %v1215 = vadd.f32 0.0, %v1214
    %1216 = vdwg.mxu0
    %v1217 = vsel %vm938, %v909, 0
    %v1220 = vsel %vm941, %v919, 0
    %v1223 = vsel %vm941, %v920, 0
    %1225 = vmatprep.subr.mxu0 %v912
    %1226 = vmatpush1.msra.mxu0 %v911
    %1227 = vmatprep.subr.mxu0 %v914
    %1228 = vmatpush1.msra.mxu0 %v913
    %1229 = vmatprep.subr.mxu0 %v916
    %1230 = vmatpush1.msra.mxu0 %v915
    %1231 = vmatprep.subr.mxu0 %v918
    %1232 = vmatpush1.msra.mxu0 %v917
    %1233 = vmatprep.subr.mxu0 %v1223
    %1234 = vmatpush1.msra.mxu0 %v1220
    %1235 = vmatprep.subr.mxu0 0.0
    %1236 = vmatpush1.msra.mxu0 0.0
    %1237 = vmatprep.subr.mxu0 0.0
    %1238 = vmatpush1.msra.mxu0 0.0
    %1239 = vmatprep.subr.mxu0 0.0
    %1240 = vmatpush1.msra.mxu0 0.0
    %1241 = vmatprep.subr.mxu0 0.0
    %1242 = vmatpush1.msra.mxu0 0.0
    %1243 = vmatprep.subr.mxu0 0.0
    %1244 = vmatpush1.msra.mxu0 0.0
    %1245 = vmatprep.subr.mxu0 0.0
    %1246 = vmatpush1.msra.mxu0 0.0
    %1247 = vmatprep.subr.mxu0 0.0
    %1248 = vmatpush1.msra.mxu0 0.0
    %1249 = vmatprep.subr.mxu0 0.0
    %1250 = vmatpush1.msra.mxu0 0.0
    %1251 = vmatprep.subr.mxu0 0.0
    %1252 = vmatpush1.msra.mxu0 0.0
    %1253 = vmatprep.subr.mxu0 0.0
    %1254 = vmatpush1.msra.mxu0 0.0
    %1255 = vmatprep.subr.mxu0 0.0
    %1256 = vmatpush1.msra.mxu0 0.0
    %1257 = vmatprep.subr.mxu0 0.0
    %1258 = vmatpush1.msra.mxu0 0.0
    %1259 = vmatprep.subr.mxu0 0.0
    %1260 = vmatpush1.msra.mxu0 0.0
    %1261 = vmatprep.subr.mxu0 0.0
    %1262 = vmatpush1.msra.mxu0 0.0
    %1263 = vmatprep.subr.mxu0 0.0
    %1264 = vmatpush1.msra.mxu0 0.0
    %1265 = vmatprep.subr.mxu0 0.0
    %1266 = vmatpush1.msra.mxu0 0.0
    %1267 = vmatprep.subr.mxu0 0.0
    %1268 = vmatpush1.msra.mxu0 0.0
    %1269 = vmatprep.subr.mxu0 0.0
    %1270 = vmatpush1.msra.mxu0 0.0
    %1271 = vmatprep.subr.mxu0 0.0
    %1272 = vmatpush1.msra.mxu0 0.0
    %1273 = vmatprep.subr.mxu0 0.0
    %1274 = vmatpush1.msra.mxu0 0.0
    %1275 = vmatprep.subr.mxu0 0.0
    %1276 = vmatpush1.msra.mxu0 0.0
    %1277 = vmatprep.subr.mxu0 0.0
    %1278 = vmatpush1.msra.mxu0 0.0
    %1279 = vmatprep.subr.mxu0 0.0
    %1280 = vmatpush1.msra.mxu0 0.0
    %1281 = vmatprep.subr.mxu0 0.0
    %1282 = vmatpush1.msra.mxu0 0.0
    %1283 = vmatprep.subr.mxu0 0.0
    %1284 = vmatpush1.msra.mxu0 0.0
    %1285 = vmatprep.subr.mxu0 0.0
    %1286 = vmatpush1.msra.mxu0 0.0
    %1287 = vmatprep.subr.mxu0 0.0
    %1288 = vmatpush1.msra.mxu0 0.0
    %1289 = vmatprep.mubr.f32.mxu0 0.0
    %1290 = vmatmul.mubr.f32.gmra.mrb[0].mxu0 %v1217
    %v1291 = vpop.f32.mrb[0].mxu0
    %v1292 = vadd.f32 %v1015, %v1291
    %v1293 = vpop.f32.mrb[0].mxu0
    %v1294 = vadd.f32 %v1017, %v1293
    %1295 = vdwg.mxu0
    %vm1296 = vcmask 1045504
    %v1297 = vrot.slane %v909, 2
    %v1298 = vrot.slane %v910, 2
    %v1299 = vsel %vm1296, %v1297, %v1298
    %v1300 = vsel %vm938, %v1299, 0
    %v1303 = vsel %vm941, %v1028, 0
    %v1306 = vsel %vm941, %v1029, 0
    %1308 = vmatprep.subr.mxu0 %v1021
    %1309 = vmatpush1.msra.mxu0 %v1020
    %1310 = vmatprep.subr.mxu0 %v1023
    %1311 = vmatpush1.msra.mxu0 %v1022
    %1312 = vmatprep.subr.mxu0 %v1025
    %1313 = vmatpush1.msra.mxu0 %v1024
    %1314 = vmatprep.subr.mxu0 %v1027
    %1315 = vmatpush1.msra.mxu0 %v1026
    %1316 = vmatprep.subr.mxu0 %v1306
    %1317 = vmatpush1.msra.mxu0 %v1303
    %1318 = vmatprep.subr.mxu0 0.0
    %1319 = vmatpush1.msra.mxu0 0.0
    %1320 = vmatprep.subr.mxu0 0.0
    %1321 = vmatpush1.msra.mxu0 0.0
    %1322 = vmatprep.subr.mxu0 0.0
    %1323 = vmatpush1.msra.mxu0 0.0
    %1324 = vmatprep.subr.mxu0 0.0
    %1325 = vmatpush1.msra.mxu0 0.0
    %1326 = vmatprep.subr.mxu0 0.0
    %1327 = vmatpush1.msra.mxu0 0.0
    %1328 = vmatprep.subr.mxu0 0.0
    %1329 = vmatpush1.msra.mxu0 0.0
    %1330 = vmatprep.subr.mxu0 0.0
    %1331 = vmatpush1.msra.mxu0 0.0
    %1332 = vmatprep.subr.mxu0 0.0
    %1333 = vmatpush1.msra.mxu0 0.0
    %1334 = vmatprep.subr.mxu0 0.0
    %1335 = vmatpush1.msra.mxu0 0.0
    %1336 = vmatprep.subr.mxu0 0.0
    %1337 = vmatpush1.msra.mxu0 0.0
    %1338 = vmatprep.subr.mxu0 0.0
    %1339 = vmatpush1.msra.mxu0 0.0
    %1340 = vmatprep.subr.mxu0 0.0
    %1341 = vmatpush1.msra.mxu0 0.0
    %1342 = vmatprep.subr.mxu0 0.0
    %1343 = vmatpush1.msra.mxu0 0.0
    %1344 = vmatprep.subr.mxu0 0.0
    %1345 = vmatpush1.msra.mxu0 0.0
    %1346 = vmatprep.subr.mxu0 0.0
    %1347 = vmatpush1.msra.mxu0 0.0
    %1348 = vmatprep.subr.mxu0 0.0
    %1349 = vmatpush1.msra.mxu0 0.0
    %1350 = vmatprep.subr.mxu0 0.0
    %1351 = vmatpush1.msra.mxu0 0.0
    %1352 = vmatprep.subr.mxu0 0.0
    %1353 = vmatpush1.msra.mxu0 0.0
    %1354 = vmatprep.subr.mxu0 0.0
    %1355 = vmatpush1.msra.mxu0 0.0
    %1356 = vmatprep.subr.mxu0 0.0
    %1357 = vmatpush1.msra.mxu0 0.0
    %1358 = vmatprep.subr.mxu0 0.0
    %1359 = vmatpush1.msra.mxu0 0.0
    %1360 = vmatprep.subr.mxu0 0.0
    %1361 = vmatpush1.msra.mxu0 0.0
    %1362 = vmatprep.subr.mxu0 0.0
    %1363 = vmatpush1.msra.mxu0 0.0
    %1364 = vmatprep.subr.mxu0 0.0
    %1365 = vmatpush1.msra.mxu0 0.0
    %1366 = vmatprep.subr.mxu0 0.0
    %1367 = vmatpush1.msra.mxu0 0.0
    %1368 = vmatprep.subr.mxu0 0.0
    %1369 = vmatpush1.msra.mxu0 0.0
    %1370 = vmatprep.subr.mxu0 0.0
    %1371 = vmatpush1.msra.mxu0 0.0
    %1372 = vmatprep.mubr.f32.mxu0 0.0
    %1373 = vmatmul.mubr.f32.gmra.mrb[0].mxu0 %v1300
    %v1374 = vpop.f32.mrb[0].mxu0
    %v1375 = vadd.f32 %v1120, %v1374
    %v1376 = vpop.f32.mrb[0].mxu0
    %v1377 = vadd.f32 %v1122, %v1376
    %1378 = vdwg.mxu0
    %v1379 = vadd.f32 %v1292, %v1375
    %v1380 = vadd.f32 %v1294, %v1377
    %v1381 = vadd.f32 %v1379, %v1213
    %v1382 = vadd.f32 %v1380, %v1215
    %v1383 = vld [vmem:[%s6] sm:$0x3]
    %v1385 = vlaneseq
    %v1386 = vshrl.u32 %v1385, 7
    %v1387 = vsub.s32 0, %v1386
    %v1388 = vrot.slane %v1383, %v1387
    %v1389 = vlaneseq
    %v1390 = vshrl.u32 %v1389, 7
    %v1391 = vsub.s32 1, %v1390
    %v1392 = vrot.slane %v1383, %v1391
    %v1395 = vadd.f32 %v1381, %v1388
    %v1396 = vadd.f32 %v1382, %v1392
    %v1397 = vmax.f32 %v1395, 0.0
    %v1398 = vmax.f32 %v1396, 0.0
    %s1399 = scalar_lea.vmem %s0, 32
    %v1400 = vld [vmem:[%s1399] sm:$0xff]
    %v1401 = vld [vmem:[%s1399 + $0x8] sm:$0xff]
    %v1402 = vld [vmem:[%s1399 + $0x10] sm:$0xff]
    %v1403 = vld [vmem:[%s1399 + $0x1] sm:$0xff]
    %v1404 = vld [vmem:[%s1399 + $0x9] sm:$0xff]
    %v1405 = vld [vmem:[%s1399 + $0x11] sm:$0xff]
    %v1407 = vsel %vm71, %v1403, 0
    %v1410 = vsel %vm71, %v1404, 0
    %v1413 = vsel %vm71, %v1405, 0
    %1415 = vmatprep.subr.mxu0 0.0
    %1416 = vmatpush1.msra.mxu0 %v66
    %1417 = vmatprep.subr.mxu0 0.0
    %1418 = vmatpush1.msra.mxu0 %v67
    %1419 = vmatprep.subr.mxu0 0.0
    %1420 = vmatpush1.msra.mxu0 %v68
    %1421 = vmatprep.subr.mxu0 0.0
    %1422 = vmatpush1.msra.mxu0 %v69
    %1423 = vmatprep.subr.mxu0 0.0
    %1424 = vmatpush1.msra.mxu0 %v70
    %1425 = vmatprep.subr.mxu0 0.0
    %1426 = vmatpush1.msra.mxu0 0.0
    %1427 = vmatprep.subr.mxu0 0.0
    %1428 = vmatpush1.msra.mxu0 0.0
    %1429 = vmatprep.subr.mxu0 0.0
    %1430 = vmatpush1.msra.mxu0 0.0
    %1431 = vmatprep.subr.mxu0 0.0
    %1432 = vmatpush1.msra.mxu0 0.0
    %1433 = vmatprep.subr.mxu0 0.0
    %1434 = vmatpush1.msra.mxu0 0.0
    %1435 = vmatprep.subr.mxu0 0.0
    %1436 = vmatpush1.msra.mxu0 0.0
    %1437 = vmatprep.subr.mxu0 0.0
    %1438 = vmatpush1.msra.mxu0 0.0
    %1439 = vmatprep.subr.mxu0 0.0
    %1440 = vmatpush1.msra.mxu0 0.0
    %1441 = vmatprep.subr.mxu0 0.0
    %1442 = vmatpush1.msra.mxu0 0.0
    %1443 = vmatprep.subr.mxu0 0.0
    %1444 = vmatpush1.msra.mxu0 0.0
    %1445 = vmatprep.subr.mxu0 0.0
    %1446 = vmatpush1.msra.mxu0 0.0
    %1447 = vmatprep.subr.mxu0 0.0
    %1448 = vmatpush1.msra.mxu0 0.0
    %1449 = vmatprep.subr.mxu0 0.0
    %1450 = vmatpush1.msra.mxu0 0.0
    %1451 = vmatprep.subr.mxu0 0.0
    %1452 = vmatpush1.msra.mxu0 0.0
    %1453 = vmatprep.subr.mxu0 0.0
    %1454 = vmatpush1.msra.mxu0 0.0
    %1455 = vmatprep.subr.mxu0 0.0
    %1456 = vmatpush1.msra.mxu0 0.0
    %1457 = vmatprep.subr.mxu0 0.0
    %1458 = vmatpush1.msra.mxu0 0.0
    %1459 = vmatprep.subr.mxu0 0.0
    %1460 = vmatpush1.msra.mxu0 0.0
    %1461 = vmatprep.subr.mxu0 0.0
    %1462 = vmatpush1.msra.mxu0 0.0
    %1463 = vmatprep.subr.mxu0 0.0
    %1464 = vmatpush1.msra.mxu0 0.0
    %1465 = vmatprep.subr.mxu0 0.0
    %1466 = vmatpush1.msra.mxu0 0.0
    %1467 = vmatprep.subr.mxu0 0.0
    %1468 = vmatpush1.msra.mxu0 0.0
    %1469 = vmatprep.subr.mxu0 0.0
    %1470 = vmatpush1.msra.mxu0 0.0
    %1471 = vmatprep.subr.mxu0 0.0
    %1472 = vmatpush1.msra.mxu0 0.0
    %1473 = vmatprep.subr.mxu0 0.0
    %1474 = vmatpush1.msra.mxu0 0.0
    %1475 = vmatprep.subr.mxu0 0.0
    %1476 = vmatpush1.msra.mxu0 0.0
    %1477 = vmatprep.subr.mxu0 0.0
    %1478 = vmatpush1.msra.mxu0 0.0
    %1479 = vmatprep.mubr.f32.mxu0 0.0
    %1480 = vmatmul.mubr.f32.gmra.mrb[0].mxu0 %v1407
    %v1481 = vpop.f32.mrb[0].mxu0
    %v1482 = vadd.f32 0.0, %v1481
    %v1483 = vpop.f32.mrb[0].mxu0
    %1484 = vmatprep.mubr.f32.mxu0 0.0
    %1485 = vmatmul.mubr.f32.gmra.mrb[0].mxu0 %v1410
    %v1486 = vpop.f32.mrb[0].mxu0
    %v1487 = vadd.f32 0.0, %v1486
    %v1488 = vpop.f32.mrb[0].mxu0
    %1489 = vmatprep.mubr.f32.mxu0 0.0
    %1490 = vmatmul.mubr.f32.gmra.mrb[0].mxu0 %v1413
    %v1491 = vpop.f32.mrb[0].mxu0
    %v1492 = vadd.f32 0.0, %v1491
    %v1493 = vpop.f32.mrb[0].mxu0
    %1494 = vdwg.mxu0
    %v1495 = vld [vmem:[%s1399 + $0x2] sm:$0xff]
    %v1496 = vld [vmem:[%s1399 + $0xa] sm:$0xff]
    %v1497 = vld [vmem:[%s1399 + $0x12] sm:$0xff]
    %v1498 = vld [vmem:[%s1399 + $0x3] sm:$0xff]
    %v1499 = vld [vmem:[%s1399 + $0xb] sm:$0xff]
    %v1500 = vld [vmem:[%s1399 + $0x13] sm:$0xff]
    %v1502 = vsel %vm71, %v1498, 0
    %v1505 = vsel %vm71, %v1499, 0
    %v1508 = vsel %vm71, %v1500, 0
    %1510 = vmatprep.subr.mxu0 0.0
    %1511 = vmatpush1.msra.mxu0 %v174
    %1512 = vmatprep.subr.mxu0 0.0
    %1513 = vmatpush1.msra.mxu0 %v175
    %1514 = vmatprep.subr.mxu0 0.0
    %1515 = vmatpush1.msra.mxu0 %v176
    %1516 = vmatprep.subr.mxu0 0.0
    %1517 = vmatpush1.msra.mxu0 %v177
    %1518 = vmatprep.subr.mxu0 0.0
    %1519 = vmatpush1.msra.mxu0 %v178
    %1520 = vmatprep.subr.mxu0 0.0
    %1521 = vmatpush1.msra.mxu0 0.0
    %1522 = vmatprep.subr.mxu0 0.0
    %1523 = vmatpush1.msra.mxu0 0.0
    %1524 = vmatprep.subr.mxu0 0.0
    %1525 = vmatpush1.msra.mxu0 0.0
    %1526 = vmatprep.subr.mxu0 0.0
    %1527 = vmatpush1.msra.mxu0 0.0
    %1528 = vmatprep.subr.mxu0 0.0
    %1529 = vmatpush1.msra.mxu0 0.0
    %1530 = vmatprep.subr.mxu0 0.0
    %1531 = vmatpush1.msra.mxu0 0.0
    %1532 = vmatprep.subr.mxu0 0.0
    %1533 = vmatpush1.msra.mxu0 0.0
    %1534 = vmatprep.subr.mxu0 0.0
    %1535 = vmatpush1.msra.mxu0 0.0
    %1536 = vmatprep.subr.mxu0 0.0
    %1537 = vmatpush1.msra.mxu0 0.0
    %1538 = vmatprep.subr.mxu0 0.0
    %1539 = vmatpush1.msra.mxu0 0.0
    %1540 = vmatprep.subr.mxu0 0.0
    %1541 = vmatpush1.msra.mxu0 0.0
    %1542 = vmatprep.subr.mxu0 0.0
    %1543 = vmatpush1.msra.mxu0 0.0
    %1544 = vmatprep.subr.mxu0 0.0
    %1545 = vmatpush1.msra.mxu0 0.0
    %1546 = vmatprep.subr.mxu0 0.0
    %1547 = vmatpush1.msra.mxu0 0.0
    %1548 = vmatprep.subr.mxu0 0.0
    %1549 = vmatpush1.msra.mxu0 0.0
    %1550 = vmatprep.subr.mxu0 0.0
    %1551 = vmatpush1.msra.mxu0 0.0
    %1552 = vmatprep.subr.mxu0 0.0
    %1553 = vmatpush1.msra.mxu0 0.0
    %1554 = vmatprep.subr.mxu0 0.0
    %1555 = vmatpush1.msra.mxu0 0.0
    %1556 = vmatprep.subr.mxu0 0.0
    %1557 = vmatpush1.msra.mxu0 0.0
    %1558 = vmatprep.subr.mxu0 0.0
    %1559 = vmatpush1.msra.mxu0 0.0
    %1560 = vmatprep.subr.mxu0 0.0
    %1561 = vmatpush1.msra.mxu0 0.0
    %1562 = vmatprep.subr.mxu0 0.0
    %1563 = vmatpush1.msra.mxu0 0.0
    %1564 = vmatprep.subr.mxu0 0.0
    %1565 = vmatpush1.msra.mxu0 0.0
    %1566 = vmatprep.subr.mxu0 0.0
    %1567 = vmatpush1.msra.mxu0 0.0
    %1568 = vmatprep.subr.mxu0 0.0
    %1569 = vmatpush1.msra.mxu0 0.0
    %1570 = vmatprep.subr.mxu0 0.0
    %1571 = vmatpush1.msra.mxu0 0.0
    %1572 = vmatprep.subr.mxu0 0.0
    %1573 = vmatpush1.msra.mxu0 0.0
    %1574 = vmatprep.mubr.f32.mxu0 0.0
    %1575 = vmatmul.mubr.f32.gmra.mrb[0].mxu0 %v1502
    %v1576 = vpop.f32.mrb[0].mxu0
    %v1577 = vadd.f32 0.0, %v1576
    %v1578 = vpop.f32.mrb[0].mxu0
    %1579 = vmatprep.mubr.f32.mxu0 0.0
    %1580 = vmatmul.mubr.f32.gmra.mrb[0].mxu0 %v1505
    %v1581 = vpop.f32.mrb[0].mxu0
    %v1582 = vadd.f32 0.0, %v1581
    %v1583 = vpop.f32.mrb[0].mxu0
    %1584 = vmatprep.mubr.f32.mxu0 0.0
    %1585 = vmatmul.mubr.f32.gmra.mrb[0].mxu0 %v1508
    %v1586 = vpop.f32.mrb[0].mxu0
    %v1587 = vadd.f32 0.0, %v1586
    %v1588 = vpop.f32.mrb[0].mxu0
    %1589 = vdwg.mxu0
    %v1590 = vld [vmem:[%s1399 + $0x4] sm:$0xff]
    %v1591 = vld [vmem:[%s1399 + $0xc] sm:$0xff]
    %v1592 = vld [vmem:[%s1399 + $0x14] sm:$0xff]
    %v1594 = vsel %vm71, %v1590, 0
    %v1597 = vsel %vm71, %v1591, 0
    %v1600 = vsel %vm71, %v1592, 0
    %1602 = vmatprep.subr.mxu0 0.0
    %1603 = vmatpush1.msra.mxu0 %v272
    %1604 = vmatprep.subr.mxu0 0.0
    %1605 = vmatpush1.msra.mxu0 %v273
    %1606 = vmatprep.subr.mxu0 0.0
    %1607 = vmatpush1.msra.mxu0 %v274
    %1608 = vmatprep.subr.mxu0 0.0
    %1609 = vmatpush1.msra.mxu0 %v275
    %1610 = vmatprep.subr.mxu0 0.0
    %1611 = vmatpush1.msra.mxu0 %v276
    %1612 = vmatprep.subr.mxu0 0.0
    %1613 = vmatpush1.msra.mxu0 0.0
    %1614 = vmatprep.subr.mxu0 0.0
    %1615 = vmatpush1.msra.mxu0 0.0
    %1616 = vmatprep.subr.mxu0 0.0
    %1617 = vmatpush1.msra.mxu0 0.0
    %1618 = vmatprep.subr.mxu0 0.0
    %1619 = vmatpush1.msra.mxu0 0.0
    %1620 = vmatprep.subr.mxu0 0.0
    %1621 = vmatpush1.msra.mxu0 0.0
    %1622 = vmatprep.subr.mxu0 0.0
    %1623 = vmatpush1.msra.mxu0 0.0
    %1624 = vmatprep.subr.mxu0 0.0
    %1625 = vmatpush1.msra.mxu0 0.0
    %1626 = vmatprep.subr.mxu0 0.0
    %1627 = vmatpush1.msra.mxu0 0.0
    %1628 = vmatprep.subr.mxu0 0.0
    %1629 = vmatpush1.msra.mxu0 0.0
    %1630 = vmatprep.subr.mxu0 0.0
    %1631 = vmatpush1.msra.mxu0 0.0
    %1632 = vmatprep.subr.mxu0 0.0
    %1633 = vmatpush1.msra.mxu0 0.0
    %1634 = vmatprep.subr.mxu0 0.0
    %1635 = vmatpush1.msra.mxu0 0.0
    %1636 = vmatprep.subr.mxu0 0.0
    %1637 = vmatpush1.msra.mxu0 0.0
    %1638 = vmatprep.subr.mxu0 0.0
    %1639 = vmatpush1.msra.mxu0 0.0
    %1640 = vmatprep.subr.mxu0 0.0
    %1641 = vmatpush1.msra.mxu0 0.0
    %1642 = vmatprep.subr.mxu0 0.0
    %1643 = vmatpush1.msra.mxu0 0.0
    %1644 = vmatprep.subr.mxu0 0.0
    %1645 = vmatpush1.msra.mxu0 0.0
    %1646 = vmatprep.subr.mxu0 0.0
    %1647 = vmatpush1.msra.mxu0 0.0
    %1648 = vmatprep.subr.mxu0 0.0
    %1649 = vmatpush1.msra.mxu0 0.0
    %1650 = vmatprep.subr.mxu0 0.0
    %1651 = vmatpush1.msra.mxu0 0.0
    %1652 = vmatprep.subr.mxu0 0.0
    %1653 = vmatpush1.msra.mxu0 0.0
    %1654 = vmatprep.subr.mxu0 0.0
    %1655 = vmatpush1.msra.mxu0 0.0
    %1656 = vmatprep.subr.mxu0 0.0
    %1657 = vmatpush1.msra.mxu0 0.0
    %1658 = vmatprep.subr.mxu0 0.0
    %1659 = vmatpush1.msra.mxu0 0.0
    %1660 = vmatprep.subr.mxu0 0.0
    %1661 = vmatpush1.msra.mxu0 0.0
    %1662 = vmatprep.subr.mxu0 0.0
    %1663 = vmatpush1.msra.mxu0 0.0
    %1664 = vmatprep.subr.mxu0 0.0
    %1665 = vmatpush1.msra.mxu0 0.0
    %1666 = vmatprep.mubr.f32.mxu0 0.0
    %1667 = vmatmul.mubr.f32.gmra.mrb[0].mxu0 %v1594
    %v1668 = vpop.f32.mrb[0].mxu0
    %v1669 = vadd.f32 0.0, %v1668
    %v1670 = vpop.f32.mrb[0].mxu0
    %1671 = vmatprep.mubr.f32.mxu0 0.0
    %1672 = vmatmul.mubr.f32.gmra.mrb[0].mxu0 %v1597
    %v1673 = vpop.f32.mrb[0].mxu0
    %v1674 = vadd.f32 0.0, %v1673
    %v1675 = vpop.f32.mrb[0].mxu0
    %1676 = vmatprep.mubr.f32.mxu0 0.0
    %1677 = vmatmul.mubr.f32.gmra.mrb[0].mxu0 %v1600
    %v1678 = vpop.f32.mrb[0].mxu0
    %v1679 = vadd.f32 0.0, %v1678
    %v1680 = vpop.f32.mrb[0].mxu0
    %1681 = vdwg.mxu0
    %v1683 = vsel %vm71, %v1400, 0
    %v1686 = vsel %vm71, %v1401, 0
    %v1689 = vsel %vm71, %v1402, 0
    %1691 = vmatprep.subr.mxu0 0.0
    %1692 = vmatpush1.msra.mxu0 %v57
    %1693 = vmatprep.subr.mxu0 0.0
    %1694 = vmatpush1.msra.mxu0 %v58
    %1695 = vmatprep.subr.mxu0 0.0
    %1696 = vmatpush1.msra.mxu0 %v59
    %1697 = vmatprep.subr.mxu0 0.0
    %1698 = vmatpush1.msra.mxu0 %v60
    %1699 = vmatprep.subr.mxu0 0.0
    %1700 = vmatpush1.msra.mxu0 %v61
    %1701 = vmatprep.subr.mxu0 0.0
    %1702 = vmatpush1.msra.mxu0 0.0
    %1703 = vmatprep.subr.mxu0 0.0
    %1704 = vmatpush1.msra.mxu0 0.0
    %1705 = vmatprep.subr.mxu0 0.0
    %1706 = vmatpush1.msra.mxu0 0.0
    %1707 = vmatprep.subr.mxu0 0.0
    %1708 = vmatpush1.msra.mxu0 0.0
    %1709 = vmatprep.subr.mxu0 0.0
    %1710 = vmatpush1.msra.mxu0 0.0
    %1711 = vmatprep.subr.mxu0 0.0
    %1712 = vmatpush1.msra.mxu0 0.0
    %1713 = vmatprep.subr.mxu0 0.0
    %1714 = vmatpush1.msra.mxu0 0.0
    %1715 = vmatprep.subr.mxu0 0.0
    %1716 = vmatpush1.msra.mxu0 0.0
    %1717 = vmatprep.subr.mxu0 0.0
    %1718 = vmatpush1.msra.mxu0 0.0
    %1719 = vmatprep.subr.mxu0 0.0
    %1720 = vmatpush1.msra.mxu0 0.0
    %1721 = vmatprep.subr.mxu0 0.0
    %1722 = vmatpush1.msra.mxu0 0.0
    %1723 = vmatprep.subr.mxu0 0.0
    %1724 = vmatpush1.msra.mxu0 0.0
    %1725 = vmatprep.subr.mxu0 0.0
    %1726 = vmatpush1.msra.mxu0 0.0
    %1727 = vmatprep.subr.mxu0 0.0
    %1728 = vmatpush1.msra.mxu0 0.0
    %1729 = vmatprep.subr.mxu0 0.0
    %1730 = vmatpush1.msra.mxu0 0.0
    %1731 = vmatprep.subr.mxu0 0.0
    %1732 = vmatpush1.msra.mxu0 0.0
    %1733 = vmatprep.subr.mxu0 0.0
    %1734 = vmatpush1.msra.mxu0 0.0
    %1735 = vmatprep.subr.mxu0 0.0
    %1736 = vmatpush1.msra.mxu0 0.0
    %1737 = vmatprep.subr.mxu0 0.0
    %1738 = vmatpush1.msra.mxu0 0.0
    %1739 = vmatprep.subr.mxu0 0.0
    %1740 = vmatpush1.msra.mxu0 0.0
    %1741 = vmatprep.subr.mxu0 0.0
    %1742 = vmatpush1.msra.mxu0 0.0
    %1743 = vmatprep.subr.mxu0 0.0
    %1744 = vmatpush1.msra.mxu0 0.0
    %1745 = vmatprep.subr.mxu0 0.0
    %1746 = vmatpush1.msra.mxu0 0.0
    %1747 = vmatprep.subr.mxu0 0.0
    %1748 = vmatpush1.msra.mxu0 0.0
    %1749 = vmatprep.subr.mxu0 0.0
    %1750 = vmatpush1.msra.mxu0 0.0
    %1751 = vmatprep.subr.mxu0 0.0
    %1752 = vmatpush1.msra.mxu0 0.0
    %1753 = vmatprep.subr.mxu0 0.0
    %1754 = vmatpush1.msra.mxu0 0.0
    %1755 = vmatprep.mubr.f32.mxu0 0.0
    %1756 = vmatmul.mubr.f32.gmra.mrb[0].mxu0 %v1683
    %v1757 = vpop.f32.mrb[0].mxu0
    %v1758 = vadd.f32 %v1482, %v1757
    %v1759 = vpop.f32.mrb[0].mxu0
    %1760 = vmatprep.mubr.f32.mxu0 0.0
    %1761 = vmatmul.mubr.f32.gmra.mrb[0].mxu0 %v1686
    %v1762 = vpop.f32.mrb[0].mxu0
    %v1763 = vadd.f32 %v1487, %v1762
    %v1764 = vpop.f32.mrb[0].mxu0
    %1765 = vmatprep.mubr.f32.mxu0 0.0
    %1766 = vmatmul.mubr.f32.gmra.mrb[0].mxu0 %v1689
    %v1767 = vpop.f32.mrb[0].mxu0
    %v1768 = vadd.f32 %v1492, %v1767
    %v1769 = vpop.f32.mrb[0].mxu0
    %1770 = vdwg.mxu0
    %v1772 = vsel %vm71, %v1495, 0
    %v1775 = vsel %vm71, %v1496, 0
    %v1778 = vsel %vm71, %v1497, 0
    %1780 = vmatprep.subr.mxu0 0.0
    %1781 = vmatpush1.msra.mxu0 %v165
    %1782 = vmatprep.subr.mxu0 0.0
    %1783 = vmatpush1.msra.mxu0 %v166
    %1784 = vmatprep.subr.mxu0 0.0
    %1785 = vmatpush1.msra.mxu0 %v167
    %1786 = vmatprep.subr.mxu0 0.0
    %1787 = vmatpush1.msra.mxu0 %v168
    %1788 = vmatprep.subr.mxu0 0.0
    %1789 = vmatpush1.msra.mxu0 %v169
    %1790 = vmatprep.subr.mxu0 0.0
    %1791 = vmatpush1.msra.mxu0 0.0
    %1792 = vmatprep.subr.mxu0 0.0
    %1793 = vmatpush1.msra.mxu0 0.0
    %1794 = vmatprep.subr.mxu0 0.0
    %1795 = vmatpush1.msra.mxu0 0.0
    %1796 = vmatprep.subr.mxu0 0.0
    %1797 = vmatpush1.msra.mxu0 0.0
    %1798 = vmatprep.subr.mxu0 0.0
    %1799 = vmatpush1.msra.mxu0 0.0
    %1800 = vmatprep.subr.mxu0 0.0
    %1801 = vmatpush1.msra.mxu0 0.0
    %1802 = vmatprep.subr.mxu0 0.0
    %1803 = vmatpush1.msra.mxu0 0.0
    %1804 = vmatprep.subr.mxu0 0.0
    %1805 = vmatpush1.msra.mxu0 0.0
    %1806 = vmatprep.subr.mxu0 0.0
    %1807 = vmatpush1.msra.mxu0 0.0
    %1808 = vmatprep.subr.mxu0 0.0
    %1809 = vmatpush1.msra.mxu0 0.0
    %1810 = vmatprep.subr.mxu0 0.0
    %1811 = vmatpush1.msra.mxu0 0.0
    %1812 = vmatprep.subr.mxu0 0.0
    %1813 = vmatpush1.msra.mxu0 0.0
    %1814 = vmatprep.subr.mxu0 0.0
    %1815 = vmatpush1.msra.mxu0 0.0
    %1816 = vmatprep.subr.mxu0 0.0
    %1817 = vmatpush1.msra.mxu0 0.0
    %1818 = vmatprep.subr.mxu0 0.0
    %1819 = vmatpush1.msra.mxu0 0.0
    %1820 = vmatprep.subr.mxu0 0.0
    %1821 = vmatpush1.msra.mxu0 0.0
    %1822 = vmatprep.subr.mxu0 0.0
    %1823 = vmatpush1.msra.mxu0 0.0
    %1824 = vmatprep.subr.mxu0 0.0
    %1825 = vmatpush1.msra.mxu0 0.0
    %1826 = vmatprep.subr.mxu0 0.0
    %1827 = vmatpush1.msra.mxu0 0.0
    %1828 = vmatprep.subr.mxu0 0.0
    %1829 = vmatpush1.msra.mxu0 0.0
    %1830 = vmatprep.subr.mxu0 0.0
    %1831 = vmatpush1.msra.mxu0 0.0
    %1832 = vmatprep.subr.mxu0 0.0
    %1833 = vmatpush1.msra.mxu0 0.0
    %1834 = vmatprep.subr.mxu0 0.0
    %1835 = vmatpush1.msra.mxu0 0.0
    %1836 = vmatprep.subr.mxu0 0.0
    %1837 = vmatpush1.msra.mxu0 0.0
    %1838 = vmatprep.subr.mxu0 0.0
    %1839 = vmatpush1.msra.mxu0 0.0
    %1840 = vmatprep.subr.mxu0 0.0
    %1841 = vmatpush1.msra.mxu0 0.0
    %1842 = vmatprep.subr.mxu0 0.0
    %1843 = vmatpush1.msra.mxu0 0.0
    %1844 = vmatprep.mubr.f32.mxu0 0.0
    %1845 = vmatmul.mubr.f32.gmra.mrb[0].mxu0 %v1772
    %v1846 = vpop.f32.mrb[0].mxu0
    %v1847 = vadd.f32 %v1577, %v1846
    %v1848 = vpop.f32.mrb[0].mxu0
    %1849 = vmatprep.mubr.f32.mxu0 0.0
    %1850 = vmatmul.mubr.f32.gmra.mrb[0].mxu0 %v1775
    %v1851 = vpop.f32.mrb[0].mxu0
    %v1852 = vadd.f32 %v1582, %v1851
    %v1853 = vpop.f32.mrb[0].mxu0
    %1854 = vmatprep.mubr.f32.mxu0 0.0
    %1855 = vmatmul.mubr.f32.gmra.mrb[0].mxu0 %v1778
    %v1856 = vpop.f32.mrb[0].mxu0
    %v1857 = vadd.f32 %v1587, %v1856
    %v1858 = vpop.f32.mrb[0].mxu0
    %1859 = vdwg.mxu0
    %v1860 = vadd.f32 %v1758, %v1847
    %v1861 = vadd.f32 %v1763, %v1852
    %v1862 = vadd.f32 %v1768, %v1857
    %v1863 = vadd.f32 %v1860, %v1669
    %v1864 = vadd.f32 %v1861, %v1674
    %v1865 = vadd.f32 %v1862, %v1679
    %v1866 = vadd.f32 %v1863, %v555
    %v1867 = vadd.f32 %v1864, %v555
    %v1868 = vadd.f32 %v1865, %v555
    %v1869 = vmax.f32 %v1866, 0.0
    %v1870 = vmax.f32 %v1867, 0.0
    %v1871 = vmax.f32 %v1868, 0.0
    %1872 = vmatprep.subr.mxu0 0.0
    %1873 = vmatpush1.msra.mxu0 %v1869
    %1874 = vmatprep.subr.mxu0 0.0
    %1875 = vmatpush1.msra.mxu0 %v1870
    %1876 = vmatprep.subr.mxu0 0.0
    %1877 = vmatpush1.msra.mxu0 %v1871
    %1878 = vmatprep.subr.mxu0 0.0
    %1879 = vmatpush1.msra.mxu0 0.0
    %1880 = vmatprep.subr.mxu0 0.0
    %1881 = vmatpush1.msra.mxu0 0.0
    %1882 = vmatprep.subr.mxu0 0.0
    %1883 = vmatpush1.msra.mxu0 0.0
    %1884 = vmatprep.subr.mxu0 0.0
    %1885 = vmatpush1.msra.mxu0 0.0
    %1886 = vmatprep.subr.mxu0 0.0
    %1887 = vmatpush1.msra.mxu0 0.0
    %1888 = vmatprep.subr.mxu0 0.0
    %1889 = vmatpush1.msra.mxu0 0.0
    %1890 = vmatprep.subr.mxu0 0.0
    %1891 = vmatpush1.msra.mxu0 0.0
    %1892 = vmatprep.subr.mxu0 0.0
    %1893 = vmatpush1.msra.mxu0 0.0
    %1894 = vmatprep.subr.mxu0 0.0
    %1895 = vmatpush1.msra.mxu0 0.0
    %1896 = vmatprep.subr.mxu0 0.0
    %1897 = vmatpush1.msra.mxu0 0.0
    %1898 = vmatprep.subr.mxu0 0.0
    %1899 = vmatpush1.msra.mxu0 0.0
    %1900 = vmatprep.subr.mxu0 0.0
    %1901 = vmatpush1.msra.mxu0 0.0
    %1902 = vmatprep.subr.mxu0 0.0
    %1903 = vmatpush1.msra.mxu0 0.0
    %1904 = vmatprep.subr.mxu0 0.0
    %1905 = vmatpush1.msra.mxu0 0.0
    %1906 = vmatprep.subr.mxu0 0.0
    %1907 = vmatpush1.msra.mxu0 0.0
    %1908 = vmatprep.subr.mxu0 0.0
    %1909 = vmatpush1.msra.mxu0 0.0
    %1910 = vmatprep.subr.mxu0 0.0
    %1911 = vmatpush1.msra.mxu0 0.0
    %1912 = vmatprep.subr.mxu0 0.0
    %1913 = vmatpush1.msra.mxu0 0.0
    %1914 = vmatprep.subr.mxu0 0.0
    %1915 = vmatpush1.msra.mxu0 0.0
    %1916 = vmatprep.subr.mxu0 0.0
    %1917 = vmatpush1.msra.mxu0 0.0
    %1918 = vmatprep.subr.mxu0 0.0
    %1919 = vmatpush1.msra.mxu0 0.0
    %1920 = vmatprep.subr.mxu0 0.0
    %1921 = vmatpush1.msra.mxu0 0.0
    %1922 = vmatprep.subr.mxu0 0.0
    %1923 = vmatpush1.msra.mxu0 0.0
    %1924 = vmatprep.subr.mxu0 0.0
    %1925 = vmatpush1.msra.mxu0 0.0
    %1926 = vmatprep.subr.mxu0 0.0
    %1927 = vmatpush1.msra.mxu0 0.0
    %1928 = vmatprep.subr.mxu0 0.0
    %1929 = vmatpush1.msra.mxu0 0.0
    %1930 = vmatprep.subr.mxu0 0.0
    %1931 = vmatpush1.msra.mxu0 0.0
    %1932 = vmatprep.subr.mxu0 0.0
    %1933 = vmatpush1.msra.mxu0 0.0
    %1934 = vmatprep.subr.mxu0 0.0
    %1935 = vmatpush1.msra.mxu0 0.0
    %1936 = vmatprep.mubr.f32.mxu0 0.0
    %1937 = vmatmul.mubr.f32.gmra.mrb[0].mxu0 %v567
    %v1938 = vpop.f32.mrb[0].mxu0
    %v1939 = vadd.f32 0.0, %v1938
    %v1940 = vpop.f32.mrb[0].mxu0
    %1941 = vmatprep.mubr.f32.mxu0 0.0
    %1942 = vmatmul.mubr.f32.gmra.mrb[0].mxu0 %v570
    %v1943 = vpop.f32.mrb[0].mxu0
    %v1944 = vadd.f32 0.0, %v1943
    %v1945 = vpop.f32.mrb[0].mxu0
    %1946 = vdwg.mxu0
    %1947 = vmatprep.subr.mxu0 0.0
    %1948 = vmatpush1.msra.mxu0 %v1869
    %1949 = vmatprep.subr.mxu0 0.0
    %1950 = vmatpush1.msra.mxu0 %v1870
    %1951 = vmatprep.subr.mxu0 0.0
    %1952 = vmatpush1.msra.mxu0 %v1871
    %1953 = vmatprep.subr.mxu0 0.0
    %1954 = vmatpush1.msra.mxu0 0.0
    %1955 = vmatprep.subr.mxu0 0.0
    %1956 = vmatpush1.msra.mxu0 0.0
    %1957 = vmatprep.subr.mxu0 0.0
    %1958 = vmatpush1.msra.mxu0 0.0
    %1959 = vmatprep.subr.mxu0 0.0
    %1960 = vmatpush1.msra.mxu0 0.0
    %1961 = vmatprep.subr.mxu0 0.0
    %1962 = vmatpush1.msra.mxu0 0.0
    %1963 = vmatprep.subr.mxu0 0.0
    %1964 = vmatpush1.msra.mxu0 0.0
    %1965 = vmatprep.subr.mxu0 0.0
    %1966 = vmatpush1.msra.mxu0 0.0
    %1967 = vmatprep.subr.mxu0 0.0
    %1968 = vmatpush1.msra.mxu0 0.0
    %1969 = vmatprep.subr.mxu0 0.0
    %1970 = vmatpush1.msra.mxu0 0.0
    %1971 = vmatprep.subr.mxu0 0.0
    %1972 = vmatpush1.msra.mxu0 0.0
    %1973 = vmatprep.subr.mxu0 0.0
    %1974 = vmatpush1.msra.mxu0 0.0
    %1975 = vmatprep.subr.mxu0 0.0
    %1976 = vmatpush1.msra.mxu0 0.0
    %1977 = vmatprep.subr.mxu0 0.0
    %1978 = vmatpush1.msra.mxu0 0.0
    %1979 = vmatprep.subr.mxu0 0.0
    %1980 = vmatpush1.msra.mxu0 0.0
    %1981 = vmatprep.subr.mxu0 0.0
    %1982 = vmatpush1.msra.mxu0 0.0
    %1983 = vmatprep.subr.mxu0 0.0
    %1984 = vmatpush1.msra.mxu0 0.0
    %1985 = vmatprep.subr.mxu0 0.0
    %1986 = vmatpush1.msra.mxu0 0.0
    %1987 = vmatprep.subr.mxu0 0.0
    %1988 = vmatpush1.msra.mxu0 0.0
    %1989 = vmatprep.subr.mxu0 0.0
    %1990 = vmatpush1.msra.mxu0 0.0
    %1991 = vmatprep.subr.mxu0 0.0
    %1992 = vmatpush1.msra.mxu0 0.0
    %1993 = vmatprep.subr.mxu0 0.0
    %1994 = vmatpush1.msra.mxu0 0.0
    %1995 = vmatprep.subr.mxu0 0.0
    %1996 = vmatpush1.msra.mxu0 0.0
    %1997 = vmatprep.subr.mxu0 0.0
    %1998 = vmatpush1.msra.mxu0 0.0
    %1999 = vmatprep.subr.mxu0 0.0
    %2000 = vmatpush1.msra.mxu0 0.0
    %2001 = vmatprep.subr.mxu0 0.0
    %2002 = vmatpush1.msra.mxu0 0.0
    %2003 = vmatprep.subr.mxu0 0.0
    %2004 = vmatpush1.msra.mxu0 0.0
    %2005 = vmatprep.subr.mxu0 0.0
    %2006 = vmatpush1.msra.mxu0 0.0
    %2007 = vmatprep.subr.mxu0 0.0
    %2008 = vmatpush1.msra.mxu0 0.0
    %2009 = vmatprep.subr.mxu0 0.0
    %2010 = vmatpush1.msra.mxu0 0.0
    %2011 = vmatprep.mubr.f32.mxu0 0.0
    %2012 = vmatmul.mubr.f32.gmra.mrb[0].mxu0 %v651
    %v2013 = vpop.f32.mrb[0].mxu0
    %v2014 = vadd.f32 0.0, %v2013
    %v2015 = vpop.f32.mrb[0].mxu0
    %2016 = vmatprep.mubr.f32.mxu0 0.0
    %2017 = vmatmul.mubr.f32.gmra.mrb[0].mxu0 %v654
    %v2018 = vpop.f32.mrb[0].mxu0
    %v2019 = vadd.f32 0.0, %v2018
    %v2020 = vpop.f32.mrb[0].mxu0
    %2021 = vdwg.mxu0
    %v2022 = vmax.f32 %v1939, %v2014
    %v2023 = vmax.f32 %v1944, %v2019
    %v2025 = vsel %vm742, %v2022, 0
    %v2028 = vsel %vm742, %v2023, 0
    %2030 = vmatprep.subr.mxu0 0.0
    %2031 = vmatpush1.msra.mxu0 %v733
    %2032 = vmatprep.subr.mxu0 0.0
    %2033 = vmatpush1.msra.mxu0 %v734
    %2034 = vmatprep.subr.mxu0 0.0
    %2035 = vmatpush1.msra.mxu0 %v735
    %2036 = vmatprep.subr.mxu0 0.0
    %2037 = vmatpush1.msra.mxu0 %v736
    %2038 = vmatprep.subr.mxu0 0.0
    %2039 = vmatpush1.msra.mxu0 %v737
    %2040 = vmatprep.subr.mxu0 0.0
    %2041 = vmatpush1.msra.mxu0 %v738
    %2042 = vmatprep.subr.mxu0 0.0
    %2043 = vmatpush1.msra.mxu0 %v739
    %2044 = vmatprep.subr.mxu0 0.0
    %2045 = vmatpush1.msra.mxu0 %v740
    %2046 = vmatprep.subr.mxu0 0.0
    %2047 = vmatpush1.msra.mxu0 %v741
    %2048 = vmatprep.subr.mxu0 0.0
    %2049 = vmatpush1.msra.mxu0 0.0
    %2050 = vmatprep.subr.mxu0 0.0
    %2051 = vmatpush1.msra.mxu0 0.0
    %2052 = vmatprep.subr.mxu0 0.0
    %2053 = vmatpush1.msra.mxu0 0.0
    %2054 = vmatprep.subr.mxu0 0.0
    %2055 = vmatpush1.msra.mxu0 0.0
    %2056 = vmatprep.subr.mxu0 0.0
    %2057 = vmatpush1.msra.mxu0 0.0
    %2058 = vmatprep.subr.mxu0 0.0
    %2059 = vmatpush1.msra.mxu0 0.0
    %2060 = vmatprep.subr.mxu0 0.0
    %2061 = vmatpush1.msra.mxu0 0.0
    %2062 = vmatprep.subr.mxu0 0.0
    %2063 = vmatpush1.msra.mxu0 0.0
    %2064 = vmatprep.subr.mxu0 0.0
    %2065 = vmatpush1.msra.mxu0 0.0
    %2066 = vmatprep.subr.mxu0 0.0
    %2067 = vmatpush1.msra.mxu0 0.0
    %2068 = vmatprep.subr.mxu0 0.0
    %2069 = vmatpush1.msra.mxu0 0.0
    %2070 = vmatprep.subr.mxu0 0.0
    %2071 = vmatpush1.msra.mxu0 0.0
    %2072 = vmatprep.subr.mxu0 0.0
    %2073 = vmatpush1.msra.mxu0 0.0
    %2074 = vmatprep.subr.mxu0 0.0
    %2075 = vmatpush1.msra.mxu0 0.0
    %2076 = vmatprep.subr.mxu0 0.0
    %2077 = vmatpush1.msra.mxu0 0.0
    %2078 = vmatprep.subr.mxu0 0.0
    %2079 = vmatpush1.msra.mxu0 0.0
    %2080 = vmatprep.subr.mxu0 0.0
    %2081 = vmatpush1.msra.mxu0 0.0
    %2082 = vmatprep.subr.mxu0 0.0
    %2083 = vmatpush1.msra.mxu0 0.0
    %2084 = vmatprep.subr.mxu0 0.0
    %2085 = vmatpush1.msra.mxu0 0.0
    %2086 = vmatprep.subr.mxu0 0.0
    %2087 = vmatpush1.msra.mxu0 0.0
    %2088 = vmatprep.subr.mxu0 0.0
    %2089 = vmatpush1.msra.mxu0 0.0
    %2090 = vmatprep.subr.mxu0 0.0
    %2091 = vmatpush1.msra.mxu0 0.0
    %2092 = vmatprep.subr.mxu0 0.0
    %2093 = vmatpush1.msra.mxu0 0.0
    %2094 = vmatprep.mubr.f32.mxu0 0.0
    %2095 = vmatmul.mubr.f32.gmra.mrb[0].mxu0 %v2025
    %v2096 = vpop.f32.mrb[0].mxu0
    %v2097 = vadd.f32 0.0, %v2096
    %v2098 = vpop.f32.mrb[0].mxu0
    %2099 = vmatprep.mubr.f32.mxu0 0.0
    %2100 = vmatmul.mubr.f32.gmra.mrb[0].mxu0 %v2028
    %v2101 = vpop.f32.mrb[0].mxu0
    %v2102 = vadd.f32 0.0, %v2101
    %v2103 = vpop.f32.mrb[0].mxu0
    %2104 = vdwg.mxu0
    %2105 = vmatprep.subr.mxu0 0.0
    %2106 = vmatpush1.msra.mxu0 %v825
    %2107 = vmatprep.subr.mxu0 0.0
    %2108 = vmatpush1.msra.mxu0 %v826
    %2109 = vmatprep.subr.mxu0 0.0
    %2110 = vmatpush1.msra.mxu0 %v827
    %2111 = vmatprep.subr.mxu0 0.0
    %2112 = vmatpush1.msra.mxu0 %v828
    %2113 = vmatprep.subr.mxu0 0.0
    %2114 = vmatpush1.msra.mxu0 %v829
    %2115 = vmatprep.subr.mxu0 0.0
    %2116 = vmatpush1.msra.mxu0 %v830
    %2117 = vmatprep.subr.mxu0 0.0
    %2118 = vmatpush1.msra.mxu0 %v831
    %2119 = vmatprep.subr.mxu0 0.0
    %2120 = vmatpush1.msra.mxu0 %v832
    %2121 = vmatprep.subr.mxu0 0.0
    %2122 = vmatpush1.msra.mxu0 %v833
    %2123 = vmatprep.subr.mxu0 0.0
    %2124 = vmatpush1.msra.mxu0 0.0
    %2125 = vmatprep.subr.mxu0 0.0
    %2126 = vmatpush1.msra.mxu0 0.0
    %2127 = vmatprep.subr.mxu0 0.0
    %2128 = vmatpush1.msra.mxu0 0.0
    %2129 = vmatprep.subr.mxu0 0.0
    %2130 = vmatpush1.msra.mxu0 0.0
    %2131 = vmatprep.subr.mxu0 0.0
    %2132 = vmatpush1.msra.mxu0 0.0
    %2133 = vmatprep.subr.mxu0 0.0
    %2134 = vmatpush1.msra.mxu0 0.0
    %2135 = vmatprep.subr.mxu0 0.0
    %2136 = vmatpush1.msra.mxu0 0.0
    %2137 = vmatprep.subr.mxu0 0.0
    %2138 = vmatpush1.msra.mxu0 0.0
    %2139 = vmatprep.subr.mxu0 0.0
    %2140 = vmatpush1.msra.mxu0 0.0
    %2141 = vmatprep.subr.mxu0 0.0
    %2142 = vmatpush1.msra.mxu0 0.0
    %2143 = vmatprep.subr.mxu0 0.0
    %2144 = vmatpush1.msra.mxu0 0.0
    %2145 = vmatprep.subr.mxu0 0.0
    %2146 = vmatpush1.msra.mxu0 0.0
    %2147 = vmatprep.subr.mxu0 0.0
    %2148 = vmatpush1.msra.mxu0 0.0
    %2149 = vmatprep.subr.mxu0 0.0
    %2150 = vmatpush1.msra.mxu0 0.0
    %2151 = vmatprep.subr.mxu0 0.0
    %2152 = vmatpush1.msra.mxu0 0.0
    %2153 = vmatprep.subr.mxu0 0.0
    %2154 = vmatpush1.msra.mxu0 0.0
    %2155 = vmatprep.subr.mxu0 0.0
    %2156 = vmatpush1.msra.mxu0 0.0
    %2157 = vmatprep.subr.mxu0 0.0
    %2158 = vmatpush1.msra.mxu0 0.0
    %2159 = vmatprep.subr.mxu0 0.0
    %2160 = vmatpush1.msra.mxu0 0.0
    %2161 = vmatprep.subr.mxu0 0.0
    %2162 = vmatpush1.msra.mxu0 0.0
    %2163 = vmatprep.subr.mxu0 0.0
    %2164 = vmatpush1.msra.mxu0 0.0
    %2165 = vmatprep.subr.mxu0 0.0
    %2166 = vmatpush1.msra.mxu0 0.0
    %2167 = vmatprep.subr.mxu0 0.0
    %2168 = vmatpush1.msra.mxu0 0.0
    %2169 = vmatprep.mubr.f32.mxu0 0.0
    %2170 = vmatmul.mubr.f32.gmra.mrb[0].mxu0 %v2025
    %v2171 = vpop.f32.mrb[0].mxu0
    %v2172 = vadd.f32 0.0, %v2171
    %v2173 = vpop.f32.mrb[0].mxu0
    %2174 = vmatprep.mubr.f32.mxu0 0.0
    %2175 = vmatmul.mubr.f32.gmra.mrb[0].mxu0 %v2028
    %v2176 = vpop.f32.mrb[0].mxu0
    %v2177 = vadd.f32 0.0, %v2176
    %v2178 = vpop.f32.mrb[0].mxu0
    %2179 = vdwg.mxu0
    %v2180 = vmax.f32 %v2097, %v2172
    %v2181 = vmax.f32 %v2102, %v2177
    %v2184 = vrot.slane %v2180, 1
    %v2185 = vrot.slane %v2181, 1
    %v2186 = vsel %vm934, %v2184, %v2185
    %v2187 = vsel %vm938, %v2186, 0
    %2189 = vmatprep.subr.mxu0 %v923
    %2190 = vmatpush1.msra.mxu0 %v922
    %2191 = vmatprep.subr.mxu0 %v925
    %2192 = vmatpush1.msra.mxu0 %v924
    %2193 = vmatprep.subr.mxu0 %v927
    %2194 = vmatpush1.msra.mxu0 %v926
    %2195 = vmatprep.subr.mxu0 %v929
    %2196 = vmatpush1.msra.mxu0 %v928
    %2197 = vmatprep.subr.mxu0 %v946
    %2198 = vmatpush1.msra.mxu0 %v943
    %2199 = vmatprep.subr.mxu0 0.0
    %2200 = vmatpush1.msra.mxu0 0.0
    %2201 = vmatprep.subr.mxu0 0.0
    %2202 = vmatpush1.msra.mxu0 0.0
    %2203 = vmatprep.subr.mxu0 0.0
    %2204 = vmatpush1.msra.mxu0 0.0
    %2205 = vmatprep.subr.mxu0 0.0
    %2206 = vmatpush1.msra.mxu0 0.0
    %2207 = vmatprep.subr.mxu0 0.0
    %2208 = vmatpush1.msra.mxu0 0.0
    %2209 = vmatprep.subr.mxu0 0.0
    %2210 = vmatpush1.msra.mxu0 0.0
    %2211 = vmatprep.subr.mxu0 0.0
    %2212 = vmatpush1.msra.mxu0 0.0
    %2213 = vmatprep.subr.mxu0 0.0
    %2214 = vmatpush1.msra.mxu0 0.0
    %2215 = vmatprep.subr.mxu0 0.0
    %2216 = vmatpush1.msra.mxu0 0.0
    %2217 = vmatprep.subr.mxu0 0.0
    %2218 = vmatpush1.msra.mxu0 0.0
    %2219 = vmatprep.subr.mxu0 0.0
    %2220 = vmatpush1.msra.mxu0 0.0
    %2221 = vmatprep.subr.mxu0 0.0
    %2222 = vmatpush1.msra.mxu0 0.0
    %2223 = vmatprep.subr.mxu0 0.0
    %2224 = vmatpush1.msra.mxu0 0.0
    %2225 = vmatprep.subr.mxu0 0.0
    %2226 = vmatpush1.msra.mxu0 0.0
    %2227 = vmatprep.subr.mxu0 0.0
    %2228 = vmatpush1.msra.mxu0 0.0
    %2229 = vmatprep.subr.mxu0 0.0
    %2230 = vmatpush1.msra.mxu0 0.0
    %2231 = vmatprep.subr.mxu0 0.0
    %2232 = vmatpush1.msra.mxu0 0.0
    %2233 = vmatprep.subr.mxu0 0.0
    %2234 = vmatpush1.msra.mxu0 0.0
    %2235 = vmatprep.subr.mxu0 0.0
    %2236 = vmatpush1.msra.mxu0 0.0
    %2237 = vmatprep.subr.mxu0 0.0
    %2238 = vmatpush1.msra.mxu0 0.0
    %2239 = vmatprep.subr.mxu0 0.0
    %2240 = vmatpush1.msra.mxu0 0.0
    %2241 = vmatprep.subr.mxu0 0.0
    %2242 = vmatpush1.msra.mxu0 0.0
    %2243 = vmatprep.subr.mxu0 0.0
    %2244 = vmatpush1.msra.mxu0 0.0
    %2245 = vmatprep.subr.mxu0 0.0
    %2246 = vmatpush1.msra.mxu0 0.0
    %2247 = vmatprep.subr.mxu0 0.0
    %2248 = vmatpush1.msra.mxu0 0.0
    %2249 = vmatprep.subr.mxu0 0.0
    %2250 = vmatpush1.msra.mxu0 0.0
    %2251 = vmatprep.subr.mxu0 0.0
    %2252 = vmatpush1.msra.mxu0 0.0
    %2253 = vmatprep.mubr.f32.mxu0 0.0
    %2254 = vmatmul.mubr.f32.gmra.mrb[0].mxu0 %v2187
    %v2255 = vpop.f32.mrb[0].mxu0
    %v2256 = vadd.f32 0.0, %v2255
    %v2257 = vpop.f32.mrb[0].mxu0
    %v2258 = vadd.f32 0.0, %v2257
    %2259 = vdwg.mxu0
    %v2260 = vrot.slane %v2180, 3
    %v2261 = vrot.slane %v2181, 3
    %v2262 = vsel %vm1041, %v2260, %v2261
    %v2263 = vsel %vm938, %v2262, 0
    %2265 = vmatprep.subr.mxu0 %v1032
    %2266 = vmatpush1.msra.mxu0 %v1031
    %2267 = vmatprep.subr.mxu0 %v1034
    %2268 = vmatpush1.msra.mxu0 %v1033
    %2269 = vmatprep.subr.mxu0 %v1036
    %2270 = vmatpush1.msra.mxu0 %v1035
    %2271 = vmatprep.subr.mxu0 %v1038
    %2272 = vmatpush1.msra.mxu0 %v1037
    %2273 = vmatprep.subr.mxu0 %v1051
    %2274 = vmatpush1.msra.mxu0 %v1048
    %2275 = vmatprep.subr.mxu0 0.0
    %2276 = vmatpush1.msra.mxu0 0.0
    %2277 = vmatprep.subr.mxu0 0.0
    %2278 = vmatpush1.msra.mxu0 0.0
    %2279 = vmatprep.subr.mxu0 0.0
    %2280 = vmatpush1.msra.mxu0 0.0
    %2281 = vmatprep.subr.mxu0 0.0
    %2282 = vmatpush1.msra.mxu0 0.0
    %2283 = vmatprep.subr.mxu0 0.0
    %2284 = vmatpush1.msra.mxu0 0.0
    %2285 = vmatprep.subr.mxu0 0.0
    %2286 = vmatpush1.msra.mxu0 0.0
    %2287 = vmatprep.subr.mxu0 0.0
    %2288 = vmatpush1.msra.mxu0 0.0
    %2289 = vmatprep.subr.mxu0 0.0
    %2290 = vmatpush1.msra.mxu0 0.0
    %2291 = vmatprep.subr.mxu0 0.0
    %2292 = vmatpush1.msra.mxu0 0.0
    %2293 = vmatprep.subr.mxu0 0.0
    %2294 = vmatpush1.msra.mxu0 0.0
    %2295 = vmatprep.subr.mxu0 0.0
    %2296 = vmatpush1.msra.mxu0 0.0
    %2297 = vmatprep.subr.mxu0 0.0
    %2298 = vmatpush1.msra.mxu0 0.0
    %2299 = vmatprep.subr.mxu0 0.0
    %2300 = vmatpush1.msra.mxu0 0.0
    %2301 = vmatprep.subr.mxu0 0.0
    %2302 = vmatpush1.msra.mxu0 0.0
    %2303 = vmatprep.subr.mxu0 0.0
    %2304 = vmatpush1.msra.mxu0 0.0
    %2305 = vmatprep.subr.mxu0 0.0
    %2306 = vmatpush1.msra.mxu0 0.0
    %2307 = vmatprep.subr.mxu0 0.0
    %2308 = vmatpush1.msra.mxu0 0.0
    %2309 = vmatprep.subr.mxu0 0.0
    %2310 = vmatpush1.msra.mxu0 0.0
    %2311 = vmatprep.subr.mxu0 0.0
    %2312 = vmatpush1.msra.mxu0 0.0
    %2313 = vmatprep.subr.mxu0 0.0
    %2314 = vmatpush1.msra.mxu0 0.0
    %2315 = vmatprep.subr.mxu0 0.0
    %2316 = vmatpush1.msra.mxu0 0.0
    %2317 = vmatprep.subr.mxu0 0.0
    %2318 = vmatpush1.msra.mxu0 0.0
    %2319 = vmatprep.subr.mxu0 0.0
    %2320 = vmatpush1.msra.mxu0 0.0
    %2321 = vmatprep.subr.mxu0 0.0
    %2322 = vmatpush1.msra.mxu0 0.0
    %2323 = vmatprep.subr.mxu0 0.0
    %2324 = vmatpush1.msra.mxu0 0.0
    %2325 = vmatprep.subr.mxu0 0.0
    %2326 = vmatpush1.msra.mxu0 0.0
    %2327 = vmatprep.subr.mxu0 0.0
    %2328 = vmatpush1.msra.mxu0 0.0
    %2329 = vmatprep.mubr.f32.mxu0 0.0
    %2330 = vmatmul.mubr.f32.gmra.mrb[0].mxu0 %v2263
    %v2331 = vpop.f32.mrb[0].mxu0
    %v2332 = vadd.f32 0.0, %v2331
    %v2333 = vpop.f32.mrb[0].mxu0
    %v2334 = vadd.f32 0.0, %v2333
    %2335 = vdwg.mxu0
    %v2336 = vrot.slane %v2180, 4
    %v2337 = vrot.slane %v2181, 4
    %v2338 = vsel %vm941, %v2336, %v2337
    %v2339 = vsel %vm938, %v2338, 0
    %2341 = vmatprep.subr.mxu0 %v1126
    %2342 = vmatpush1.msra.mxu0 %v1125
    %2343 = vmatprep.subr.mxu0 %v1128
    %2344 = vmatpush1.msra.mxu0 %v1127
    %2345 = vmatprep.subr.mxu0 %v1130
    %2346 = vmatpush1.msra.mxu0 %v1129
    %2347 = vmatprep.subr.mxu0 %v1132
    %2348 = vmatpush1.msra.mxu0 %v1131
    %2349 = vmatprep.subr.mxu0 %v1144
    %2350 = vmatpush1.msra.mxu0 %v1141
    %2351 = vmatprep.subr.mxu0 0.0
    %2352 = vmatpush1.msra.mxu0 0.0
    %2353 = vmatprep.subr.mxu0 0.0
    %2354 = vmatpush1.msra.mxu0 0.0
    %2355 = vmatprep.subr.mxu0 0.0
    %2356 = vmatpush1.msra.mxu0 0.0
    %2357 = vmatprep.subr.mxu0 0.0
    %2358 = vmatpush1.msra.mxu0 0.0
    %2359 = vmatprep.subr.mxu0 0.0
    %2360 = vmatpush1.msra.mxu0 0.0
    %2361 = vmatprep.subr.mxu0 0.0
    %2362 = vmatpush1.msra.mxu0 0.0
    %2363 = vmatprep.subr.mxu0 0.0
    %2364 = vmatpush1.msra.mxu0 0.0
    %2365 = vmatprep.subr.mxu0 0.0
    %2366 = vmatpush1.msra.mxu0 0.0
    %2367 = vmatprep.subr.mxu0 0.0
    %2368 = vmatpush1.msra.mxu0 0.0
    %2369 = vmatprep.subr.mxu0 0.0
    %2370 = vmatpush1.msra.mxu0 0.0
    %2371 = vmatprep.subr.mxu0 0.0
    %2372 = vmatpush1.msra.mxu0 0.0
    %2373 = vmatprep.subr.mxu0 0.0
    %2374 = vmatpush1.msra.mxu0 0.0
    %2375 = vmatprep.subr.mxu0 0.0
    %2376 = vmatpush1.msra.mxu0 0.0
    %2377 = vmatprep.subr.mxu0 0.0
    %2378 = vmatpush1.msra.mxu0 0.0
    %2379 = vmatprep.subr.mxu0 0.0
    %2380 = vmatpush1.msra.mxu0 0.0
    %2381 = vmatprep.subr.mxu0 0.0
    %2382 = vmatpush1.msra.mxu0 0.0
    %2383 = vmatprep.subr.mxu0 0.0
    %2384 = vmatpush1.msra.mxu0 0.0
    %2385 = vmatprep.subr.mxu0 0.0
    %2386 = vmatpush1.msra.mxu0 0.0
    %2387 = vmatprep.subr.mxu0 0.0
    %2388 = vmatpush1.msra.mxu0 0.0
    %2389 = vmatprep.subr.mxu0 0.0
    %2390 = vmatpush1.msra.mxu0 0.0
    %2391 = vmatprep.subr.mxu0 0.0
    %2392 = vmatpush1.msra.mxu0 0.0
    %2393 = vmatprep.subr.mxu0 0.0
    %2394 = vmatpush1.msra.mxu0 0.0
    %2395 = vmatprep.subr.mxu0 0.0
    %2396 = vmatpush1.msra.mxu0 0.0
    %2397 = vmatprep.subr.mxu0 0.0
    %2398 = vmatpush1.msra.mxu0 0.0
    %2399 = vmatprep.subr.mxu0 0.0
    %2400 = vmatpush1.msra.mxu0 0.0
    %2401 = vmatprep.subr.mxu0 0.0
    %2402 = vmatpush1.msra.mxu0 0.0
    %2403 = vmatprep.subr.mxu0 0.0
    %2404 = vmatpush1.msra.mxu0 0.0
    %2405 = vmatprep.mubr.f32.mxu0 0.0
    %2406 = vmatmul.mubr.f32.gmra.mrb[0].mxu0 %v2339
    %v2407 = vpop.f32.mrb[0].mxu0
    %v2408 = vadd.f32 0.0, %v2407
    %v2409 = vpop.f32.mrb[0].mxu0
    %v2410 = vadd.f32 0.0, %v2409
    %2411 = vdwg.mxu0
    %v2412 = vsel %vm938, %v2180, 0
    %2414 = vmatprep.subr.mxu0 %v912
    %2415 = vmatpush1.msra.mxu0 %v911
    %2416 = vmatprep.subr.mxu0 %v914
    %2417 = vmatpush1.msra.mxu0 %v913
    %2418 = vmatprep.subr.mxu0 %v916
    %2419 = vmatpush1.msra.mxu0 %v915
    %2420 = vmatprep.subr.mxu0 %v918
    %2421 = vmatpush1.msra.mxu0 %v917
    %2422 = vmatprep.subr.mxu0 %v1223
    %2423 = vmatpush1.msra.mxu0 %v1220
    %2424 = vmatprep.subr.mxu0 0.0
    %2425 = vmatpush1.msra.mxu0 0.0
    %2426 = vmatprep.subr.mxu0 0.0
    %2427 = vmatpush1.msra.mxu0 0.0
    %2428 = vmatprep.subr.mxu0 0.0
    %2429 = vmatpush1.msra.mxu0 0.0
    %2430 = vmatprep.subr.mxu0 0.0
    %2431 = vmatpush1.msra.mxu0 0.0
    %2432 = vmatprep.subr.mxu0 0.0
    %2433 = vmatpush1.msra.mxu0 0.0
    %2434 = vmatprep.subr.mxu0 0.0
    %2435 = vmatpush1.msra.mxu0 0.0
    %2436 = vmatprep.subr.mxu0 0.0
    %2437 = vmatpush1.msra.mxu0 0.0
    %2438 = vmatprep.subr.mxu0 0.0
    %2439 = vmatpush1.msra.mxu0 0.0
    %2440 = vmatprep.subr.mxu0 0.0
    %2441 = vmatpush1.msra.mxu0 0.0
    %2442 = vmatprep.subr.mxu0 0.0
    %2443 = vmatpush1.msra.mxu0 0.0
    %2444 = vmatprep.subr.mxu0 0.0
    %2445 = vmatpush1.msra.mxu0 0.0
    %2446 = vmatprep.subr.mxu0 0.0
    %2447 = vmatpush1.msra.mxu0 0.0
    %2448 = vmatprep.subr.mxu0 0.0
    %2449 = vmatpush1.msra.mxu0 0.0
    %2450 = vmatprep.subr.mxu0 0.0
    %2451 = vmatpush1.msra.mxu0 0.0
    %2452 = vmatprep.subr.mxu0 0.0
    %2453 = vmatpush1.msra.mxu0 0.0
    %2454 = vmatprep.subr.mxu0 0.0
    %2455 = vmatpush1.msra.mxu0 0.0
    %2456 = vmatprep.subr.mxu0 0.0
    %2457 = vmatpush1.msra.mxu0 0.0
    %2458 = vmatprep.subr.mxu0 0.0
    %2459 = vmatpush1.msra.mxu0 0.0
    %2460 = vmatprep.subr.mxu0 0.0
    %2461 = vmatpush1.msra.mxu0 0.0
    %2462 = vmatprep.subr.mxu0 0.0
    %2463 = vmatpush1.msra.mxu0 0.0
    %2464 = vmatprep.subr.mxu0 0.0
    %2465 = vmatpush1.msra.mxu0 0.0
    %2466 = vmatprep.subr.mxu0 0.0
    %2467 = vmatpush1.msra.mxu0 0.0
    %2468 = vmatprep.subr.mxu0 0.0
    %2469 = vmatpush1.msra.mxu0 0.0
    %2470 = vmatprep.subr.mxu0 0.0
    %2471 = vmatpush1.msra.mxu0 0.0
    %2472 = vmatprep.subr.mxu0 0.0
    %2473 = vmatpush1.msra.mxu0 0.0
    %2474 = vmatprep.subr.mxu0 0.0
    %2475 = vmatpush1.msra.mxu0 0.0
    %2476 = vmatprep.subr.mxu0 0.0
    %2477 = vmatpush1.msra.mxu0 0.0
    %2478 = vmatprep.mubr.f32.mxu0 0.0
    %2479 = vmatmul.mubr.f32.gmra.mrb[0].mxu0 %v2412
    %v2480 = vpop.f32.mrb[0].mxu0
    %v2481 = vadd.f32 %v2256, %v2480
    %v2482 = vpop.f32.mrb[0].mxu0
    %v2483 = vadd.f32 %v2258, %v2482
    %2484 = vdwg.mxu0
    %v2485 = vrot.slane %v2180, 2
    %v2486 = vrot.slane %v2181, 2
    %v2487 = vsel %vm1296, %v2485, %v2486
    %v2488 = vsel %vm938, %v2487, 0
    %2490 = vmatprep.subr.mxu0 %v1021
    %2491 = vmatpush1.msra.mxu0 %v1020
    %2492 = vmatprep.subr.mxu0 %v1023
    %2493 = vmatpush1.msra.mxu0 %v1022
    %2494 = vmatprep.subr.mxu0 %v1025
    %2495 = vmatpush1.msra.mxu0 %v1024
    %2496 = vmatprep.subr.mxu0 %v1027
    %2497 = vmatpush1.msra.mxu0 %v1026
    %2498 = vmatprep.subr.mxu0 %v1306
    %2499 = vmatpush1.msra.mxu0 %v1303
    %2500 = vmatprep.subr.mxu0 0.0
    %2501 = vmatpush1.msra.mxu0 0.0
    %2502 = vmatprep.subr.mxu0 0.0
    %2503 = vmatpush1.msra.mxu0 0.0
    %2504 = vmatprep.subr.mxu0 0.0
    %2505 = vmatpush1.msra.mxu0 0.0
    %2506 = vmatprep.subr.mxu0 0.0
    %2507 = vmatpush1.msra.mxu0 0.0
    %2508 = vmatprep.subr.mxu0 0.0
    %2509 = vmatpush1.msra.mxu0 0.0
    %2510 = vmatprep.subr.mxu0 0.0
    %2511 = vmatpush1.msra.mxu0 0.0
    %2512 = vmatprep.subr.mxu0 0.0
    %2513 = vmatpush1.msra.mxu0 0.0
    %2514 = vmatprep.subr.mxu0 0.0
    %2515 = vmatpush1.msra.mxu0 0.0
    %2516 = vmatprep.subr.mxu0 0.0
    %2517 = vmatpush1.msra.mxu0 0.0
    %2518 = vmatprep.subr.mxu0 0.0
    %2519 = vmatpush1.msra.mxu0 0.0
    %2520 = vmatprep.subr.mxu0 0.0
    %2521 = vmatpush1.msra.mxu0 0.0
    %2522 = vmatprep.subr.mxu0 0.0
    %2523 = vmatpush1.msra.mxu0 0.0
    %2524 = vmatprep.subr.mxu0 0.0
    %2525 = vmatpush1.msra.mxu0 0.0
    %2526 = vmatprep.subr.mxu0 0.0
    %2527 = vmatpush1.msra.mxu0 0.0
    %2528 = vmatprep.subr.mxu0 0.0
    %2529 = vmatpush1.msra.mxu0 0.0
    %2530 = vmatprep.subr.mxu0 0.0
    %2531 = vmatpush1.msra.mxu0 0.0
    %2532 = vmatprep.subr.mxu0 0.0
    %2533 = vmatpush1.msra.mxu0 0.0
    %2534 = vmatprep.subr.mxu0 0.0
    %2535 = vmatpush1.msra.mxu0 0.0
    %2536 = vmatprep.subr.mxu0 0.0
    %2537 = vmatpush1.msra.mxu0 0.0
    %2538 = vmatprep.subr.mxu0 0.0
    %2539 = vmatpush1.msra.mxu0 0.0
    %2540 = vmatprep.subr.mxu0 0.0
    %2541 = vmatpush1.msra.mxu0 0.0
    %2542 = vmatprep.subr.mxu0 0.0
    %2543 = vmatpush1.msra.mxu0 0.0
    %2544 = vmatprep.subr.mxu0 0.0
    %2545 = vmatpush1.msra.mxu0 0.0
    %2546 = vmatprep.subr.mxu0 0.0
    %2547 = vmatpush1.msra.mxu0 0.0
    %2548 = vmatprep.subr.mxu0 0.0
    %2549 = vmatpush1.msra.mxu0 0.0
    %2550 = vmatprep.subr.mxu0 0.0
    %2551 = vmatpush1.msra.mxu0 0.0
    %2552 = vmatprep.subr.mxu0 0.0
    %2553 = vmatpush1.msra.mxu0 0.0
    %2554 = vmatprep.mubr.f32.mxu0 0.0
    %2555 = vmatmul.mubr.f32.gmra.mrb[0].mxu0 %v2488
    %v2556 = vpop.f32.mrb[0].mxu0
    %v2557 = vadd.f32 %v2332, %v2556
    %v2558 = vpop.f32.mrb[0].mxu0
    %v2559 = vadd.f32 %v2334, %v2558
    %2560 = vdwg.mxu0
    %v2561 = vadd.f32 %v2481, %v2557
    %v2562 = vadd.f32 %v2483, %v2559
    %v2563 = vadd.f32 %v2561, %v2408
    %v2564 = vadd.f32 %v2562, %v2410
    %v2565 = vadd.f32 %v2563, %v1388
    %v2566 = vadd.f32 %v2564, %v1392
    %v2567 = vmax.f32 %v2565, 0.0
    %v2568 = vmax.f32 %v2566, 0.0
    %s2569 = smul.u32 8, 224
    %s2570 = smul.u32 %s2569, 1
    %s2571 = sshll.u32 %s2570, 4
    %2572 = dma.done [#allocation3], %s2571
    %v2573 = vld [vmem:[#allocation2] sm:$0xff]
    %v2574 = vld [vmem:[#allocation2 + $0x8] sm:$0xff]
    %v2575 = vld [vmem:[#allocation2 + $0x10] sm:$0xff]
    %v2576 = vld [vmem:[#allocation2 + $0x18] sm:$0xff]
    %v2577 = vld [vmem:[#allocation2 + $0x20] sm:$0xff]
    %v2578 = vld [vmem:[#allocation2 + $0x28] sm:$0xff]
    %v2579 = vld [vmem:[#allocation2 + $0x30] sm:$0xff]
    %v2580 = vld [vmem:[#allocation2 + $0x38] sm:$0xff]
    %v2581 = vld [vmem:[#allocation2 + $0x40] sm:$0xff]
    %v2582 = vld [vmem:[#allocation2 + $0x48] sm:$0xff]
    %v2583 = vld [vmem:[#allocation2 + $0x50] sm:$0xff]
    %v2584 = vld [vmem:[#allocation2 + $0x58] sm:$0xff]
    %v2585 = vld [vmem:[#allocation2 + $0x60] sm:$0xff]
    %v2586 = vld [vmem:[#allocation2 + $0x68] sm:$0xff]
    %v2587 = vld [vmem:[#allocation2 + $0x70] sm:$0xff]
    %v2588 = vld [vmem:[#allocation2 + $0x78] sm:$0xff]
    %v2589 = vld [vmem:[#allocation2 + $0x80] sm:$0xff]
    %v2590 = vld [vmem:[#allocation2 + $0x88] sm:$0xff]
    %v2591 = vld [vmem:[#allocation2 + $0x90] sm:$0xff]
    %v2592 = vld [vmem:[#allocation2 + $0x98] sm:$0xff]
    %v2593 = vld [vmem:[#allocation2 + $0xa0] sm:$0xff]
    %v2594 = vld [vmem:[#allocation2 + $0xa8] sm:$0xff]
    %v2595 = vld [vmem:[#allocation2 + $0xb0] sm:$0xff]
    %v2596 = vld [vmem:[#allocation2 + $0xb8] sm:$0xff]
    %v2597 = vld [vmem:[#allocation2 + $0xc0] sm:$0xff]
    %v2598 = vld [vmem:[#allocation2 + $0xc8] sm:$0xff]
    %v2599 = vld [vmem:[#allocation2 + $0xd0] sm:$0xff]
    %v2600 = vld [vmem:[#allocation2 + $0xd8] sm:$0xff]
    %s2601 = scalar_lea.vmem [#allocation2], 224
    %v2602 = vld [vmem:[%s2601] sm:$0xff]
    %v2603 = vld [vmem:[%s2601 + $0x8] sm:$0xff]
    %v2604 = vld [vmem:[%s2601 + $0x10] sm:$0xff]
    %v2605 = vld [vmem:[%s2601 + $0x18] sm:$0xff]
    %v2606 = vld [vmem:[%s2601 + $0x20] sm:$0xff]
    %v2607 = vld [vmem:[%s2601 + $0x28] sm:$0xff]
    %v2608 = vld [vmem:[%s2601 + $0x30] sm:$0xff]
    %v2609 = vld [vmem:[%s2601 + $0x38] sm:$0xff]
    %v2610 = vld [vmem:[%s2601 + $0x40] sm:$0xff]
    %v2611 = vld [vmem:[%s2601 + $0x48] sm:$0xff]
    %v2612 = vld [vmem:[%s2601 + $0x50] sm:$0xff]
    %v2613 = vld [vmem:[%s2601 + $0x58] sm:$0xff]
    %v2614 = vld [vmem:[%s2601 + $0x60] sm:$0xff]
    %v2615 = vld [vmem:[%s2601 + $0x68] sm:$0xff]
    %v2616 = vld [vmem:[%s2601 + $0x70] sm:$0xff]
    %v2617 = vld [vmem:[%s2601 + $0x78] sm:$0xff]
    %v2618 = vld [vmem:[%s2601 + $0x80] sm:$0xff]
    %v2619 = vld [vmem:[%s2601 + $0x88] sm:$0xff]
    %v2620 = vld [vmem:[%s2601 + $0x90] sm:$0xff]
    %v2621 = vld [vmem:[%s2601 + $0x98] sm:$0xff]
    %v2622 = vld [vmem:[%s2601 + $0xa0] sm:$0xff]
    %v2623 = vld [vmem:[%s2601 + $0xa8] sm:$0xff]
    %v2624 = vld [vmem:[%s2601 + $0xb0] sm:$0xff]
    %v2625 = vld [vmem:[%s2601 + $0xb8] sm:$0xff]
    %v2626 = vld [vmem:[%s2601 + $0xc0] sm:$0xff]
    %v2627 = vld [vmem:[%s2601 + $0xc8] sm:$0xff]
    %v2628 = vld [vmem:[%s2601 + $0xd0] sm:$0xff]
    %v2629 = vld [vmem:[%s2601 + $0xd8] sm:$0xff]
    %v2632 = vrot.slane %v1397, 1
    %v2633 = vrot.slane %v1398, 1
    %vm2635 = vcmask 785408
    %v2636 = vsel %vm2635, %v2633, 0
    %2638 = vmatprep.subr.mxu0 0.0
    %2639 = vmatpush1.msra.mxu0 %v2602
    %2640 = vmatprep.subr.mxu0 0.0
    %2641 = vmatpush1.msra.mxu0 %v2603
    %2642 = vmatprep.subr.mxu0 0.0
    %2643 = vmatpush1.msra.mxu0 %v2604
    %2644 = vmatprep.subr.mxu0 0.0
    %2645 = vmatpush1.msra.mxu0 %v2605
    %2646 = vmatprep.subr.mxu0 0.0
    %2647 = vmatpush1.msra.mxu0 %v2606
    %2648 = vmatprep.subr.mxu0 0.0
    %2649 = vmatpush1.msra.mxu0 %v2607
    %2650 = vmatprep.subr.mxu0 0.0
    %2651 = vmatpush1.msra.mxu0 %v2608
    %2652 = vmatprep.subr.mxu0 0.0
    %2653 = vmatpush1.msra.mxu0 %v2609
    %2654 = vmatprep.subr.mxu0 0.0
    %2655 = vmatpush1.msra.mxu0 %v2610
    %2656 = vmatprep.subr.mxu0 0.0
    %2657 = vmatpush1.msra.mxu0 %v2611
    %2658 = vmatprep.subr.mxu0 0.0
    %2659 = vmatpush1.msra.mxu0 %v2612
    %2660 = vmatprep.subr.mxu0 0.0
    %2661 = vmatpush1.msra.mxu0 %v2613
    %2662 = vmatprep.subr.mxu0 0.0
    %2663 = vmatpush1.msra.mxu0 %v2614
    %2664 = vmatprep.subr.mxu0 0.0
    %2665 = vmatpush1.msra.mxu0 %v2615
    %2666 = vmatprep.subr.mxu0 0.0
    %2667 = vmatpush1.msra.mxu0 %v2616
    %2668 = vmatprep.subr.mxu0 0.0
    %2669 = vmatpush1.msra.mxu0 %v2617
    %2670 = vmatprep.subr.mxu0 0.0
    %2671 = vmatpush1.msra.mxu0 %v2618
    %2672 = vmatprep.subr.mxu0 0.0
    %2673 = vmatpush1.msra.mxu0 %v2619
    %2674 = vmatprep.subr.mxu0 0.0
    %2675 = vmatpush1.msra.mxu0 %v2620
    %2676 = vmatprep.subr.mxu0 0.0
    %2677 = vmatpush1.msra.mxu0 %v2621
    %2678 = vmatprep.subr.mxu0 0.0
    %2679 = vmatpush1.msra.mxu0 %v2622
    %2680 = vmatprep.subr.mxu0 0.0
    %2681 = vmatpush1.msra.mxu0 %v2623
    %2682 = vmatprep.subr.mxu0 0.0
    %2683 = vmatpush1.msra.mxu0 %v2624
    %2684 = vmatprep.subr.mxu0 0.0
    %2685 = vmatpush1.msra.mxu0 %v2625
    %2686 = vmatprep.subr.mxu0 0.0
    %2687 = vmatpush1.msra.mxu0 %v2626
    %2688 = vmatprep.subr.mxu0 0.0
    %2689 = vmatpush1.msra.mxu0 %v2627
    %2690 = vmatprep.subr.mxu0 0.0
    %2691 = vmatpush1.msra.mxu0 %v2628
    %2692 = vmatprep.subr.mxu0 0.0
    %2693 = vmatpush1.msra.mxu0 %v2629
    %2694 = vmatprep.subr.mxu0 0.0
    %2695 = vmatpush1.msra.mxu0 0.0
    %2696 = vmatprep.subr.mxu0 0.0
    %2697 = vmatpush1.msra.mxu0 0.0
    %2698 = vmatprep.subr.mxu0 0.0
    %2699 = vmatpush1.msra.mxu0 0.0
    %2700 = vmatprep.subr.mxu0 0.0
    %2701 = vmatpush1.msra.mxu0 0.0
    %2702 = vmatprep.mubr.f32.mxu0 %v2636
    %2703 = vmatmul.mubr.f32.gmra.mrb[0].mxu0 %v2632
    %v2704 = vpop.f32.mrb[0].mxu0
    %v2705 = vadd.f32 0.0, %v2704
    %v2706 = vpop.f32.mrb[0].mxu0
    %2707 = vdwg.mxu0
    %s2708 = scalar_lea.vmem [#allocation2], 448
    %v2709 = vld [vmem:[%s2708] sm:$0xff]
    %v2710 = vld [vmem:[%s2708 + $0x8] sm:$0xff]
    %v2711 = vld [vmem:[%s2708 + $0x10] sm:$0xff]
    %v2712 = vld [vmem:[%s2708 + $0x18] sm:$0xff]
    %v2713 = vld [vmem:[%s2708 + $0x20] sm:$0xff]
    %v2714 = vld [vmem:[%s2708 + $0x28] sm:$0xff]
    %v2715 = vld [vmem:[%s2708 + $0x30] sm:$0xff]
    %v2716 = vld [vmem:[%s2708 + $0x38] sm:$0xff]
    %v2717 = vld [vmem:[%s2708 + $0x40] sm:$0xff]
    %v2718 = vld [vmem:[%s2708 + $0x48] sm:$0xff]
    %v2719 = vld [vmem:[%s2708 + $0x50] sm:$0xff]
    %v2720 = vld [vmem:[%s2708 + $0x58] sm:$0xff]
    %v2721 = vld [vmem:[%s2708 + $0x60] sm:$0xff]
    %v2722 = vld [vmem:[%s2708 + $0x68] sm:$0xff]
    %v2723 = vld [vmem:[%s2708 + $0x70] sm:$0xff]
    %v2724 = vld [vmem:[%s2708 + $0x78] sm:$0xff]
    %v2725 = vld [vmem:[%s2708 + $0x80] sm:$0xff]
    %v2726 = vld [vmem:[%s2708 + $0x88] sm:$0xff]
    %v2727 = vld [vmem:[%s2708 + $0x90] sm:$0xff]
    %v2728 = vld [vmem:[%s2708 + $0x98] sm:$0xff]
    %v2729 = vld [vmem:[%s2708 + $0xa0] sm:$0xff]
    %v2730 = vld [vmem:[%s2708 + $0xa8] sm:$0xff]
    %v2731 = vld [vmem:[%s2708 + $0xb0] sm:$0xff]
    %v2732 = vld [vmem:[%s2708 + $0xb8] sm:$0xff]
    %v2733 = vld [vmem:[%s2708 + $0xc0] sm:$0xff]
    %v2734 = vld [vmem:[%s2708 + $0xc8] sm:$0xff]
    %v2735 = vld [vmem:[%s2708 + $0xd0] sm:$0xff]
    %v2736 = vld [vmem:[%s2708 + $0xd8] sm:$0xff]
    %s2737 = scalar_lea.vmem [#allocation2], 672
    %v2738 = vld [vmem:[%s2737] sm:$0xff]
    %v2739 = vld [vmem:[%s2737 + $0x8] sm:$0xff]
    %v2740 = vld [vmem:[%s2737 + $0x10] sm:$0xff]
    %v2741 = vld [vmem:[%s2737 + $0x18] sm:$0xff]
    %v2742 = vld [vmem:[%s2737 + $0x20] sm:$0xff]
    %v2743 = vld [vmem:[%s2737 + $0x28] sm:$0xff]
    %v2744 = vld [vmem:[%s2737 + $0x30] sm:$0xff]
    %v2745 = vld [vmem:[%s2737 + $0x38] sm:$0xff]
    %v2746 = vld [vmem:[%s2737 + $0x40] sm:$0xff]
    %v2747 = vld [vmem:[%s2737 + $0x48] sm:$0xff]
    %v2748 = vld [vmem:[%s2737 + $0x50] sm:$0xff]
    %v2749 = vld [vmem:[%s2737 + $0x58] sm:$0xff]
    %v2750 = vld [vmem:[%s2737 + $0x60] sm:$0xff]
    %v2751 = vld [vmem:[%s2737 + $0x68] sm:$0xff]
    %v2752 = vld [vmem:[%s2737 + $0x70] sm:$0xff]
    %v2753 = vld [vmem:[%s2737 + $0x78] sm:$0xff]
    %v2754 = vld [vmem:[%s2737 + $0x80] sm:$0xff]
    %v2755 = vld [vmem:[%s2737 + $0x88] sm:$0xff]
    %v2756 = vld [vmem:[%s2737 + $0x90] sm:$0xff]
    %v2757 = vld [vmem:[%s2737 + $0x98] sm:$0xff]
    %v2758 = vld [vmem:[%s2737 + $0xa0] sm:$0xff]
    %v2759 = vld [vmem:[%s2737 + $0xa8] sm:$0xff]
    %v2760 = vld [vmem:[%s2737 + $0xb0] sm:$0xff]
    %v2761 = vld [vmem:[%s2737 + $0xb8] sm:$0xff]
    %v2762 = vld [vmem:[%s2737 + $0xc0] sm:$0xff]
    %v2763 = vld [vmem:[%s2737 + $0xc8] sm:$0xff]
    %v2764 = vld [vmem:[%s2737 + $0xd0] sm:$0xff]
    %v2765 = vld [vmem:[%s2737 + $0xd8] sm:$0xff]
    %v2766 = vrot.slane %v1397, 3
    %v2767 = vrot.slane %v1398, 3
    %v2769 = vsel %vm2635, %v2767, 0
    %2771 = vmatprep.subr.mxu0 0.0
    %2772 = vmatpush1.msra.mxu0 %v2738
    %2773 = vmatprep.subr.mxu0 0.0
    %2774 = vmatpush1.msra.mxu0 %v2739
    %2775 = vmatprep.subr.mxu0 0.0
    %2776 = vmatpush1.msra.mxu0 %v2740
    %2777 = vmatprep.subr.mxu0 0.0
    %2778 = vmatpush1.msra.mxu0 %v2741
    %2779 = vmatprep.subr.mxu0 0.0
    %2780 = vmatpush1.msra.mxu0 %v2742
    %2781 = vmatprep.subr.mxu0 0.0
    %2782 = vmatpush1.msra.mxu0 %v2743
    %2783 = vmatprep.subr.mxu0 0.0
    %2784 = vmatpush1.msra.mxu0 %v2744
    %2785 = vmatprep.subr.mxu0 0.0
    %2786 = vmatpush1.msra.mxu0 %v2745
    %2787 = vmatprep.subr.mxu0 0.0
    %2788 = vmatpush1.msra.mxu0 %v2746
    %2789 = vmatprep.subr.mxu0 0.0
    %2790 = vmatpush1.msra.mxu0 %v2747
    %2791 = vmatprep.subr.mxu0 0.0
    %2792 = vmatpush1.msra.mxu0 %v2748
    %2793 = vmatprep.subr.mxu0 0.0
    %2794 = vmatpush1.msra.mxu0 %v2749
    %2795 = vmatprep.subr.mxu0 0.0
    %2796 = vmatpush1.msra.mxu0 %v2750
    %2797 = vmatprep.subr.mxu0 0.0
    %2798 = vmatpush1.msra.mxu0 %v2751
    %2799 = vmatprep.subr.mxu0 0.0
    %2800 = vmatpush1.msra.mxu0 %v2752
    %2801 = vmatprep.subr.mxu0 0.0
    %2802 = vmatpush1.msra.mxu0 %v2753
    %2803 = vmatprep.subr.mxu0 0.0
    %2804 = vmatpush1.msra.mxu0 %v2754
    %2805 = vmatprep.subr.mxu0 0.0
    %2806 = vmatpush1.msra.mxu0 %v2755
    %2807 = vmatprep.subr.mxu0 0.0
    %2808 = vmatpush1.msra.mxu0 %v2756
    %2809 = vmatprep.subr.mxu0 0.0
    %2810 = vmatpush1.msra.mxu0 %v2757
    %2811 = vmatprep.subr.mxu0 0.0
    %2812 = vmatpush1.msra.mxu0 %v2758
    %2813 = vmatprep.subr.mxu0 0.0
    %2814 = vmatpush1.msra.mxu0 %v2759
    %2815 = vmatprep.subr.mxu0 0.0
    %2816 = vmatpush1.msra.mxu0 %v2760
    %2817 = vmatprep.subr.mxu0 0.0
    %2818 = vmatpush1.msra.mxu0 %v2761
    %2819 = vmatprep.subr.mxu0 0.0
    %2820 = vmatpush1.msra.mxu0 %v2762
    %2821 = vmatprep.subr.mxu0 0.0
    %2822 = vmatpush1.msra.mxu0 %v2763
    %2823 = vmatprep.subr.mxu0 0.0
    %2824 = vmatpush1.msra.mxu0 %v2764
    %2825 = vmatprep.subr.mxu0 0.0
    %2826 = vmatpush1.msra.mxu0 %v2765
    %2827 = vmatprep.subr.mxu0 0.0
    %2828 = vmatpush1.msra.mxu0 0.0
    %2829 = vmatprep.subr.mxu0 0.0
    %2830 = vmatpush1.msra.mxu0 0.0
    %2831 = vmatprep.subr.mxu0 0.0
    %2832 = vmatpush1.msra.mxu0 0.0
    %2833 = vmatprep.subr.mxu0 0.0
    %2834 = vmatpush1.msra.mxu0 0.0
    %2835 = vmatprep.mubr.f32.mxu0 %v2769
    %2836 = vmatmul.mubr.f32.gmra.mrb[0].mxu0 %v2766
    %v2837 = vpop.f32.mrb[0].mxu0
    %v2838 = vadd.f32 0.0, %v2837
    %v2839 = vpop.f32.mrb[0].mxu0
    %2840 = vdwg.mxu0
    %s2841 = scalar_lea.vmem [#allocation2], 896
    %v2842 = vld [vmem:[%s2841] sm:$0xff]
    %v2843 = vld [vmem:[%s2841 + $0x8] sm:$0xff]
    %v2844 = vld [vmem:[%s2841 + $0x10] sm:$0xff]
    %v2845 = vld [vmem:[%s2841 + $0x18] sm:$0xff]
    %v2846 = vld [vmem:[%s2841 + $0x20] sm:$0xff]
    %v2847 = vld [vmem:[%s2841 + $0x28] sm:$0xff]
    %v2848 = vld [vmem:[%s2841 + $0x30] sm:$0xff]
    %v2849 = vld [vmem:[%s2841 + $0x38] sm:$0xff]
    %v2850 = vld [vmem:[%s2841 + $0x40] sm:$0xff]
    %v2851 = vld [vmem:[%s2841 + $0x48] sm:$0xff]
    %v2852 = vld [vmem:[%s2841 + $0x50] sm:$0xff]
    %v2853 = vld [vmem:[%s2841 + $0x58] sm:$0xff]
    %v2854 = vld [vmem:[%s2841 + $0x60] sm:$0xff]
    %v2855 = vld [vmem:[%s2841 + $0x68] sm:$0xff]
    %v2856 = vld [vmem:[%s2841 + $0x70] sm:$0xff]
    %v2857 = vld [vmem:[%s2841 + $0x78] sm:$0xff]
    %v2858 = vld [vmem:[%s2841 + $0x80] sm:$0xff]
    %v2859 = vld [vmem:[%s2841 + $0x88] sm:$0xff]
    %v2860 = vld [vmem:[%s2841 + $0x90] sm:$0xff]
    %v2861 = vld [vmem:[%s2841 + $0x98] sm:$0xff]
    %v2862 = vld [vmem:[%s2841 + $0xa0] sm:$0xff]
    %v2863 = vld [vmem:[%s2841 + $0xa8] sm:$0xff]
    %v2864 = vld [vmem:[%s2841 + $0xb0] sm:$0xff]
    %v2865 = vld [vmem:[%s2841 + $0xb8] sm:$0xff]
    %v2866 = vld [vmem:[%s2841 + $0xc0] sm:$0xff]
    %v2867 = vld [vmem:[%s2841 + $0xc8] sm:$0xff]
    %v2868 = vld [vmem:[%s2841 + $0xd0] sm:$0xff]
    %v2869 = vld [vmem:[%s2841 + $0xd8] sm:$0xff]
    %s2870 = scalar_lea.vmem [#allocation2], 1120
    %v2871 = vld [vmem:[%s2870] sm:$0xff]
    %v2872 = vld [vmem:[%s2870 + $0x8] sm:$0xff]
    %v2873 = vld [vmem:[%s2870 + $0x10] sm:$0xff]
    %v2874 = vld [vmem:[%s2870 + $0x18] sm:$0xff]
    %v2875 = vld [vmem:[%s2870 + $0x20] sm:$0xff]
    %v2876 = vld [vmem:[%s2870 + $0x28] sm:$0xff]
    %v2877 = vld [vmem:[%s2870 + $0x30] sm:$0xff]
    %v2878 = vld [vmem:[%s2870 + $0x38] sm:$0xff]
    %v2879 = vld [vmem:[%s2870 + $0x40] sm:$0xff]
    %v2880 = vld [vmem:[%s2870 + $0x48] sm:$0xff]
    %v2881 = vld [vmem:[%s2870 + $0x50] sm:$0xff]
    %v2882 = vld [vmem:[%s2870 + $0x58] sm:$0xff]
    %v2883 = vld [vmem:[%s2870 + $0x60] sm:$0xff]
    %v2884 = vld [vmem:[%s2870 + $0x68] sm:$0xff]
    %v2885 = vld [vmem:[%s2870 + $0x70] sm:$0xff]
    %v2886 = vld [vmem:[%s2870 + $0x78] sm:$0xff]
    %v2887 = vld [vmem:[%s2870 + $0x80] sm:$0xff]
    %v2888 = vld [vmem:[%s2870 + $0x88] sm:$0xff]
    %v2889 = vld [vmem:[%s2870 + $0x90] sm:$0xff]
    %v2890 = vld [vmem:[%s2870 + $0x98] sm:$0xff]
    %v2891 = vld [vmem:[%s2870 + $0xa0] sm:$0xff]
    %v2892 = vld [vmem:[%s2870 + $0xa8] sm:$0xff]
    %v2893 = vld [vmem:[%s2870 + $0xb0] sm:$0xff]
    %v2894 = vld [vmem:[%s2870 + $0xb8] sm:$0xff]
    %v2895 = vld [vmem:[%s2870 + $0xc0] sm:$0xff]
    %v2896 = vld [vmem:[%s2870 + $0xc8] sm:$0xff]
    %v2897 = vld [vmem:[%s2870 + $0xd0] sm:$0xff]
    %v2898 = vld [vmem:[%s2870 + $0xd8] sm:$0xff]
    %v2899 = vrot.slane %v1397, 5
    %v2900 = vrot.slane %v1398, 5
    %v2902 = vsel %vm2635, %v2900, 0
    %2904 = vmatprep.subr.mxu0 0.0
    %2905 = vmatpush1.msra.mxu0 %v2871
    %2906 = vmatprep.subr.mxu0 0.0
    %2907 = vmatpush1.msra.mxu0 %v2872
    %2908 = vmatprep.subr.mxu0 0.0
    %2909 = vmatpush1.msra.mxu0 %v2873
    %2910 = vmatprep.subr.mxu0 0.0
    %2911 = vmatpush1.msra.mxu0 %v2874
    %2912 = vmatprep.subr.mxu0 0.0
    %2913 = vmatpush1.msra.mxu0 %v2875
    %2914 = vmatprep.subr.mxu0 0.0
    %2915 = vmatpush1.msra.mxu0 %v2876
    %2916 = vmatprep.subr.mxu0 0.0
    %2917 = vmatpush1.msra.mxu0 %v2877
    %2918 = vmatprep.subr.mxu0 0.0
    %2919 = vmatpush1.msra.mxu0 %v2878
    %2920 = vmatprep.subr.mxu0 0.0
    %2921 = vmatpush1.msra.mxu0 %v2879
    %2922 = vmatprep.subr.mxu0 0.0
    %2923 = vmatpush1.msra.mxu0 %v2880
    %2924 = vmatprep.subr.mxu0 0.0
    %2925 = vmatpush1.msra.mxu0 %v2881
    %2926 = vmatprep.subr.mxu0 0.0
    %2927 = vmatpush1.msra.mxu0 %v2882
    %2928 = vmatprep.subr.mxu0 0.0
    %2929 = vmatpush1.msra.mxu0 %v2883
    %2930 = vmatprep.subr.mxu0 0.0
    %2931 = vmatpush1.msra.mxu0 %v2884
    %2932 = vmatprep.subr.mxu0 0.0
    %2933 = vmatpush1.msra.mxu0 %v2885
    %2934 = vmatprep.subr.mxu0 0.0
    %2935 = vmatpush1.msra.mxu0 %v2886
    %2936 = vmatprep.subr.mxu0 0.0
    %2937 = vmatpush1.msra.mxu0 %v2887
    %2938 = vmatprep.subr.mxu0 0.0
    %2939 = vmatpush1.msra.mxu0 %v2888
    %2940 = vmatprep.subr.mxu0 0.0
    %2941 = vmatpush1.msra.mxu0 %v2889
    %2942 = vmatprep.subr.mxu0 0.0
    %2943 = vmatpush1.msra.mxu0 %v2890
    %2944 = vmatprep.subr.mxu0 0.0
    %2945 = vmatpush1.msra.mxu0 %v2891
    %2946 = vmatprep.subr.mxu0 0.0
    %2947 = vmatpush1.msra.mxu0 %v2892
    %2948 = vmatprep.subr.mxu0 0.0
    %2949 = vmatpush1.msra.mxu0 %v2893
    %2950 = vmatprep.subr.mxu0 0.0
    %2951 = vmatpush1.msra.mxu0 %v2894
    %2952 = vmatprep.subr.mxu0 0.0
    %2953 = vmatpush1.msra.mxu0 %v2895
    %2954 = vmatprep.subr.mxu0 0.0
    %2955 = vmatpush1.msra.mxu0 %v2896
    %2956 = vmatprep.subr.mxu0 0.0
    %2957 = vmatpush1.msra.mxu0 %v2897
    %2958 = vmatprep.subr.mxu0 0.0
    %2959 = vmatpush1.msra.mxu0 %v2898
    %2960 = vmatprep.subr.mxu0 0.0
    %2961 = vmatpush1.msra.mxu0 0.0
    %2962 = vmatprep.subr.mxu0 0.0
    %2963 = vmatpush1.msra.mxu0 0.0
    %2964 = vmatprep.subr.mxu0 0.0
    %2965 = vmatpush1.msra.mxu0 0.0
    %2966 = vmatprep.subr.mxu0 0.0
    %2967 = vmatpush1.msra.mxu0 0.0
    %2968 = vmatprep.mubr.f32.mxu0 %v2902
    %2969 = vmatmul.mubr.f32.gmra.mrb[0].mxu0 %v2899
    %v2970 = vpop.f32.mrb[0].mxu0
    %v2971 = vadd.f32 0.0, %v2970
    %v2972 = vpop.f32.mrb[0].mxu0
    %2973 = vdwg.mxu0
    %s2974 = scalar_lea.vmem [#allocation2], 1344
    %v2975 = vld [vmem:[%s2974] sm:$0xff]
    %v2976 = vld [vmem:[%s2974 + $0x8] sm:$0xff]
    %v2977 = vld [vmem:[%s2974 + $0x10] sm:$0xff]
    %v2978 = vld [vmem:[%s2974 + $0x18] sm:$0xff]
    %v2979 = vld [vmem:[%s2974 + $0x20] sm:$0xff]
    %v2980 = vld [vmem:[%s2974 + $0x28] sm:$0xff]
    %v2981 = vld [vmem:[%s2974 + $0x30] sm:$0xff]
    %v2982 = vld [vmem:[%s2974 + $0x38] sm:$0xff]
    %v2983 = vld [vmem:[%s2974 + $0x40] sm:$0xff]
    %v2984 = vld [vmem:[%s2974 + $0x48] sm:$0xff]
    %v2985 = vld [vmem:[%s2974 + $0x50] sm:$0xff]
    %v2986 = vld [vmem:[%s2974 + $0x58] sm:$0xff]
    %v2987 = vld [vmem:[%s2974 + $0x60] sm:$0xff]
    %v2988 = vld [vmem:[%s2974 + $0x68] sm:$0xff]
    %v2989 = vld [vmem:[%s2974 + $0x70] sm:$0xff]
    %v2990 = vld [vmem:[%s2974 + $0x78] sm:$0xff]
    %v2991 = vld [vmem:[%s2974 + $0x80] sm:$0xff]
    %v2992 = vld [vmem:[%s2974 + $0x88] sm:$0xff]
    %v2993 = vld [vmem:[%s2974 + $0x90] sm:$0xff]
    %v2994 = vld [vmem:[%s2974 + $0x98] sm:$0xff]
    %v2995 = vld [vmem:[%s2974 + $0xa0] sm:$0xff]
    %v2996 = vld [vmem:[%s2974 + $0xa8] sm:$0xff]
    %v2997 = vld [vmem:[%s2974 + $0xb0] sm:$0xff]
    %v2998 = vld [vmem:[%s2974 + $0xb8] sm:$0xff]
    %v2999 = vld [vmem:[%s2974 + $0xc0] sm:$0xff]
    %v3000 = vld [vmem:[%s2974 + $0xc8] sm:$0xff]
    %v3001 = vld [vmem:[%s2974 + $0xd0] sm:$0xff]
    %v3002 = vld [vmem:[%s2974 + $0xd8] sm:$0xff]
    %s3003 = scalar_lea.vmem [#allocation2], 1568
    %v3004 = vld [vmem:[%s3003] sm:$0xff]
    %v3005 = vld [vmem:[%s3003 + $0x8] sm:$0xff]
    %v3006 = vld [vmem:[%s3003 + $0x10] sm:$0xff]
    %v3007 = vld [vmem:[%s3003 + $0x18] sm:$0xff]
    %v3008 = vld [vmem:[%s3003 + $0x20] sm:$0xff]
    %v3009 = vld [vmem:[%s3003 + $0x28] sm:$0xff]
    %v3010 = vld [vmem:[%s3003 + $0x30] sm:$0xff]
    %v3011 = vld [vmem:[%s3003 + $0x38] sm:$0xff]
    %v3012 = vld [vmem:[%s3003 + $0x40] sm:$0xff]
    %v3013 = vld [vmem:[%s3003 + $0x48] sm:$0xff]
    %v3014 = vld [vmem:[%s3003 + $0x50] sm:$0xff]
    %v3015 = vld [vmem:[%s3003 + $0x58] sm:$0xff]
    %v3016 = vld [vmem:[%s3003 + $0x60] sm:$0xff]
    %v3017 = vld [vmem:[%s3003 + $0x68] sm:$0xff]
    %v3018 = vld [vmem:[%s3003 + $0x70] sm:$0xff]
    %v3019 = vld [vmem:[%s3003 + $0x78] sm:$0xff]
    %v3020 = vld [vmem:[%s3003 + $0x80] sm:$0xff]
    %v3021 = vld [vmem:[%s3003 + $0x88] sm:$0xff]
    %v3022 = vld [vmem:[%s3003 + $0x90] sm:$0xff]
    %v3023 = vld [vmem:[%s3003 + $0x98] sm:$0xff]
    %v3024 = vld [vmem:[%s3003 + $0xa0] sm:$0xff]
    %v3025 = vld [vmem:[%s3003 + $0xa8] sm:$0xff]
    %v3026 = vld [vmem:[%s3003 + $0xb0] sm:$0xff]
    %v3027 = vld [vmem:[%s3003 + $0xb8] sm:$0xff]
    %v3028 = vld [vmem:[%s3003 + $0xc0] sm:$0xff]
    %v3029 = vld [vmem:[%s3003 + $0xc8] sm:$0xff]
    %v3030 = vld [vmem:[%s3003 + $0xd0] sm:$0xff]
    %v3031 = vld [vmem:[%s3003 + $0xd8] sm:$0xff]
    %v3032 = vrot.slane %v1397, 7
    %v3033 = vrot.slane %v1398, 7
    %v3035 = vsel %vm2635, %v3033, 0
    %3037 = vmatprep.subr.mxu0 0.0
    %3038 = vmatpush1.msra.mxu0 %v3004
    %3039 = vmatprep.subr.mxu0 0.0
    %3040 = vmatpush1.msra.mxu0 %v3005
    %3041 = vmatprep.subr.mxu0 0.0
    %3042 = vmatpush1.msra.mxu0 %v3006
    %3043 = vmatprep.subr.mxu0 0.0
    %3044 = vmatpush1.msra.mxu0 %v3007
    %3045 = vmatprep.subr.mxu0 0.0
    %3046 = vmatpush1.msra.mxu0 %v3008
    %3047 = vmatprep.subr.mxu0 0.0
    %3048 = vmatpush1.msra.mxu0 %v3009
    %3049 = vmatprep.subr.mxu0 0.0
    %3050 = vmatpush1.msra.mxu0 %v3010
    %3051 = vmatprep.subr.mxu0 0.0
    %3052 = vmatpush1.msra.mxu0 %v3011
    %3053 = vmatprep.subr.mxu0 0.0
    %3054 = vmatpush1.msra.mxu0 %v3012
    %3055 = vmatprep.subr.mxu0 0.0
    %3056 = vmatpush1.msra.mxu0 %v3013
    %3057 = vmatprep.subr.mxu0 0.0
    %3058 = vmatpush1.msra.mxu0 %v3014
    %3059 = vmatprep.subr.mxu0 0.0
    %3060 = vmatpush1.msra.mxu0 %v3015
    %3061 = vmatprep.subr.mxu0 0.0
    %3062 = vmatpush1.msra.mxu0 %v3016
    %3063 = vmatprep.subr.mxu0 0.0
    %3064 = vmatpush1.msra.mxu0 %v3017
    %3065 = vmatprep.subr.mxu0 0.0
    %3066 = vmatpush1.msra.mxu0 %v3018
    %3067 = vmatprep.subr.mxu0 0.0
    %3068 = vmatpush1.msra.mxu0 %v3019
    %3069 = vmatprep.subr.mxu0 0.0
    %3070 = vmatpush1.msra.mxu0 %v3020
    %3071 = vmatprep.subr.mxu0 0.0
    %3072 = vmatpush1.msra.mxu0 %v3021
    %3073 = vmatprep.subr.mxu0 0.0
    %3074 = vmatpush1.msra.mxu0 %v3022
    %3075 = vmatprep.subr.mxu0 0.0
    %3076 = vmatpush1.msra.mxu0 %v3023
    %3077 = vmatprep.subr.mxu0 0.0
    %3078 = vmatpush1.msra.mxu0 %v3024
    %3079 = vmatprep.subr.mxu0 0.0
    %3080 = vmatpush1.msra.mxu0 %v3025
    %3081 = vmatprep.subr.mxu0 0.0
    %3082 = vmatpush1.msra.mxu0 %v3026
    %3083 = vmatprep.subr.mxu0 0.0
    %3084 = vmatpush1.msra.mxu0 %v3027
    %3085 = vmatprep.subr.mxu0 0.0
    %3086 = vmatpush1.msra.mxu0 %v3028
    %3087 = vmatprep.subr.mxu0 0.0
    %3088 = vmatpush1.msra.mxu0 %v3029
    %3089 = vmatprep.subr.mxu0 0.0
    %3090 = vmatpush1.msra.mxu0 %v3030
    %3091 = vmatprep.subr.mxu0 0.0
    %3092 = vmatpush1.msra.mxu0 %v3031
    %3093 = vmatprep.subr.mxu0 0.0
    %3094 = vmatpush1.msra.mxu0 0.0
    %3095 = vmatprep.subr.mxu0 0.0
    %3096 = vmatpush1.msra.mxu0 0.0
    %3097 = vmatprep.subr.mxu0 0.0
    %3098 = vmatpush1.msra.mxu0 0.0
    %3099 = vmatprep.subr.mxu0 0.0
    %3100 = vmatpush1.msra.mxu0 0.0
    %3101 = vmatprep.mubr.f32.mxu0 %v3035
    %3102 = vmatmul.mubr.f32.gmra.mrb[0].mxu0 %v3032
    %v3103 = vpop.f32.mrb[0].mxu0
    %v3104 = vadd.f32 0.0, %v3103
    %v3105 = vpop.f32.mrb[0].mxu0
    %3106 = vdwg.mxu0
    %v3107 = vsel %vm2635, %v1398, 0
    %3109 = vmatprep.subr.mxu0 0.0
    %3110 = vmatpush1.msra.mxu0 %v2573
    %3111 = vmatprep.subr.mxu0 0.0
    %3112 = vmatpush1.msra.mxu0 %v2574
    %3113 = vmatprep.subr.mxu0 0.0
    %3114 = vmatpush1.msra.mxu0 %v2575
    %3115 = vmatprep.subr.mxu0 0.0
    %3116 = vmatpush1.msra.mxu0 %v2576
    %3117 = vmatprep.subr.mxu0 0.0
    %3118 = vmatpush1.msra.mxu0 %v2577
    %3119 = vmatprep.subr.mxu0 0.0
    %3120 = vmatpush1.msra.mxu0 %v2578
    %3121 = vmatprep.subr.mxu0 0.0
    %3122 = vmatpush1.msra.mxu0 %v2579
    %3123 = vmatprep.subr.mxu0 0.0
    %3124 = vmatpush1.msra.mxu0 %v2580
    %3125 = vmatprep.subr.mxu0 0.0
    %3126 = vmatpush1.msra.mxu0 %v2581
    %3127 = vmatprep.subr.mxu0 0.0
    %3128 = vmatpush1.msra.mxu0 %v2582
    %3129 = vmatprep.subr.mxu0 0.0
    %3130 = vmatpush1.msra.mxu0 %v2583
    %3131 = vmatprep.subr.mxu0 0.0
    %3132 = vmatpush1.msra.mxu0 %v2584
    %3133 = vmatprep.subr.mxu0 0.0
    %3134 = vmatpush1.msra.mxu0 %v2585
    %3135 = vmatprep.subr.mxu0 0.0
    %3136 = vmatpush1.msra.mxu0 %v2586
    %3137 = vmatprep.subr.mxu0 0.0
    %3138 = vmatpush1.msra.mxu0 %v2587
    %3139 = vmatprep.subr.mxu0 0.0
    %3140 = vmatpush1.msra.mxu0 %v2588
    %3141 = vmatprep.subr.mxu0 0.0
    %3142 = vmatpush1.msra.mxu0 %v2589
    %3143 = vmatprep.subr.mxu0 0.0
    %3144 = vmatpush1.msra.mxu0 %v2590
    %3145 = vmatprep.subr.mxu0 0.0
    %3146 = vmatpush1.msra.mxu0 %v2591
    %3147 = vmatprep.subr.mxu0 0.0
    %3148 = vmatpush1.msra.mxu0 %v2592
    %3149 = vmatprep.subr.mxu0 0.0
    %3150 = vmatpush1.msra.mxu0 %v2593
    %3151 = vmatprep.subr.mxu0 0.0
    %3152 = vmatpush1.msra.mxu0 %v2594
    %3153 = vmatprep.subr.mxu0 0.0
    %3154 = vmatpush1.msra.mxu0 %v2595
    %3155 = vmatprep.subr.mxu0 0.0
    %3156 = vmatpush1.msra.mxu0 %v2596
    %3157 = vmatprep.subr.mxu0 0.0
    %3158 = vmatpush1.msra.mxu0 %v2597
    %3159 = vmatprep.subr.mxu0 0.0
    %3160 = vmatpush1.msra.mxu0 %v2598
    %3161 = vmatprep.subr.mxu0 0.0
    %3162 = vmatpush1.msra.mxu0 %v2599
    %3163 = vmatprep.subr.mxu0 0.0
    %3164 = vmatpush1.msra.mxu0 %v2600
    %3165 = vmatprep.subr.mxu0 0.0
    %3166 = vmatpush1.msra.mxu0 0.0
    %3167 = vmatprep.subr.mxu0 0.0
    %3168 = vmatpush1.msra.mxu0 0.0
    %3169 = vmatprep.subr.mxu0 0.0
    %3170 = vmatpush1.msra.mxu0 0.0
    %3171 = vmatprep.subr.mxu0 0.0
    %3172 = vmatpush1.msra.mxu0 0.0
    %3173 = vmatprep.mubr.f32.mxu0 %v3107
    %3174 = vmatmul.mubr.f32.gmra.mrb[0].mxu0 %v1397
    %v3175 = vpop.f32.mrb[0].mxu0
    %v3176 = vadd.f32 %v2705, %v3175
    %v3177 = vpop.f32.mrb[0].mxu0
    %3178 = vdwg.mxu0
    %v3179 = vrot.slane %v1397, 2
    %v3180 = vrot.slane %v1398, 2
    %v3182 = vsel %vm2635, %v3180, 0
    %3184 = vmatprep.subr.mxu0 0.0
    %3185 = vmatpush1.msra.mxu0 %v2709
    %3186 = vmatprep.subr.mxu0 0.0
    %3187 = vmatpush1.msra.mxu0 %v2710
    %3188 = vmatprep.subr.mxu0 0.0
    %3189 = vmatpush1.msra.mxu0 %v2711
    %3190 = vmatprep.subr.mxu0 0.0
    %3191 = vmatpush1.msra.mxu0 %v2712
    %3192 = vmatprep.subr.mxu0 0.0
    %3193 = vmatpush1.msra.mxu0 %v2713
    %3194 = vmatprep.subr.mxu0 0.0
    %3195 = vmatpush1.msra.mxu0 %v2714
    %3196 = vmatprep.subr.mxu0 0.0
    %3197 = vmatpush1.msra.mxu0 %v2715
    %3198 = vmatprep.subr.mxu0 0.0
    %3199 = vmatpush1.msra.mxu0 %v2716
    %3200 = vmatprep.subr.mxu0 0.0
    %3201 = vmatpush1.msra.mxu0 %v2717
    %3202 = vmatprep.subr.mxu0 0.0
    %3203 = vmatpush1.msra.mxu0 %v2718
    %3204 = vmatprep.subr.mxu0 0.0
    %3205 = vmatpush1.msra.mxu0 %v2719
    %3206 = vmatprep.subr.mxu0 0.0
    %3207 = vmatpush1.msra.mxu0 %v2720
    %3208 = vmatprep.subr.mxu0 0.0
    %3209 = vmatpush1.msra.mxu0 %v2721
    %3210 = vmatprep.subr.mxu0 0.0
    %3211 = vmatpush1.msra.mxu0 %v2722
    %3212 = vmatprep.subr.mxu0 0.0
    %3213 = vmatpush1.msra.mxu0 %v2723
    %3214 = vmatprep.subr.mxu0 0.0
    %3215 = vmatpush1.msra.mxu0 %v2724
    %3216 = vmatprep.subr.mxu0 0.0
    %3217 = vmatpush1.msra.mxu0 %v2725
    %3218 = vmatprep.subr.mxu0 0.0
    %3219 = vmatpush1.msra.mxu0 %v2726
    %3220 = vmatprep.subr.mxu0 0.0
    %3221 = vmatpush1.msra.mxu0 %v2727
    %3222 = vmatprep.subr.mxu0 0.0
    %3223 = vmatpush1.msra.mxu0 %v2728
    %3224 = vmatprep.subr.mxu0 0.0
    %3225 = vmatpush1.msra.mxu0 %v2729
    %3226 = vmatprep.subr.mxu0 0.0
    %3227 = vmatpush1.msra.mxu0 %v2730
    %3228 = vmatprep.subr.mxu0 0.0
    %3229 = vmatpush1.msra.mxu0 %v2731
    %3230 = vmatprep.subr.mxu0 0.0
    %3231 = vmatpush1.msra.mxu0 %v2732
    %3232 = vmatprep.subr.mxu0 0.0
    %3233 = vmatpush1.msra.mxu0 %v2733
    %3234 = vmatprep.subr.mxu0 0.0
    %3235 = vmatpush1.msra.mxu0 %v2734
    %3236 = vmatprep.subr.mxu0 0.0
    %3237 = vmatpush1.msra.mxu0 %v2735
    %3238 = vmatprep.subr.mxu0 0.0
    %3239 = vmatpush1.msra.mxu0 %v2736
    %3240 = vmatprep.subr.mxu0 0.0
    %3241 = vmatpush1.msra.mxu0 0.0
    %3242 = vmatprep.subr.mxu0 0.0
    %3243 = vmatpush1.msra.mxu0 0.0
    %3244 = vmatprep.subr.mxu0 0.0
    %3245 = vmatpush1.msra.mxu0 0.0
    %3246 = vmatprep.subr.mxu0 0.0
    %3247 = vmatpush1.msra.mxu0 0.0
    %3248 = vmatprep.mubr.f32.mxu0 %v3182
    %3249 = vmatmul.mubr.f32.gmra.mrb[0].mxu0 %v3179
    %v3250 = vpop.f32.mrb[0].mxu0
    %v3251 = vadd.f32 %v2838, %v3250
    %v3252 = vpop.f32.mrb[0].mxu0
    %3253 = vdwg.mxu0
    %v3254 = vrot.slane %v1397, 4
    %v3255 = vrot.slane %v1398, 4
    %v3257 = vsel %vm2635, %v3255, 0
    %3259 = vmatprep.subr.mxu0 0.0
    %3260 = vmatpush1.msra.mxu0 %v2842
    %3261 = vmatprep.subr.mxu0 0.0
    %3262 = vmatpush1.msra.mxu0 %v2843
    %3263 = vmatprep.subr.mxu0 0.0
    %3264 = vmatpush1.msra.mxu0 %v2844
    %3265 = vmatprep.subr.mxu0 0.0
    %3266 = vmatpush1.msra.mxu0 %v2845
    %3267 = vmatprep.subr.mxu0 0.0
    %3268 = vmatpush1.msra.mxu0 %v2846
    %3269 = vmatprep.subr.mxu0 0.0
    %3270 = vmatpush1.msra.mxu0 %v2847
    %3271 = vmatprep.subr.mxu0 0.0
    %3272 = vmatpush1.msra.mxu0 %v2848
    %3273 = vmatprep.subr.mxu0 0.0
    %3274 = vmatpush1.msra.mxu0 %v2849
    %3275 = vmatprep.subr.mxu0 0.0
    %3276 = vmatpush1.msra.mxu0 %v2850
    %3277 = vmatprep.subr.mxu0 0.0
    %3278 = vmatpush1.msra.mxu0 %v2851
    %3279 = vmatprep.subr.mxu0 0.0
    %3280 = vmatpush1.msra.mxu0 %v2852
    %3281 = vmatprep.subr.mxu0 0.0
    %3282 = vmatpush1.msra.mxu0 %v2853
    %3283 = vmatprep.subr.mxu0 0.0
    %3284 = vmatpush1.msra.mxu0 %v2854
    %3285 = vmatprep.subr.mxu0 0.0
    %3286 = vmatpush1.msra.mxu0 %v2855
    %3287 = vmatprep.subr.mxu0 0.0
    %3288 = vmatpush1.msra.mxu0 %v2856
    %3289 = vmatprep.subr.mxu0 0.0
    %3290 = vmatpush1.msra.mxu0 %v2857
    %3291 = vmatprep.subr.mxu0 0.0
    %3292 = vmatpush1.msra.mxu0 %v2858
    %3293 = vmatprep.subr.mxu0 0.0
    %3294 = vmatpush1.msra.mxu0 %v2859
    %3295 = vmatprep.subr.mxu0 0.0
    %3296 = vmatpush1.msra.mxu0 %v2860
    %3297 = vmatprep.subr.mxu0 0.0
    %3298 = vmatpush1.msra.mxu0 %v2861
    %3299 = vmatprep.subr.mxu0 0.0
    %3300 = vmatpush1.msra.mxu0 %v2862
    %3301 = vmatprep.subr.mxu0 0.0
    %3302 = vmatpush1.msra.mxu0 %v2863
    %3303 = vmatprep.subr.mxu0 0.0
    %3304 = vmatpush1.msra.mxu0 %v2864
    %3305 = vmatprep.subr.mxu0 0.0
    %3306 = vmatpush1.msra.mxu0 %v2865
    %3307 = vmatprep.subr.mxu0 0.0
    %3308 = vmatpush1.msra.mxu0 %v2866
    %3309 = vmatprep.subr.mxu0 0.0
    %3310 = vmatpush1.msra.mxu0 %v2867
    %3311 = vmatprep.subr.mxu0 0.0
    %3312 = vmatpush1.msra.mxu0 %v2868
    %3313 = vmatprep.subr.mxu0 0.0
    %3314 = vmatpush1.msra.mxu0 %v2869
    %3315 = vmatprep.subr.mxu0 0.0
    %3316 = vmatpush1.msra.mxu0 0.0
    %3317 = vmatprep.subr.mxu0 0.0
    %3318 = vmatpush1.msra.mxu0 0.0
    %3319 = vmatprep.subr.mxu0 0.0
    %3320 = vmatpush1.msra.mxu0 0.0
    %3321 = vmatprep.subr.mxu0 0.0
    %3322 = vmatpush1.msra.mxu0 0.0
    %3323 = vmatprep.mubr.f32.mxu0 %v3257
    %3324 = vmatmul.mubr.f32.gmra.mrb[0].mxu0 %v3254
    %v3325 = vpop.f32.mrb[0].mxu0
    %v3326 = vadd.f32 %v2971, %v3325
    %v3327 = vpop.f32.mrb[0].mxu0
    %3328 = vdwg.mxu0
    %v3329 = vrot.slane %v1397, 6
    %v3330 = vrot.slane %v1398, 6
    %v3332 = vsel %vm2635, %v3330, 0
    %3334 = vmatprep.subr.mxu0 0.0
    %3335 = vmatpush1.msra.mxu0 %v2975
    %3336 = vmatprep.subr.mxu0 0.0
    %3337 = vmatpush1.msra.mxu0 %v2976
    %3338 = vmatprep.subr.mxu0 0.0
    %3339 = vmatpush1.msra.mxu0 %v2977
    %3340 = vmatprep.subr.mxu0 0.0
    %3341 = vmatpush1.msra.mxu0 %v2978
    %3342 = vmatprep.subr.mxu0 0.0
    %3343 = vmatpush1.msra.mxu0 %v2979
    %3344 = vmatprep.subr.mxu0 0.0
    %3345 = vmatpush1.msra.mxu0 %v2980
    %3346 = vmatprep.subr.mxu0 0.0
    %3347 = vmatpush1.msra.mxu0 %v2981
    %3348 = vmatprep.subr.mxu0 0.0
    %3349 = vmatpush1.msra.mxu0 %v2982
    %3350 = vmatprep.subr.mxu0 0.0
    %3351 = vmatpush1.msra.mxu0 %v2983
    %3352 = vmatprep.subr.mxu0 0.0
    %3353 = vmatpush1.msra.mxu0 %v2984
    %3354 = vmatprep.subr.mxu0 0.0
    %3355 = vmatpush1.msra.mxu0 %v2985
    %3356 = vmatprep.subr.mxu0 0.0
    %3357 = vmatpush1.msra.mxu0 %v2986
    %3358 = vmatprep.subr.mxu0 0.0
    %3359 = vmatpush1.msra.mxu0 %v2987
    %3360 = vmatprep.subr.mxu0 0.0
    %3361 = vmatpush1.msra.mxu0 %v2988
    %3362 = vmatprep.subr.mxu0 0.0
    %3363 = vmatpush1.msra.mxu0 %v2989
    %3364 = vmatprep.subr.mxu0 0.0
    %3365 = vmatpush1.msra.mxu0 %v2990
    %3366 = vmatprep.subr.mxu0 0.0
    %3367 = vmatpush1.msra.mxu0 %v2991
    %3368 = vmatprep.subr.mxu0 0.0
    %3369 = vmatpush1.msra.mxu0 %v2992
    %3370 = vmatprep.subr.mxu0 0.0
    %3371 = vmatpush1.msra.mxu0 %v2993
    %3372 = vmatprep.subr.mxu0 0.0
    %3373 = vmatpush1.msra.mxu0 %v2994
    %3374 = vmatprep.subr.mxu0 0.0
    %3375 = vmatpush1.msra.mxu0 %v2995
    %3376 = vmatprep.subr.mxu0 0.0
    %3377 = vmatpush1.msra.mxu0 %v2996
    %3378 = vmatprep.subr.mxu0 0.0
    %3379 = vmatpush1.msra.mxu0 %v2997
    %3380 = vmatprep.subr.mxu0 0.0
    %3381 = vmatpush1.msra.mxu0 %v2998
    %3382 = vmatprep.subr.mxu0 0.0
    %3383 = vmatpush1.msra.mxu0 %v2999
    %3384 = vmatprep.subr.mxu0 0.0
    %3385 = vmatpush1.msra.mxu0 %v3000
    %3386 = vmatprep.subr.mxu0 0.0
    %3387 = vmatpush1.msra.mxu0 %v3001
    %3388 = vmatprep.subr.mxu0 0.0
    %3389 = vmatpush1.msra.mxu0 %v3002
    %3390 = vmatprep.subr.mxu0 0.0
    %3391 = vmatpush1.msra.mxu0 0.0
    %3392 = vmatprep.subr.mxu0 0.0
    %3393 = vmatpush1.msra.mxu0 0.0
    %3394 = vmatprep.subr.mxu0 0.0
    %3395 = vmatpush1.msra.mxu0 0.0
    %3396 = vmatprep.subr.mxu0 0.0
    %3397 = vmatpush1.msra.mxu0 0.0
    %3398 = vmatprep.mubr.f32.mxu0 %v3332
    %3399 = vmatmul.mubr.f32.gmra.mrb[0].mxu0 %v3329
    %v3400 = vpop.f32.mrb[0].mxu0
    %v3401 = vadd.f32 %v3104, %v3400
    %v3402 = vpop.f32.mrb[0].mxu0
    %3403 = vdwg.mxu0
    %v3404 = vadd.f32 %v3176, %v3251
    %v3405 = vadd.f32 %v3326, %v3401
    %v3406 = vadd.f32 %v3404, %v3405
    %v3407 = vld [vmem:[%s8] sm:$0x1]
    %v3408 = vadd.f32 %v3406, %v3407
    %v3409 = vmax.f32 %v3408, 0.0
    %v3410 = vld [vmem:[%s9] sm:$0xff]
    %v3411 = vld [vmem:[%s9 + $0x8] sm:$0xff]
    %v3412 = vld [vmem:[%s9 + $0x10] sm:$0xff]
    %v3413 = vld [vmem:[%s9 + $0x18] sm:$0xff]
    %v3414 = vld [vmem:[%s9 + $0x20] sm:$0xff]
    %v3415 = vld [vmem:[%s9 + $0x28] sm:$0xff]
    %v3416 = vld [vmem:[%s9 + $0x30] sm:$0xff]
    %v3417 = vld [vmem:[%s9 + $0x38] sm:$0xff]
    %v3418 = vld [vmem:[%s9 + $0x40] sm:$0xff]
    %v3419 = vld [vmem:[%s9 + $0x48] sm:$0xff]
    %v3420 = vld [vmem:[%s9 + $0x50] sm:$0xff]
    %v3421 = vld [vmem:[%s9 + $0x58] sm:$0xff]
    %v3422 = vld [vmem:[%s9 + $0x60] sm:$0xff]
    %v3423 = vld [vmem:[%s9 + $0x68] sm:$0xff]
    %v3424 = vld [vmem:[%s9 + $0x70] sm:$0xff]
    %v3425 = vld [vmem:[%s10] sm:$0x1]
    %vm3426 = vcmask 982016
    %v3428 = vsel %vm3426, %v3409, 0
    %3430 = vmatprep.subr.mxu0 0.0
    %3431 = vmatpush1.msra.mxu0 %v3410
    %3432 = vmatprep.subr.mxu0 0.0
    %3433 = vmatpush1.msra.mxu0 %v3411
    %3434 = vmatprep.subr.mxu0 0.0
    %3435 = vmatpush1.msra.mxu0 %v3412
    %3436 = vmatprep.subr.mxu0 0.0
    %3437 = vmatpush1.msra.mxu0 %v3413
    %3438 = vmatprep.subr.mxu0 0.0
    %3439 = vmatpush1.msra.mxu0 %v3414
    %3440 = vmatprep.subr.mxu0 0.0
    %3441 = vmatpush1.msra.mxu0 %v3415
    %3442 = vmatprep.subr.mxu0 0.0
    %3443 = vmatpush1.msra.mxu0 %v3416
    %3444 = vmatprep.subr.mxu0 0.0
    %3445 = vmatpush1.msra.mxu0 %v3417
    %3446 = vmatprep.subr.mxu0 0.0
    %3447 = vmatpush1.msra.mxu0 %v3418
    %3448 = vmatprep.subr.mxu0 0.0
    %3449 = vmatpush1.msra.mxu0 %v3419
    %3450 = vmatprep.subr.mxu0 0.0
    %3451 = vmatpush1.msra.mxu0 %v3420
    %3452 = vmatprep.subr.mxu0 0.0
    %3453 = vmatpush1.msra.mxu0 %v3421
    %3454 = vmatprep.subr.mxu0 0.0
    %3455 = vmatpush1.msra.mxu0 %v3422
    %3456 = vmatprep.subr.mxu0 0.0
    %3457 = vmatpush1.msra.mxu0 %v3423
    %3458 = vmatprep.subr.mxu0 0.0
    %3459 = vmatpush1.msra.mxu0 %v3424
    %3460 = vmatprep.subr.mxu0 0.0
    %3461 = vmatpush1.msra.mxu0 0.0
    %3462 = vmatprep.subr.mxu0 0.0
    %3463 = vmatpush1.msra.mxu0 0.0
    %3464 = vmatprep.subr.mxu0 0.0
    %3465 = vmatpush1.msra.mxu0 0.0
    %3466 = vmatprep.subr.mxu0 0.0
    %3467 = vmatpush1.msra.mxu0 0.0
    %3468 = vmatprep.subr.mxu0 0.0
    %3469 = vmatpush1.msra.mxu0 0.0
    %3470 = vmatprep.subr.mxu0 0.0
    %3471 = vmatpush1.msra.mxu0 0.0
    %3472 = vmatprep.subr.mxu0 0.0
    %3473 = vmatpush1.msra.mxu0 0.0
    %3474 = vmatprep.subr.mxu0 0.0
    %3475 = vmatpush1.msra.mxu0 0.0
    %3476 = vmatprep.subr.mxu0 0.0
    %3477 = vmatpush1.msra.mxu0 0.0
    %3478 = vmatprep.subr.mxu0 0.0
    %3479 = vmatpush1.msra.mxu0 0.0
    %3480 = vmatprep.subr.mxu0 0.0
    %3481 = vmatpush1.msra.mxu0 0.0
    %3482 = vmatprep.subr.mxu0 0.0
    %3483 = vmatpush1.msra.mxu0 0.0
    %3484 = vmatprep.subr.mxu0 0.0
    %3485 = vmatpush1.msra.mxu0 0.0
    %3486 = vmatprep.subr.mxu0 0.0
    %3487 = vmatpush1.msra.mxu0 0.0
    %3488 = vmatprep.subr.mxu0 0.0
    %3489 = vmatpush1.msra.mxu0 0.0
    %3490 = vmatprep.subr.mxu0 0.0
    %3491 = vmatpush1.msra.mxu0 0.0
    %3492 = vmatprep.subr.mxu0 0.0
    %3493 = vmatpush1.msra.mxu0 0.0
    %3494 = vmatprep.mubr.f32.mxu0 0.0
    %3495 = vmatmul.mubr.f32.gmra.mrb[0].mxu0 %v3428
    %v3496 = vpop.f32.mrb[0].mxu0
    %v3497 = vadd.f32 %v3425, %v3496
    %v3498 = vpop.f32.mrb[0].mxu0
    %3499 = vdwg.mxu0
    %v3500 = vmax.f32 %v3497, 0.0
    %v3501 = vld [vmem:[%s11] sm:$0xff]
    %v3502 = vld [vmem:[%s11 + $0x8] sm:$0xff]
    %v3503 = vld [vmem:[%s11 + $0x10] sm:$0xff]
    %v3504 = vld [vmem:[%s11 + $0x18] sm:$0xff]
    %v3505 = vld [vmem:[%s11 + $0x20] sm:$0xff]
    %v3506 = vld [vmem:[%s11 + $0x28] sm:$0xff]
    %v3507 = vld [vmem:[%s11 + $0x30] sm:$0xff]
    %v3508 = vld [vmem:[%s11 + $0x38] sm:$0xff]
    %v3509 = vld [vmem:[%s11 + $0x40] sm:$0xff]
    %v3510 = vld [vmem:[%s11 + $0x48] sm:$0xff]
    %v3511 = vld [vmem:[%s11 + $0x50] sm:$0xf]
    %v3512 = vld [vmem:[%s12] sm:$0x1]
    %vm3513 = vcmask 687104
    %v3515 = vsel %vm3513, %v3500, 0
    %v3518 = vsel %vm941, %v3511, 0
    %3520 = vmatprep.subr.mxu0 0.0
    %3521 = vmatpush1.msra.mxu0 %v3501
    %3522 = vmatprep.subr.mxu0 0.0
    %3523 = vmatpush1.msra.mxu0 %v3502
    %3524 = vmatprep.subr.mxu0 0.0
    %3525 = vmatpush1.msra.mxu0 %v3503
    %3526 = vmatprep.subr.mxu0 0.0
    %3527 = vmatpush1.msra.mxu0 %v3504
    %3528 = vmatprep.subr.mxu0 0.0
    %3529 = vmatpush1.msra.mxu0 %v3505
    %3530 = vmatprep.subr.mxu0 0.0
    %3531 = vmatpush1.msra.mxu0 %v3506
    %3532 = vmatprep.subr.mxu0 0.0
    %3533 = vmatpush1.msra.mxu0 %v3507
    %3534 = vmatprep.subr.mxu0 0.0
    %3535 = vmatpush1.msra.mxu0 %v3508
    %3536 = vmatprep.subr.mxu0 0.0
    %3537 = vmatpush1.msra.mxu0 %v3509
    %3538 = vmatprep.subr.mxu0 0.0
    %3539 = vmatpush1.msra.mxu0 %v3510
    %3540 = vmatprep.subr.mxu0 0.0
    %3541 = vmatpush1.msra.mxu0 %v3518
    %3542 = vmatprep.subr.mxu0 0.0
    %3543 = vmatpush1.msra.mxu0 0.0
    %3544 = vmatprep.subr.mxu0 0.0
    %3545 = vmatpush1.msra.mxu0 0.0
    %3546 = vmatprep.subr.mxu0 0.0
    %3547 = vmatpush1.msra.mxu0 0.0
    %3548 = vmatprep.subr.mxu0 0.0
    %3549 = vmatpush1.msra.mxu0 0.0
    %3550 = vmatprep.subr.mxu0 0.0
    %3551 = vmatpush1.msra.mxu0 0.0
    %3552 = vmatprep.subr.mxu0 0.0
    %3553 = vmatpush1.msra.mxu0 0.0
    %3554 = vmatprep.subr.mxu0 0.0
    %3555 = vmatpush1.msra.mxu0 0.0
    %3556 = vmatprep.subr.mxu0 0.0
    %3557 = vmatpush1.msra.mxu0 0.0
    %3558 = vmatprep.subr.mxu0 0.0
    %3559 = vmatpush1.msra.mxu0 0.0
    %3560 = vmatprep.subr.mxu0 0.0
    %3561 = vmatpush1.msra.mxu0 0.0
    %3562 = vmatprep.subr.mxu0 0.0
    %3563 = vmatpush1.msra.mxu0 0.0
    %3564 = vmatprep.subr.mxu0 0.0
    %3565 = vmatpush1.msra.mxu0 0.0
    %3566 = vmatprep.subr.mxu0 0.0
    %3567 = vmatpush1.msra.mxu0 0.0
    %3568 = vmatprep.subr.mxu0 0.0
    %3569 = vmatpush1.msra.mxu0 0.0
    %3570 = vmatprep.subr.mxu0 0.0
    %3571 = vmatpush1.msra.mxu0 0.0
    %3572 = vmatprep.subr.mxu0 0.0
    %3573 = vmatpush1.msra.mxu0 0.0
    %3574 = vmatprep.subr.mxu0 0.0
    %3575 = vmatpush1.msra.mxu0 0.0
    %3576 = vmatprep.subr.mxu0 0.0
    %3577 = vmatpush1.msra.mxu0 0.0
    %3578 = vmatprep.subr.mxu0 0.0
    %3579 = vmatpush1.msra.mxu0 0.0
    %3580 = vmatprep.subr.mxu0 0.0
    %3581 = vmatpush1.msra.mxu0 0.0
    %3582 = vmatprep.subr.mxu0 0.0
    %3583 = vmatpush1.msra.mxu0 0.0
    %3584 = vmatprep.mubr.f32.mxu0 0.0
    %3585 = vmatmul.mubr.f32.gmra.mrb[0].mxu0 %v3515
    %v3586 = vpop.f32.mrb[0].mxu0
    %v3587 = vadd.f32 %v3512, %v3586
    %v3588 = vpop.f32.mrb[0].mxu0
    %3589 = vdwg.mxu0
    %v3592 = vrot.slane %v2567, 1
    %v3593 = vrot.slane %v2568, 1
    %v3595 = vsel %vm2635, %v3593, 0
    %3597 = vmatprep.subr.mxu0 0.0
    %3598 = vmatpush1.msra.mxu0 %v2602
    %3599 = vmatprep.subr.mxu0 0.0
    %3600 = vmatpush1.msra.mxu0 %v2603
    %3601 = vmatprep.subr.mxu0 0.0
    %3602 = vmatpush1.msra.mxu0 %v2604
    %3603 = vmatprep.subr.mxu0 0.0
    %3604 = vmatpush1.msra.mxu0 %v2605
    %3605 = vmatprep.subr.mxu0 0.0
    %3606 = vmatpush1.msra.mxu0 %v2606
    %3607 = vmatprep.subr.mxu0 0.0
    %3608 = vmatpush1.msra.mxu0 %v2607
    %3609 = vmatprep.subr.mxu0 0.0
    %3610 = vmatpush1.msra.mxu0 %v2608
    %3611 = vmatprep.subr.mxu0 0.0
    %3612 = vmatpush1.msra.mxu0 %v2609
    %3613 = vmatprep.subr.mxu0 0.0
    %3614 = vmatpush1.msra.mxu0 %v2610
    %3615 = vmatprep.subr.mxu0 0.0
    %3616 = vmatpush1.msra.mxu0 %v2611
    %3617 = vmatprep.subr.mxu0 0.0
    %3618 = vmatpush1.msra.mxu0 %v2612
    %3619 = vmatprep.subr.mxu0 0.0
    %3620 = vmatpush1.msra.mxu0 %v2613
    %3621 = vmatprep.subr.mxu0 0.0
    %3622 = vmatpush1.msra.mxu0 %v2614
    %3623 = vmatprep.subr.mxu0 0.0
    %3624 = vmatpush1.msra.mxu0 %v2615
    %3625 = vmatprep.subr.mxu0 0.0
    %3626 = vmatpush1.msra.mxu0 %v2616
    %3627 = vmatprep.subr.mxu0 0.0
    %3628 = vmatpush1.msra.mxu0 %v2617
    %3629 = vmatprep.subr.mxu0 0.0
    %3630 = vmatpush1.msra.mxu0 %v2618
    %3631 = vmatprep.subr.mxu0 0.0
    %3632 = vmatpush1.msra.mxu0 %v2619
    %3633 = vmatprep.subr.mxu0 0.0
    %3634 = vmatpush1.msra.mxu0 %v2620
    %3635 = vmatprep.subr.mxu0 0.0
    %3636 = vmatpush1.msra.mxu0 %v2621
    %3637 = vmatprep.subr.mxu0 0.0
    %3638 = vmatpush1.msra.mxu0 %v2622
    %3639 = vmatprep.subr.mxu0 0.0
    %3640 = vmatpush1.msra.mxu0 %v2623
    %3641 = vmatprep.subr.mxu0 0.0
    %3642 = vmatpush1.msra.mxu0 %v2624
    %3643 = vmatprep.subr.mxu0 0.0
    %3644 = vmatpush1.msra.mxu0 %v2625
    %3645 = vmatprep.subr.mxu0 0.0
    %3646 = vmatpush1.msra.mxu0 %v2626
    %3647 = vmatprep.subr.mxu0 0.0
    %3648 = vmatpush1.msra.mxu0 %v2627
    %3649 = vmatprep.subr.mxu0 0.0
    %3650 = vmatpush1.msra.mxu0 %v2628
    %3651 = vmatprep.subr.mxu0 0.0
    %3652 = vmatpush1.msra.mxu0 %v2629
    %3653 = vmatprep.subr.mxu0 0.0
    %3654 = vmatpush1.msra.mxu0 0.0
    %3655 = vmatprep.subr.mxu0 0.0
    %3656 = vmatpush1.msra.mxu0 0.0
    %3657 = vmatprep.subr.mxu0 0.0
    %3658 = vmatpush1.msra.mxu0 0.0
    %3659 = vmatprep.subr.mxu0 0.0
    %3660 = vmatpush1.msra.mxu0 0.0
    %3661 = vmatprep.mubr.f32.mxu0 %v3595
    %3662 = vmatmul.mubr.f32.gmra.mrb[0].mxu0 %v3592
    %v3663 = vpop.f32.mrb[0].mxu0
    %v3664 = vadd.f32 0.0, %v3663
    %v3665 = vpop.f32.mrb[0].mxu0
    %3666 = vdwg.mxu0
    %v3667 = vrot.slane %v2567, 3
    %v3668 = vrot.slane %v2568, 3
    %v3670 = vsel %vm2635, %v3668, 0
    %3672 = vmatprep.subr.mxu0 0.0
    %3673 = vmatpush1.msra.mxu0 %v2738
    %3674 = vmatprep.subr.mxu0 0.0
    %3675 = vmatpush1.msra.mxu0 %v2739
    %3676 = vmatprep.subr.mxu0 0.0
    %3677 = vmatpush1.msra.mxu0 %v2740
    %3678 = vmatprep.subr.mxu0 0.0
    %3679 = vmatpush1.msra.mxu0 %v2741
    %3680 = vmatprep.subr.mxu0 0.0
    %3681 = vmatpush1.msra.mxu0 %v2742
    %3682 = vmatprep.subr.mxu0 0.0
    %3683 = vmatpush1.msra.mxu0 %v2743
    %3684 = vmatprep.subr.mxu0 0.0
    %3685 = vmatpush1.msra.mxu0 %v2744
    %3686 = vmatprep.subr.mxu0 0.0
    %3687 = vmatpush1.msra.mxu0 %v2745
    %3688 = vmatprep.subr.mxu0 0.0
    %3689 = vmatpush1.msra.mxu0 %v2746
    %3690 = vmatprep.subr.mxu0 0.0
    %3691 = vmatpush1.msra.mxu0 %v2747
    %3692 = vmatprep.subr.mxu0 0.0
    %3693 = vmatpush1.msra.mxu0 %v2748
    %3694 = vmatprep.subr.mxu0 0.0
    %3695 = vmatpush1.msra.mxu0 %v2749
    %3696 = vmatprep.subr.mxu0 0.0
    %3697 = vmatpush1.msra.mxu0 %v2750
    %3698 = vmatprep.subr.mxu0 0.0
    %3699 = vmatpush1.msra.mxu0 %v2751
    %3700 = vmatprep.subr.mxu0 0.0
    %3701 = vmatpush1.msra.mxu0 %v2752
    %3702 = vmatprep.subr.mxu0 0.0
    %3703 = vmatpush1.msra.mxu0 %v2753
    %3704 = vmatprep.subr.mxu0 0.0
    %3705 = vmatpush1.msra.mxu0 %v2754
    %3706 = vmatprep.subr.mxu0 0.0
    %3707 = vmatpush1.msra.mxu0 %v2755
    %3708 = vmatprep.subr.mxu0 0.0
    %3709 = vmatpush1.msra.mxu0 %v2756
    %3710 = vmatprep.subr.mxu0 0.0
    %3711 = vmatpush1.msra.mxu0 %v2757
    %3712 = vmatprep.subr.mxu0 0.0
    %3713 = vmatpush1.msra.mxu0 %v2758
    %3714 = vmatprep.subr.mxu0 0.0
    %3715 = vmatpush1.msra.mxu0 %v2759
    %3716 = vmatprep.subr.mxu0 0.0
    %3717 = vmatpush1.msra.mxu0 %v2760
    %3718 = vmatprep.subr.mxu0 0.0
    %3719 = vmatpush1.msra.mxu0 %v2761
    %3720 = vmatprep.subr.mxu0 0.0
    %3721 = vmatpush1.msra.mxu0 %v2762
    %3722 = vmatprep.subr.mxu0 0.0
    %3723 = vmatpush1.msra.mxu0 %v2763
    %3724 = vmatprep.subr.mxu0 0.0
    %3725 = vmatpush1.msra.mxu0 %v2764
    %3726 = vmatprep.subr.mxu0 0.0
    %3727 = vmatpush1.msra.mxu0 %v2765
    %3728 = vmatprep.subr.mxu0 0.0
    %3729 = vmatpush1.msra.mxu0 0.0
    %3730 = vmatprep.subr.mxu0 0.0
    %3731 = vmatpush1.msra.mxu0 0.0
    %3732 = vmatprep.subr.mxu0 0.0
    %3733 = vmatpush1.msra.mxu0 0.0
    %3734 = vmatprep.subr.mxu0 0.0
    %3735 = vmatpush1.msra.mxu0 0.0
    %3736 = vmatprep.mubr.f32.mxu0 %v3670
    %3737 = vmatmul.mubr.f32.gmra.mrb[0].mxu0 %v3667
    %v3738 = vpop.f32.mrb[0].mxu0
    %v3739 = vadd.f32 0.0, %v3738
    %v3740 = vpop.f32.mrb[0].mxu0
    %3741 = vdwg.mxu0
    %v3742 = vrot.slane %v2567, 5
    %v3743 = vrot.slane %v2568, 5
    %v3745 = vsel %vm2635, %v3743, 0
    %3747 = vmatprep.subr.mxu0 0.0
    %3748 = vmatpush1.msra.mxu0 %v2871
    %3749 = vmatprep.subr.mxu0 0.0
    %3750 = vmatpush1.msra.mxu0 %v2872
    %3751 = vmatprep.subr.mxu0 0.0
    %3752 = vmatpush1.msra.mxu0 %v2873
    %3753 = vmatprep.subr.mxu0 0.0
    %3754 = vmatpush1.msra.mxu0 %v2874
    %3755 = vmatprep.subr.mxu0 0.0
    %3756 = vmatpush1.msra.mxu0 %v2875
    %3757 = vmatprep.subr.mxu0 0.0
    %3758 = vmatpush1.msra.mxu0 %v2876
    %3759 = vmatprep.subr.mxu0 0.0
    %3760 = vmatpush1.msra.mxu0 %v2877
    %3761 = vmatprep.subr.mxu0 0.0
    %3762 = vmatpush1.msra.mxu0 %v2878
    %3763 = vmatprep.subr.mxu0 0.0
    %3764 = vmatpush1.msra.mxu0 %v2879
    %3765 = vmatprep.subr.mxu0 0.0
    %3766 = vmatpush1.msra.mxu0 %v2880
    %3767 = vmatprep.subr.mxu0 0.0
    %3768 = vmatpush1.msra.mxu0 %v2881
    %3769 = vmatprep.subr.mxu0 0.0
    %3770 = vmatpush1.msra.mxu0 %v2882
    %3771 = vmatprep.subr.mxu0 0.0
    %3772 = vmatpush1.msra.mxu0 %v2883
    %3773 = vmatprep.subr.mxu0 0.0
    %3774 = vmatpush1.msra.mxu0 %v2884
    %3775 = vmatprep.subr.mxu0 0.0
    %3776 = vmatpush1.msra.mxu0 %v2885
    %3777 = vmatprep.subr.mxu0 0.0
    %3778 = vmatpush1.msra.mxu0 %v2886
    %3779 = vmatprep.subr.mxu0 0.0
    %3780 = vmatpush1.msra.mxu0 %v2887
    %3781 = vmatprep.subr.mxu0 0.0
    %3782 = vmatpush1.msra.mxu0 %v2888
    %3783 = vmatprep.subr.mxu0 0.0
    %3784 = vmatpush1.msra.mxu0 %v2889
    %3785 = vmatprep.subr.mxu0 0.0
    %3786 = vmatpush1.msra.mxu0 %v2890
    %3787 = vmatprep.subr.mxu0 0.0
    %3788 = vmatpush1.msra.mxu0 %v2891
    %3789 = vmatprep.subr.mxu0 0.0
    %3790 = vmatpush1.msra.mxu0 %v2892
    %3791 = vmatprep.subr.mxu0 0.0
    %3792 = vmatpush1.msra.mxu0 %v2893
    %3793 = vmatprep.subr.mxu0 0.0
    %3794 = vmatpush1.msra.mxu0 %v2894
    %3795 = vmatprep.subr.mxu0 0.0
    %3796 = vmatpush1.msra.mxu0 %v2895
    %3797 = vmatprep.subr.mxu0 0.0
    %3798 = vmatpush1.msra.mxu0 %v2896
    %3799 = vmatprep.subr.mxu0 0.0
    %3800 = vmatpush1.msra.mxu0 %v2897
    %3801 = vmatprep.subr.mxu0 0.0
    %3802 = vmatpush1.msra.mxu0 %v2898
    %3803 = vmatprep.subr.mxu0 0.0
    %3804 = vmatpush1.msra.mxu0 0.0
    %3805 = vmatprep.subr.mxu0 0.0
    %3806 = vmatpush1.msra.mxu0 0.0
    %3807 = vmatprep.subr.mxu0 0.0
    %3808 = vmatpush1.msra.mxu0 0.0
    %3809 = vmatprep.subr.mxu0 0.0
    %3810 = vmatpush1.msra.mxu0 0.0
    %3811 = vmatprep.mubr.f32.mxu0 %v3745
    %3812 = vmatmul.mubr.f32.gmra.mrb[0].mxu0 %v3742
    %v3813 = vpop.f32.mrb[0].mxu0
    %v3814 = vadd.f32 0.0, %v3813
    %v3815 = vpop.f32.mrb[0].mxu0
    %3816 = vdwg.mxu0
    %v3817 = vrot.slane %v2567, 7
    %v3818 = vrot.slane %v2568, 7
    %v3820 = vsel %vm2635, %v3818, 0
    %3822 = vmatprep.subr.mxu0 0.0
    %3823 = vmatpush1.msra.mxu0 %v3004
    %3824 = vmatprep.subr.mxu0 0.0
    %3825 = vmatpush1.msra.mxu0 %v3005
    %3826 = vmatprep.subr.mxu0 0.0
    %3827 = vmatpush1.msra.mxu0 %v3006
    %3828 = vmatprep.subr.mxu0 0.0
    %3829 = vmatpush1.msra.mxu0 %v3007
    %3830 = vmatprep.subr.mxu0 0.0
    %3831 = vmatpush1.msra.mxu0 %v3008
    %3832 = vmatprep.subr.mxu0 0.0
    %3833 = vmatpush1.msra.mxu0 %v3009
    %3834 = vmatprep.subr.mxu0 0.0
    %3835 = vmatpush1.msra.mxu0 %v3010
    %3836 = vmatprep.subr.mxu0 0.0
    %3837 = vmatpush1.msra.mxu0 %v3011
    %3838 = vmatprep.subr.mxu0 0.0
    %3839 = vmatpush1.msra.mxu0 %v3012
    %3840 = vmatprep.subr.mxu0 0.0
    %3841 = vmatpush1.msra.mxu0 %v3013
    %3842 = vmatprep.subr.mxu0 0.0
    %3843 = vmatpush1.msra.mxu0 %v3014
    %3844 = vmatprep.subr.mxu0 0.0
    %3845 = vmatpush1.msra.mxu0 %v3015
    %3846 = vmatprep.subr.mxu0 0.0
    %3847 = vmatpush1.msra.mxu0 %v3016
    %3848 = vmatprep.subr.mxu0 0.0
    %3849 = vmatpush1.msra.mxu0 %v3017
    %3850 = vmatprep.subr.mxu0 0.0
    %3851 = vmatpush1.msra.mxu0 %v3018
    %3852 = vmatprep.subr.mxu0 0.0
    %3853 = vmatpush1.msra.mxu0 %v3019
    %3854 = vmatprep.subr.mxu0 0.0
    %3855 = vmatpush1.msra.mxu0 %v3020
    %3856 = vmatprep.subr.mxu0 0.0
    %3857 = vmatpush1.msra.mxu0 %v3021
    %3858 = vmatprep.subr.mxu0 0.0
    %3859 = vmatpush1.msra.mxu0 %v3022
    %3860 = vmatprep.subr.mxu0 0.0
    %3861 = vmatpush1.msra.mxu0 %v3023
    %3862 = vmatprep.subr.mxu0 0.0
    %3863 = vmatpush1.msra.mxu0 %v3024
    %3864 = vmatprep.subr.mxu0 0.0
    %3865 = vmatpush1.msra.mxu0 %v3025
    %3866 = vmatprep.subr.mxu0 0.0
    %3867 = vmatpush1.msra.mxu0 %v3026
    %3868 = vmatprep.subr.mxu0 0.0
    %3869 = vmatpush1.msra.mxu0 %v3027
    %3870 = vmatprep.subr.mxu0 0.0
    %3871 = vmatpush1.msra.mxu0 %v3028
    %3872 = vmatprep.subr.mxu0 0.0
    %3873 = vmatpush1.msra.mxu0 %v3029
    %3874 = vmatprep.subr.mxu0 0.0
    %3875 = vmatpush1.msra.mxu0 %v3030
    %3876 = vmatprep.subr.mxu0 0.0
    %3877 = vmatpush1.msra.mxu0 %v3031
    %3878 = vmatprep.subr.mxu0 0.0
    %3879 = vmatpush1.msra.mxu0 0.0
    %3880 = vmatprep.subr.mxu0 0.0
    %3881 = vmatpush1.msra.mxu0 0.0
    %3882 = vmatprep.subr.mxu0 0.0
    %3883 = vmatpush1.msra.mxu0 0.0
    %3884 = vmatprep.subr.mxu0 0.0
    %3885 = vmatpush1.msra.mxu0 0.0
    %3886 = vmatprep.mubr.f32.mxu0 %v3820
    %3887 = vmatmul.mubr.f32.gmra.mrb[0].mxu0 %v3817
    %v3888 = vpop.f32.mrb[0].mxu0
    %v3889 = vadd.f32 0.0, %v3888
    %v3890 = vpop.f32.mrb[0].mxu0
    %3891 = vdwg.mxu0
    %v3892 = vsel %vm2635, %v2568, 0
    %3894 = vmatprep.subr.mxu0 0.0
    %3895 = vmatpush1.msra.mxu0 %v2573
    %3896 = vmatprep.subr.mxu0 0.0
    %3897 = vmatpush1.msra.mxu0 %v2574
    %3898 = vmatprep.subr.mxu0 0.0
    %3899 = vmatpush1.msra.mxu0 %v2575
    %3900 = vmatprep.subr.mxu0 0.0
    %3901 = vmatpush1.msra.mxu0 %v2576
    %3902 = vmatprep.subr.mxu0 0.0
    %3903 = vmatpush1.msra.mxu0 %v2577
    %3904 = vmatprep.subr.mxu0 0.0
    %3905 = vmatpush1.msra.mxu0 %v2578
    %3906 = vmatprep.subr.mxu0 0.0
    %3907 = vmatpush1.msra.mxu0 %v2579
    %3908 = vmatprep.subr.mxu0 0.0
    %3909 = vmatpush1.msra.mxu0 %v2580
    %3910 = vmatprep.subr.mxu0 0.0
    %3911 = vmatpush1.msra.mxu0 %v2581
    %3912 = vmatprep.subr.mxu0 0.0
    %3913 = vmatpush1.msra.mxu0 %v2582
    %3914 = vmatprep.subr.mxu0 0.0
    %3915 = vmatpush1.msra.mxu0 %v2583
    %3916 = vmatprep.subr.mxu0 0.0
    %3917 = vmatpush1.msra.mxu0 %v2584
    %3918 = vmatprep.subr.mxu0 0.0
    %3919 = vmatpush1.msra.mxu0 %v2585
    %3920 = vmatprep.subr.mxu0 0.0
    %3921 = vmatpush1.msra.mxu0 %v2586
    %3922 = vmatprep.subr.mxu0 0.0
    %3923 = vmatpush1.msra.mxu0 %v2587
    %3924 = vmatprep.subr.mxu0 0.0
    %3925 = vmatpush1.msra.mxu0 %v2588
    %3926 = vmatprep.subr.mxu0 0.0
    %3927 = vmatpush1.msra.mxu0 %v2589
    %3928 = vmatprep.subr.mxu0 0.0
    %3929 = vmatpush1.msra.mxu0 %v2590
    %3930 = vmatprep.subr.mxu0 0.0
    %3931 = vmatpush1.msra.mxu0 %v2591
    %3932 = vmatprep.subr.mxu0 0.0
    %3933 = vmatpush1.msra.mxu0 %v2592
    %3934 = vmatprep.subr.mxu0 0.0
    %3935 = vmatpush1.msra.mxu0 %v2593
    %3936 = vmatprep.subr.mxu0 0.0
    %3937 = vmatpush1.msra.mxu0 %v2594
    %3938 = vmatprep.subr.mxu0 0.0
    %3939 = vmatpush1.msra.mxu0 %v2595
    %3940 = vmatprep.subr.mxu0 0.0
    %3941 = vmatpush1.msra.mxu0 %v2596
    %3942 = vmatprep.subr.mxu0 0.0
    %3943 = vmatpush1.msra.mxu0 %v2597
    %3944 = vmatprep.subr.mxu0 0.0
    %3945 = vmatpush1.msra.mxu0 %v2598
    %3946 = vmatprep.subr.mxu0 0.0
    %3947 = vmatpush1.msra.mxu0 %v2599
    %3948 = vmatprep.subr.mxu0 0.0
    %3949 = vmatpush1.msra.mxu0 %v2600
    %3950 = vmatprep.subr.mxu0 0.0
    %3951 = vmatpush1.msra.mxu0 0.0
    %3952 = vmatprep.subr.mxu0 0.0
    %3953 = vmatpush1.msra.mxu0 0.0
    %3954 = vmatprep.subr.mxu0 0.0
    %3955 = vmatpush1.msra.mxu0 0.0
    %3956 = vmatprep.subr.mxu0 0.0
    %3957 = vmatpush1.msra.mxu0 0.0
    %3958 = vmatprep.mubr.f32.mxu0 %v3892
    %3959 = vmatmul.mubr.f32.gmra.mrb[0].mxu0 %v2567
    %v3960 = vpop.f32.mrb[0].mxu0
    %v3961 = vadd.f32 %v3664, %v3960
    %v3962 = vpop.f32.mrb[0].mxu0
    %3963 = vdwg.mxu0
    %v3964 = vrot.slane %v2567, 2
    %v3965 = vrot.slane %v2568, 2
    %v3967 = vsel %vm2635, %v3965, 0
    %3969 = vmatprep.subr.mxu0 0.0
    %3970 = vmatpush1.msra.mxu0 %v2709
    %3971 = vmatprep.subr.mxu0 0.0
    %3972 = vmatpush1.msra.mxu0 %v2710
    %3973 = vmatprep.subr.mxu0 0.0
    %3974 = vmatpush1.msra.mxu0 %v2711
    %3975 = vmatprep.subr.mxu0 0.0
    %3976 = vmatpush1.msra.mxu0 %v2712
    %3977 = vmatprep.subr.mxu0 0.0
    %3978 = vmatpush1.msra.mxu0 %v2713
    %3979 = vmatprep.subr.mxu0 0.0
    %3980 = vmatpush1.msra.mxu0 %v2714
    %3981 = vmatprep.subr.mxu0 0.0
    %3982 = vmatpush1.msra.mxu0 %v2715
    %3983 = vmatprep.subr.mxu0 0.0
    %3984 = vmatpush1.msra.mxu0 %v2716
    %3985 = vmatprep.subr.mxu0 0.0
    %3986 = vmatpush1.msra.mxu0 %v2717
    %3987 = vmatprep.subr.mxu0 0.0
    %3988 = vmatpush1.msra.mxu0 %v2718
    %3989 = vmatprep.subr.mxu0 0.0
    %3990 = vmatpush1.msra.mxu0 %v2719
    %3991 = vmatprep.subr.mxu0 0.0
    %3992 = vmatpush1.msra.mxu0 %v2720
    %3993 = vmatprep.subr.mxu0 0.0
    %3994 = vmatpush1.msra.mxu0 %v2721
    %3995 = vmatprep.subr.mxu0 0.0
    %3996 = vmatpush1.msra.mxu0 %v2722
    %3997 = vmatprep.subr.mxu0 0.0
    %3998 = vmatpush1.msra.mxu0 %v2723
    %3999 = vmatprep.subr.mxu0 0.0
    %4000 = vmatpush1.msra.mxu0 %v2724
    %4001 = vmatprep.subr.mxu0 0.0
    %4002 = vmatpush1.msra.mxu0 %v2725
    %4003 = vmatprep.subr.mxu0 0.0
    %4004 = vmatpush1.msra.mxu0 %v2726
    %4005 = vmatprep.subr.mxu0 0.0
    %4006 = vmatpush1.msra.mxu0 %v2727
    %4007 = vmatprep.subr.mxu0 0.0
    %4008 = vmatpush1.msra.mxu0 %v2728
    %4009 = vmatprep.subr.mxu0 0.0
    %4010 = vmatpush1.msra.mxu0 %v2729
    %4011 = vmatprep.subr.mxu0 0.0
    %4012 = vmatpush1.msra.mxu0 %v2730
    %4013 = vmatprep.subr.mxu0 0.0
    %4014 = vmatpush1.msra.mxu0 %v2731
    %4015 = vmatprep.subr.mxu0 0.0
    %4016 = vmatpush1.msra.mxu0 %v2732
    %4017 = vmatprep.subr.mxu0 0.0
    %4018 = vmatpush1.msra.mxu0 %v2733
    %4019 = vmatprep.subr.mxu0 0.0
    %4020 = vmatpush1.msra.mxu0 %v2734
    %4021 = vmatprep.subr.mxu0 0.0
    %4022 = vmatpush1.msra.mxu0 %v2735
    %4023 = vmatprep.subr.mxu0 0.0
    %4024 = vmatpush1.msra.mxu0 %v2736
    %4025 = vmatprep.subr.mxu0 0.0
    %4026 = vmatpush1.msra.mxu0 0.0
    %4027 = vmatprep.subr.mxu0 0.0
    %4028 = vmatpush1.msra.mxu0 0.0
    %4029 = vmatprep.subr.mxu0 0.0
    %4030 = vmatpush1.msra.mxu0 0.0
    %4031 = vmatprep.subr.mxu0 0.0
    %4032 = vmatpush1.msra.mxu0 0.0
    %4033 = vmatprep.mubr.f32.mxu0 %v3967
    %4034 = vmatmul.mubr.f32.gmra.mrb[0].mxu0 %v3964
    %v4035 = vpop.f32.mrb[0].mxu0
    %v4036 = vadd.f32 %v3739, %v4035
    %v4037 = vpop.f32.mrb[0].mxu0
    %4038 = vdwg.mxu0
    %v4039 = vrot.slane %v2567, 4
    %v4040 = vrot.slane %v2568, 4
    %v4042 = vsel %vm2635, %v4040, 0
    %4044 = vmatprep.subr.mxu0 0.0
    %4045 = vmatpush1.msra.mxu0 %v2842
    %4046 = vmatprep.subr.mxu0 0.0
    %4047 = vmatpush1.msra.mxu0 %v2843
    %4048 = vmatprep.subr.mxu0 0.0
    %4049 = vmatpush1.msra.mxu0 %v2844
    %4050 = vmatprep.subr.mxu0 0.0
    %4051 = vmatpush1.msra.mxu0 %v2845
    %4052 = vmatprep.subr.mxu0 0.0
    %4053 = vmatpush1.msra.mxu0 %v2846
    %4054 = vmatprep.subr.mxu0 0.0
    %4055 = vmatpush1.msra.mxu0 %v2847
    %4056 = vmatprep.subr.mxu0 0.0
    %4057 = vmatpush1.msra.mxu0 %v2848
    %4058 = vmatprep.subr.mxu0 0.0
    %4059 = vmatpush1.msra.mxu0 %v2849
    %4060 = vmatprep.subr.mxu0 0.0
    %4061 = vmatpush1.msra.mxu0 %v2850
    %4062 = vmatprep.subr.mxu0 0.0
    %4063 = vmatpush1.msra.mxu0 %v2851
    %4064 = vmatprep.subr.mxu0 0.0
    %4065 = vmatpush1.msra.mxu0 %v2852
    %4066 = vmatprep.subr.mxu0 0.0
    %4067 = vmatpush1.msra.mxu0 %v2853
    %4068 = vmatprep.subr.mxu0 0.0
    %4069 = vmatpush1.msra.mxu0 %v2854
    %4070 = vmatprep.subr.mxu0 0.0
    %4071 = vmatpush1.msra.mxu0 %v2855
    %4072 = vmatprep.subr.mxu0 0.0
    %4073 = vmatpush1.msra.mxu0 %v2856
    %4074 = vmatprep.subr.mxu0 0.0
    %4075 = vmatpush1.msra.mxu0 %v2857
    %4076 = vmatprep.subr.mxu0 0.0
    %4077 = vmatpush1.msra.mxu0 %v2858
    %4078 = vmatprep.subr.mxu0 0.0
    %4079 = vmatpush1.msra.mxu0 %v2859
    %4080 = vmatprep.subr.mxu0 0.0
    %4081 = vmatpush1.msra.mxu0 %v2860
    %4082 = vmatprep.subr.mxu0 0.0
    %4083 = vmatpush1.msra.mxu0 %v2861
    %4084 = vmatprep.subr.mxu0 0.0
    %4085 = vmatpush1.msra.mxu0 %v2862
    %4086 = vmatprep.subr.mxu0 0.0
    %4087 = vmatpush1.msra.mxu0 %v2863
    %4088 = vmatprep.subr.mxu0 0.0
    %4089 = vmatpush1.msra.mxu0 %v2864
    %4090 = vmatprep.subr.mxu0 0.0
    %4091 = vmatpush1.msra.mxu0 %v2865
    %4092 = vmatprep.subr.mxu0 0.0
    %4093 = vmatpush1.msra.mxu0 %v2866
    %4094 = vmatprep.subr.mxu0 0.0
    %4095 = vmatpush1.msra.mxu0 %v2867
    %4096 = vmatprep.subr.mxu0 0.0
    %4097 = vmatpush1.msra.mxu0 %v2868
    %4098 = vmatprep.subr.mxu0 0.0
    %4099 = vmatpush1.msra.mxu0 %v2869
    %4100 = vmatprep.subr.mxu0 0.0
    %4101 = vmatpush1.msra.mxu0 0.0
    %4102 = vmatprep.subr.mxu0 0.0
    %4103 = vmatpush1.msra.mxu0 0.0
    %4104 = vmatprep.subr.mxu0 0.0
    %4105 = vmatpush1.msra.mxu0 0.0
    %4106 = vmatprep.subr.mxu0 0.0
    %4107 = vmatpush1.msra.mxu0 0.0
    %4108 = vmatprep.mubr.f32.mxu0 %v4042
    %4109 = vmatmul.mubr.f32.gmra.mrb[0].mxu0 %v4039
    %v4110 = vpop.f32.mrb[0].mxu0
    %v4111 = vadd.f32 %v3814, %v4110
    %v4112 = vpop.f32.mrb[0].mxu0
    %4113 = vdwg.mxu0
    %v4114 = vrot.slane %v2567, 6
    %v4115 = vrot.slane %v2568, 6
    %v4117 = vsel %vm2635, %v4115, 0
    %4119 = vmatprep.subr.mxu0 0.0
    %4120 = vmatpush1.msra.mxu0 %v2975
    %4121 = vmatprep.subr.mxu0 0.0
    %4122 = vmatpush1.msra.mxu0 %v2976
    %4123 = vmatprep.subr.mxu0 0.0
    %4124 = vmatpush1.msra.mxu0 %v2977
    %4125 = vmatprep.subr.mxu0 0.0
    %4126 = vmatpush1.msra.mxu0 %v2978
    %4127 = vmatprep.subr.mxu0 0.0
    %4128 = vmatpush1.msra.mxu0 %v2979
    %4129 = vmatprep.subr.mxu0 0.0
    %4130 = vmatpush1.msra.mxu0 %v2980
    %4131 = vmatprep.subr.mxu0 0.0
    %4132 = vmatpush1.msra.mxu0 %v2981
    %4133 = vmatprep.subr.mxu0 0.0
    %4134 = vmatpush1.msra.mxu0 %v2982
    %4135 = vmatprep.subr.mxu0 0.0
    %4136 = vmatpush1.msra.mxu0 %v2983
    %4137 = vmatprep.subr.mxu0 0.0
    %4138 = vmatpush1.msra.mxu0 %v2984
    %4139 = vmatprep.subr.mxu0 0.0
    %4140 = vmatpush1.msra.mxu0 %v2985
    %4141 = vmatprep.subr.mxu0 0.0
    %4142 = vmatpush1.msra.mxu0 %v2986
    %4143 = vmatprep.subr.mxu0 0.0
    %4144 = vmatpush1.msra.mxu0 %v2987
    %4145 = vmatprep.subr.mxu0 0.0
    %4146 = vmatpush1.msra.mxu0 %v2988
    %4147 = vmatprep.subr.mxu0 0.0
    %4148 = vmatpush1.msra.mxu0 %v2989
    %4149 = vmatprep.subr.mxu0 0.0
    %4150 = vmatpush1.msra.mxu0 %v2990
    %4151 = vmatprep.subr.mxu0 0.0
    %4152 = vmatpush1.msra.mxu0 %v2991
    %4153 = vmatprep.subr.mxu0 0.0
    %4154 = vmatpush1.msra.mxu0 %v2992
    %4155 = vmatprep.subr.mxu0 0.0
    %4156 = vmatpush1.msra.mxu0 %v2993
    %4157 = vmatprep.subr.mxu0 0.0
    %4158 = vmatpush1.msra.mxu0 %v2994
    %4159 = vmatprep.subr.mxu0 0.0
    %4160 = vmatpush1.msra.mxu0 %v2995
    %4161 = vmatprep.subr.mxu0 0.0
    %4162 = vmatpush1.msra.mxu0 %v2996
    %4163 = vmatprep.subr.mxu0 0.0
    %4164 = vmatpush1.msra.mxu0 %v2997
    %4165 = vmatprep.subr.mxu0 0.0
    %4166 = vmatpush1.msra.mxu0 %v2998
    %4167 = vmatprep.subr.mxu0 0.0
    %4168 = vmatpush1.msra.mxu0 %v2999
    %4169 = vmatprep.subr.mxu0 0.0
    %4170 = vmatpush1.msra.mxu0 %v3000
    %4171 = vmatprep.subr.mxu0 0.0
    %4172 = vmatpush1.msra.mxu0 %v3001
    %4173 = vmatprep.subr.mxu0 0.0
    %4174 = vmatpush1.msra.mxu0 %v3002
    %4175 = vmatprep.subr.mxu0 0.0
    %4176 = vmatpush1.msra.mxu0 0.0
    %4177 = vmatprep.subr.mxu0 0.0
    %4178 = vmatpush1.msra.mxu0 0.0
    %4179 = vmatprep.subr.mxu0 0.0
    %4180 = vmatpush1.msra.mxu0 0.0
    %4181 = vmatprep.subr.mxu0 0.0
    %4182 = vmatpush1.msra.mxu0 0.0
    %4183 = vmatprep.mubr.f32.mxu0 %v4117
    %4184 = vmatmul.mubr.f32.gmra.mrb[0].mxu0 %v4114
    %v4185 = vpop.f32.mrb[0].mxu0
    %v4186 = vadd.f32 %v3889, %v4185
    %v4187 = vpop.f32.mrb[0].mxu0
    %4188 = vdwg.mxu0
    %v4189 = vadd.f32 %v3961, %v4036
    %v4190 = vadd.f32 %v4111, %v4186
    %v4191 = vadd.f32 %v4189, %v4190
    %v4192 = vadd.f32 %v4191, %v3407
    %v4193 = vmax.f32 %v4192, 0.0
    %v4195 = vsel %vm3426, %v4193, 0
    %4197 = vmatprep.subr.mxu0 0.0
    %4198 = vmatpush1.msra.mxu0 %v3410
    %4199 = vmatprep.subr.mxu0 0.0
    %4200 = vmatpush1.msra.mxu0 %v3411
    %4201 = vmatprep.subr.mxu0 0.0
    %4202 = vmatpush1.msra.mxu0 %v3412
    %4203 = vmatprep.subr.mxu0 0.0
    %4204 = vmatpush1.msra.mxu0 %v3413
    %4205 = vmatprep.subr.mxu0 0.0
    %4206 = vmatpush1.msra.mxu0 %v3414
    %4207 = vmatprep.subr.mxu0 0.0
    %4208 = vmatpush1.msra.mxu0 %v3415
    %4209 = vmatprep.subr.mxu0 0.0
    %4210 = vmatpush1.msra.mxu0 %v3416
    %4211 = vmatprep.subr.mxu0 0.0
    %4212 = vmatpush1.msra.mxu0 %v3417
    %4213 = vmatprep.subr.mxu0 0.0
    %4214 = vmatpush1.msra.mxu0 %v3418
    %4215 = vmatprep.subr.mxu0 0.0
    %4216 = vmatpush1.msra.mxu0 %v3419
    %4217 = vmatprep.subr.mxu0 0.0
    %4218 = vmatpush1.msra.mxu0 %v3420
    %4219 = vmatprep.subr.mxu0 0.0
    %4220 = vmatpush1.msra.mxu0 %v3421
    %4221 = vmatprep.subr.mxu0 0.0
    %4222 = vmatpush1.msra.mxu0 %v3422
    %4223 = vmatprep.subr.mxu0 0.0
    %4224 = vmatpush1.msra.mxu0 %v3423
    %4225 = vmatprep.subr.mxu0 0.0
    %4226 = vmatpush1.msra.mxu0 %v3424
    %4227 = vmatprep.subr.mxu0 0.0
    %4228 = vmatpush1.msra.mxu0 0.0
    %4229 = vmatprep.subr.mxu0 0.0
    %4230 = vmatpush1.msra.mxu0 0.0
    %4231 = vmatprep.subr.mxu0 0.0
    %4232 = vmatpush1.msra.mxu0 0.0
    %4233 = vmatprep.subr.mxu0 0.0
    %4234 = vmatpush1.msra.mxu0 0.0
    %4235 = vmatprep.subr.mxu0 0.0
    %4236 = vmatpush1.msra.mxu0 0.0
    %4237 = vmatprep.subr.mxu0 0.0
    %4238 = vmatpush1.msra.mxu0 0.0
    %4239 = vmatprep.subr.mxu0 0.0
    %4240 = vmatpush1.msra.mxu0 0.0
    %4241 = vmatprep.subr.mxu0 0.0
    %4242 = vmatpush1.msra.mxu0 0.0
    %4243 = vmatprep.subr.mxu0 0.0
    %4244 = vmatpush1.msra.mxu0 0.0
    %4245 = vmatprep.subr.mxu0 0.0
    %4246 = vmatpush1.msra.mxu0 0.0
    %4247 = vmatprep.subr.mxu0 0.0
    %4248 = vmatpush1.msra.mxu0 0.0
    %4249 = vmatprep.subr.mxu0 0.0
    %4250 = vmatpush1.msra.mxu0 0.0
    %4251 = vmatprep.subr.mxu0 0.0
    %4252 = vmatpush1.msra.mxu0 0.0
    %4253 = vmatprep.subr.mxu0 0.0
    %4254 = vmatpush1.msra.mxu0 0.0
    %4255 = vmatprep.subr.mxu0 0.0
    %4256 = vmatpush1.msra.mxu0 0.0
    %4257 = vmatprep.subr.mxu0 0.0
    %4258 = vmatpush1.msra.mxu0 0.0
    %4259 = vmatprep.subr.mxu0 0.0
    %4260 = vmatpush1.msra.mxu0 0.0
    %4261 = vmatprep.mubr.f32.mxu0 0.0
    %4262 = vmatmul.mubr.f32.gmra.mrb[0].mxu0 %v4195
    %v4263 = vpop.f32.mrb[0].mxu0
    %v4264 = vadd.f32 %v3425, %v4263
    %v4265 = vpop.f32.mrb[0].mxu0
    %4266 = vdwg.mxu0
    %v4267 = vmax.f32 %v4264, 0.0
    %v4269 = vsel %vm3513, %v4267, 0
    %4271 = vmatprep.subr.mxu0 0.0
    %4272 = vmatpush1.msra.mxu0 %v3501
    %4273 = vmatprep.subr.mxu0 0.0
    %4274 = vmatpush1.msra.mxu0 %v3502
    %4275 = vmatprep.subr.mxu0 0.0
    %4276 = vmatpush1.msra.mxu0 %v3503
    %4277 = vmatprep.subr.mxu0 0.0
    %4278 = vmatpush1.msra.mxu0 %v3504
    %4279 = vmatprep.subr.mxu0 0.0
    %4280 = vmatpush1.msra.mxu0 %v3505
    %4281 = vmatprep.subr.mxu0 0.0
    %4282 = vmatpush1.msra.mxu0 %v3506
    %4283 = vmatprep.subr.mxu0 0.0
    %4284 = vmatpush1.msra.mxu0 %v3507
    %4285 = vmatprep.subr.mxu0 0.0
    %4286 = vmatpush1.msra.mxu0 %v3508
    %4287 = vmatprep.subr.mxu0 0.0
    %4288 = vmatpush1.msra.mxu0 %v3509
    %4289 = vmatprep.subr.mxu0 0.0
    %4290 = vmatpush1.msra.mxu0 %v3510
    %4291 = vmatprep.subr.mxu0 0.0
    %4292 = vmatpush1.msra.mxu0 %v3518
    %4293 = vmatprep.subr.mxu0 0.0
    %4294 = vmatpush1.msra.mxu0 0.0
    %4295 = vmatprep.subr.mxu0 0.0
    %4296 = vmatpush1.msra.mxu0 0.0
    %4297 = vmatprep.subr.mxu0 0.0
    %4298 = vmatpush1.msra.mxu0 0.0
    %4299 = vmatprep.subr.mxu0 0.0
    %4300 = vmatpush1.msra.mxu0 0.0
    %4301 = vmatprep.subr.mxu0 0.0
    %4302 = vmatpush1.msra.mxu0 0.0
    %4303 = vmatprep.subr.mxu0 0.0
    %4304 = vmatpush1.msra.mxu0 0.0
    %4305 = vmatprep.subr.mxu0 0.0
    %4306 = vmatpush1.msra.mxu0 0.0
    %4307 = vmatprep.subr.mxu0 0.0
    %4308 = vmatpush1.msra.mxu0 0.0
    %4309 = vmatprep.subr.mxu0 0.0
    %4310 = vmatpush1.msra.mxu0 0.0
    %4311 = vmatprep.subr.mxu0 0.0
    %4312 = vmatpush1.msra.mxu0 0.0
    %4313 = vmatprep.subr.mxu0 0.0
    %4314 = vmatpush1.msra.mxu0 0.0
    %4315 = vmatprep.subr.mxu0 0.0
    %4316 = vmatpush1.msra.mxu0 0.0
    %4317 = vmatprep.subr.mxu0 0.0
    %4318 = vmatpush1.msra.mxu0 0.0
    %4319 = vmatprep.subr.mxu0 0.0
    %4320 = vmatpush1.msra.mxu0 0.0
    %4321 = vmatprep.subr.mxu0 0.0
    %4322 = vmatpush1.msra.mxu0 0.0
    %4323 = vmatprep.subr.mxu0 0.0
    %4324 = vmatpush1.msra.mxu0 0.0
    %4325 = vmatprep.subr.mxu0 0.0
    %4326 = vmatpush1.msra.mxu0 0.0
    %4327 = vmatprep.subr.mxu0 0.0
    %4328 = vmatpush1.msra.mxu0 0.0
    %4329 = vmatprep.subr.mxu0 0.0
    %4330 = vmatpush1.msra.mxu0 0.0
    %4331 = vmatprep.subr.mxu0 0.0
    %4332 = vmatpush1.msra.mxu0 0.0
    %4333 = vmatprep.subr.mxu0 0.0
    %4334 = vmatpush1.msra.mxu0 0.0
    %4335 = vmatprep.mubr.f32.mxu0 0.0
    %4336 = vmatmul.mubr.f32.gmra.mrb[0].mxu0 %v4269
    %v4337 = vpop.f32.mrb[0].mxu0
    %v4338 = vadd.f32 %v3512, %v4337
    %v4339 = vpop.f32.mrb[0].mxu0
    %4340 = vdwg.mxu0
    %v4342 = vrot.slane %v4338, 7
    %vm4344 = vcmask 1040384
    %v4345 = vsel %vm4344, %v3587, %v4342
    %vm4346 = vcmask 25600
    %4347 = vst.msk [vmem:[#allocation4] sm:$0x3] %vm4346, %v4345
    // Predicated region
    $region54: #{convnet_forward.1} parent=1 // pred_check
      _
    $region55: #{convnet_forward.1} parent=1 // pred_check_branch
      %4349 = sbr.rel (0) target = $region57
    $region56: #{convnet_forward.1} parent=1 // pred_region
      %s4351 = ssub.s32 32, 32
      %4352 = vsyncadd [#allocation5], %s4351
      %s4354 = sshll.u32 [#allocation4], 4
      %s4355 = int_to_ptr.vmem [resolvable:$true] %s4354
      %4357 = dma.vmem_to_hbm [thread:$0]  %s4355, 32, %s13, [#allocation5]
    $region57: #{convnet_forward.1} parent=1 // pred_fallthru
      _
    // Predicated region
    $region58: #{convnet_forward.1} parent=1 // pred_check
      _
    $region59: #{convnet_forward.1} parent=1 // pred_check_branch
      %4359 = sbr.rel (0) target = $region61
    $region60: #{convnet_forward.1} parent=1 // pred_region
      %4360 = dma.done [#allocation5], 32
    $region61: #{convnet_forward.1} parent=1 // pred_fallthru
      _
    %4361 = vsyncpa [#allocation5], 1
  %4362 = vsyncmov [#allocation3]
  %s4363 = vpop.sfrf %4362
  %p4364 = scmp.eq.s32.totalorder %s4363, 0
  %p4365 = pneg %p4364
  %4367 = shalt.err (%p4365)

</llo_original>
